<compile_context>
chip_gen: v6e
topology: v6e:2x2x1
jax: 0.10.0
libtpu: 0.0.40
codegen_flags: <defaults>
</compile_context>

<pallas_src>
import numpy as np
import jax
import jax.numpy as jnp
from jax import lax
from jax.experimental import pallas as pl
from jax.experimental.pallas import tpu as pltpu


# ----------------------------------------------------------------------------
# Static problem geometry (concrete SmallNet graph: 4->8->4 channels, 16x16)
# ----------------------------------------------------------------------------
CIN, C1, COUT = 4, 8, 4            # channels: input, conv1 out, conv2 out
H = W = 16                         # spatial size
WP = W + 2                         # 18: padded row stride of the flat layout
WIDE = H * WP                      # 288: wide (stride-18) output columns / image
CL = WIDE + 2 * WP + 2             # 326: canvas length conv2 slices into
SHIFT1 = WP - 1                    # 17: conv1 tap-offset bias (input margins)
TOP_PAD = BOT_PAD = 3              # row margin so every conv1 tap slice is in-bounds
XLEN = (H + TOP_PAD + BOT_PAD) * WP  # 396: flat kernel-input length per (n, cin)
KTAPS = 9


# ----------------------------------------------------------------------------
# Fused Pallas kernel: conv1 (+bias, *g0) -> relu (*g1) -> conv2 (+bias, *g2)
# Single grid-less invocation; whole batch handled via block-diagonal weights.
# ----------------------------------------------------------------------------
def _fused_cnn_kernel(x_ref, w1_ref, b1_ref, w2_ref, b2_ref, mask_ref, g_ref,
                      o_ref):
    # x_ref   : (N*CIN, XLEN)      flat stride-WP zero-margined input
    # w1_ref  : (9, N*C1, N*CIN)   block-diagonal per-tap conv1 weights
    # b1_ref  : (N*C1, 1)
    # w2_ref  : (9, N*COUT, N*C1)  block-diagonal per-tap conv2 weights
    # b2_ref  : (N*COUT, 1)
    # mask_ref: (1, CL)            1.0 on interior canvas cols, 0.0 on padding
    # g_ref   : (3,)               gammas in SMEM: [conv1, relu, conv2]
    # o_ref   : (N*COUT, WIDE)     wide (stride-WP) conv2 output
    xin = x_ref[...]
    g0 = g_ref[0]
    g1 = g_ref[1]
    g2 = g_ref[2]

    # ---- conv1 over the padded canvas (in-kernel im2col via shifted slices) --
    r1 = w1_ref.shape[1]
    acc1 = jnp.zeros((r1, CL), jnp.float32)
    for t in range(KTAPS):
        dh, dw = divmod(t, 3)
        off = dh * WP + dw + SHIFT1                    # 17 .. 55 (static)
        acc1 = acc1 + jnp.dot(w1_ref[t], xin[:, off:off + CL],
                              preferred_element_type=jnp.float32)
    # conv1 node: (conv + bias) * gamma0 ; relu node: relu(.) * gamma1
    h1 = jnp.maximum((acc1 + b1_ref[...]) * g0, 0.0) * g1
    # zero the canvas columns that act as conv2's zero padding
    h1 = h1 * mask_ref[...]                            # (N*C1, CL)

    # ---- conv2 over the wide output columns ---------------------------------
    r2 = w2_ref.shape[1]
    acc2 = jnp.zeros((r2, WIDE), jnp.float32)
    for t in range(KTAPS):
        dh, dw = divmod(t, 3)
        off = dh * WP + dw                             # 0 .. 38 (static)
        acc2 = acc2 + jnp.dot(w2_ref[t], h1[:, off:off + WIDE],
                              preferred_element_type=jnp.float32)
    # conv2 node: (conv + bias) * gamma2
    o_ref[...] = (acc2 + b2_ref[...]) * g2


# ----------------------------------------------------------------------------
# Wrapper: one pad at the NCHW boundary, one fused pallas_call, one slice back.
# ----------------------------------------------------------------------------
@jax.jit
def _forward(x, w1_bd, b1_col, w2_bd, b2_col, mask, gammas):
    n = x.shape[0]
    # Single boundary pad: 3-row top/bottom margin + 1-col left/right margin,
    # then flatten batch x channel into sublanes and spatial into stride-WP 1D.
    xin = jnp.pad(x, ((0, 0), (0, 0), (TOP_PAD, BOT_PAD), (1, 1)))
    xin = xin.reshape(n * CIN, XLEN)

    out_wide = pl.pallas_call(
        _fused_cnn_kernel,
        out_shape=jax.ShapeDtypeStruct((n * COUT, WIDE), jnp.float32),
        in_specs=[
            pl.BlockSpec(memory_space=pltpu.MemorySpace.VMEM),   # xin
            pl.BlockSpec(memory_space=pltpu.MemorySpace.VMEM),   # w1 taps (block-diag)
            pl.BlockSpec(memory_space=pltpu.MemorySpace.VMEM),   # b1
            pl.BlockSpec(memory_space=pltpu.MemorySpace.VMEM),   # w2 taps (block-diag)
            pl.BlockSpec(memory_space=pltpu.MemorySpace.VMEM),   # b2
            pl.BlockSpec(memory_space=pltpu.MemorySpace.VMEM),   # canvas mask
            pl.BlockSpec(memory_space=pltpu.MemorySpace.SMEM),   # gammas (scalars)
        ],
        out_specs=pl.BlockSpec(memory_space=pltpu.MemorySpace.VMEM),
    )(xin, w1_bd, b1_col, w2_bd, b2_col, mask, gammas)

    # drop the 2 garbage columns per stride-WP row -> NCHW
    return out_wide.reshape(n, COUT, H, WP)[:, :, :, :W]


def _make_canvas_mask():
    """(1, CL) f32: 1.0 on interior canvas columns (real h1 values), else 0.0."""
    m = np.zeros((1, CL), np.float32)
    for q in range(WP * WP):                 # true 18x18 canvas positions
        r, c = divmod(q, WP)
        if 1 <= r <= H and 1 <= c <= W:
            m[0, q] = 1.0
    return m


def _block_diag_taps(w_taps, n):
    """(9, o, i) per-tap slabs -> (9, n*o, n*i) block-diagonal (one block/image)."""
    t, o, i = w_taps.shape
    eye = jnp.eye(n, dtype=w_taps.dtype)
    return jnp.einsum('nm,toi->tnomi', eye, w_taps).reshape(t, n * o, n * i)


# ----------------------------------------------------------------------------
# GraphInterperterWithGamma instantiated over the concrete SmallNet graph
# ----------------------------------------------------------------------------
class GraphInterperterWithGammaPallas:
    """Re-executes the traced SmallNet graph, scaling every call_module output
    by its gamma (gammas initialized to 1.0, matching init_gammas())."""

    def __init__(self, key):
        k1, k2, k3, k4 = jax.random.split(key, 4)
        self.conv1_w = jax.random.normal(k1, (C1, CIN, 3, 3), jnp.float32) * 0.1
        self.conv1_b = jax.random.normal(k2, (C1,), jnp.float32) * 0.1
        self.conv2_w = jax.random.normal(k3, (COUT, C1, 3, 3), jnp.float32) * 0.1
        self.conv2_b = jax.random.normal(k4, (COUT,), jnp.float32) * 0.1
        # one gamma per call_module node: [conv1, relu, conv2]
        self.gammas = jnp.ones((3,), jnp.float32)

        # Kernel-layout parameters, built once (not in the hot path):
        # per-tap (Cout, Cin) slabs, tap index t = kh*3 + kw.
        self.w1_taps = jnp.transpose(self.conv1_w, (2, 3, 0, 1)).reshape(
            KTAPS, C1, CIN)
        self.w2_taps = jnp.transpose(self.conv2_w, (2, 3, 0, 1)).reshape(
            KTAPS, COUT, C1)
        self.valid_mask = jnp.asarray(_make_canvas_mask())
        self._packed_cache = {}

    def _packed(self, n):
        """Block-diagonal weights / tiled biases for batch size n (cached)."""
        if n not in self._packed_cache:
            self._packed_cache[n] = (
                _block_diag_taps(self.w1_taps, n),
                jnp.tile(self.conv1_b.reshape(C1, 1), (n, 1)),
                _block_diag_taps(self.w2_taps, n),
                jnp.tile(self.conv2_b.reshape(COUT, 1), (n, 1)),
            )
        return self._packed_cache[n]

    def __call__(self, x):
        # node conv1 (*g0) -> node relu (*g1) -> node conv2 (*g2), fully fused.
        n = x.shape[0]
        w1_bd, b1_col, w2_bd, b2_col = self._packed(n)
        return _forward(x, w1_bd, b1_col, w2_bd, b2_col,
                        self.valid_mask, self.gammas)


def _reference(model, x):
    """Pure-JAX reference of the same graph, for a correctness check."""
    def conv(x, w, b, g):
        y = lax.conv_general_dilated(
            x, w, window_strides=(1, 1), padding="SAME",
            dimension_numbers=("NCHW", "OIHW", "NCHW"),
            precision=lax.Precision.HIGHEST)
        return (y + b[None, :, None, None]) * g
    h = conv(x, model.conv1_w, model.conv1_b, model.gammas[0])
    h = jnp.maximum(h, 0.0) * model.gammas[1]
    return conv(h, model.conv2_w, model.conv2_b, model.gammas[2])


if __name__ == "__main__":
    key = jax.random.PRNGKey(0)
    kx, kp = jax.random.split(key)
    x = jax.random.normal(kx, (2, CIN, H, W), jnp.float32)   # NCHW

    model = GraphInterperterWithGammaPallas(kp)
    out = jax.block_until_ready(model(x))

    ref = _reference(model, x)
    assert out.shape == (2, COUT, H, W)
    assert jnp.allclose(out, ref, atol=5e-3, rtol=5e-3), "mismatch vs JAX reference"

    print("KERNEL_OK")
</pallas_src>

<mosaic_0001>
module attributes {stable_mosaic.version = 11 : i64} {
  func.func @_fused_cnn_kernel(%arg0: memref<8x396xf32, #tpu.memory_space<vmem>>, %arg1: memref<9x16x8xf32, #tpu.memory_space<vmem>>, %arg2: memref<16x1xf32, #tpu.memory_space<vmem>>, %arg3: memref<9x8x16xf32, #tpu.memory_space<vmem>>, %arg4: memref<8x1xf32, #tpu.memory_space<vmem>>, %arg5: memref<1x326xf32, #tpu.memory_space<vmem>>, %arg6: memref<3xf32, #tpu.memory_space<smem>>, %arg7: memref<8x288xf32, #tpu.memory_space<vmem>>) attributes {dimension_semantics = [], scalar_prefetch = 0 : i64, scratch_operands = 0 : i64, tpu.core_type = #tpu.core_type<tc>} {
    %c0 = arith.constant 0 : index
    %c0_0 = arith.constant 0 : index
    %0 = vector.load %arg0[%c0, %c0_0] : memref<8x396xf32, #tpu.memory_space<vmem>>, vector<8x396xf32>
    %c0_1 = arith.constant 0 : index
    %1 = memref.load %arg6[%c0_1] : memref<3xf32, #tpu.memory_space<smem>>
    %c1 = arith.constant 1 : index
    %2 = memref.load %arg6[%c1] : memref<3xf32, #tpu.memory_space<smem>>
    %c2 = arith.constant 2 : index
    %3 = memref.load %arg6[%c2] : memref<3xf32, #tpu.memory_space<smem>>
    %cst = arith.constant 0.000000e+00 : f32
    %4 = vector.broadcast %cst : f32 to vector<16x326xf32>
    %c0_2 = arith.constant 0 : index
    %c0_3 = arith.constant 0 : index
    %c0_4 = arith.constant 0 : index
    %5 = vector.load %arg1[%c0_2, %c0_3, %c0_4] : memref<9x16x8xf32, #tpu.memory_space<vmem>>, vector<1x16x8xf32>
    %6 = vector.shape_cast %5 : vector<1x16x8xf32> to vector<16x8xf32>
    %7 = vector.extract_strided_slice %0 {offsets = [0, 17], sizes = [8, 326], strides = [1, 1]} : vector<8x396xf32> to vector<8x326xf32>
    %cst_5 = arith.constant dense<0.000000e+00> : vector<16x326xf32>
    %8 = tpu.matmul %6, %7, %cst_5 {dimension_numbers = #tpu.dot_dimension_numbers<[1], [0], [0], [1], [0, 0, 1, 1], [], []>} : vector<16x8xf32>, vector<8x326xf32>, vector<16x326xf32> -> vector<16x326xf32>
    %9 = arith.addf %4, %8 : vector<16x326xf32>
    %c1_6 = arith.constant 1 : index
    %c0_7 = arith.constant 0 : index
    %c0_8 = arith.constant 0 : index
    %10 = vector.load %arg1[%c1_6, %c0_7, %c0_8] : memref<9x16x8xf32, #tpu.memory_space<vmem>>, vector<1x16x8xf32>
    %11 = vector.shape_cast %10 : vector<1x16x8xf32> to vector<16x8xf32>
    %12 = vector.extract_strided_slice %0 {offsets = [0, 18], sizes = [8, 326], strides = [1, 1]} : vector<8x396xf32> to vector<8x326xf32>
    %cst_9 = arith.constant dense<0.000000e+00> : vector<16x326xf32>
    %13 = tpu.matmul %11, %12, %cst_9 {dimension_numbers = #tpu.dot_dimension_numbers<[1], [0], [0], [1], [0, 0, 1, 1], [], []>} : vector<16x8xf32>, vector<8x326xf32>, vector<16x326xf32> -> vector<16x326xf32>
    %14 = arith.addf %9, %13 : vector<16x326xf32>
    %c2_10 = arith.constant 2 : index
    %c0_11 = arith.constant 0 : index
    %c0_12 = arith.constant 0 : index
    %15 = vector.load %arg1[%c2_10, %c0_11, %c0_12] : memref<9x16x8xf32, #tpu.memory_space<vmem>>, vector<1x16x8xf32>
    %16 = vector.shape_cast %15 : vector<1x16x8xf32> to vector<16x8xf32>
    %17 = vector.extract_strided_slice %0 {offsets = [0, 19], sizes = [8, 326], strides = [1, 1]} : vector<8x396xf32> to vector<8x326xf32>
    %cst_13 = arith.constant dense<0.000000e+00> : vector<16x326xf32>
    %18 = tpu.matmul %16, %17, %cst_13 {dimension_numbers = #tpu.dot_dimension_numbers<[1], [0], [0], [1], [0, 0, 1, 1], [], []>} : vector<16x8xf32>, vector<8x326xf32>, vector<16x326xf32> -> vector<16x326xf32>
    %19 = arith.addf %14, %18 : vector<16x326xf32>
    %c3 = arith.constant 3 : index
    %c0_14 = arith.constant 0 : index
    %c0_15 = arith.constant 0 : index
    %20 = vector.load %arg1[%c3, %c0_14, %c0_15] : memref<9x16x8xf32, #tpu.memory_space<vmem>>, vector<1x16x8xf32>
    %21 = vector.shape_cast %20 : vector<1x16x8xf32> to vector<16x8xf32>
    %22 = vector.extract_strided_slice %0 {offsets = [0, 35], sizes = [8, 326], strides = [1, 1]} : vector<8x396xf32> to vector<8x326xf32>
    %cst_16 = arith.constant dense<0.000000e+00> : vector<16x326xf32>
    %23 = tpu.matmul %21, %22, %cst_16 {dimension_numbers = #tpu.dot_dimension_numbers<[1], [0], [0], [1], [0, 0, 1, 1], [], []>} : vector<16x8xf32>, vector<8x326xf32>, vector<16x326xf32> -> vector<16x326xf32>
    %24 = arith.addf %19, %23 : vector<16x326xf32>
    %c4 = arith.constant 4 : index
    %c0_17 = arith.constant 0 : index
    %c0_18 = arith.constant 0 : index
    %25 = vector.load %arg1[%c4, %c0_17, %c0_18] : memref<9x16x8xf32, #tpu.memory_space<vmem>>, vector<1x16x8xf32>
    %26 = vector.shape_cast %25 : vector<1x16x8xf32> to vector<16x8xf32>
    %27 = vector.extract_strided_slice %0 {offsets = [0, 36], sizes = [8, 326], strides = [1, 1]} : vector<8x396xf32> to vector<8x326xf32>
    %cst_19 = arith.constant dense<0.000000e+00> : vector<16x326xf32>
    %28 = tpu.matmul %26, %27, %cst_19 {dimension_numbers = #tpu.dot_dimension_numbers<[1], [0], [0], [1], [0, 0, 1, 1], [], []>} : vector<16x8xf32>, vector<8x326xf32>, vector<16x326xf32> -> vector<16x326xf32>
    %29 = arith.addf %24, %28 : vector<16x326xf32>
    %c5 = arith.constant 5 : index
    %c0_20 = arith.constant 0 : index
    %c0_21 = arith.constant 0 : index
    %30 = vector.load %arg1[%c5, %c0_20, %c0_21] : memref<9x16x8xf32, #tpu.memory_space<vmem>>, vector<1x16x8xf32>
    %31 = vector.shape_cast %30 : vector<1x16x8xf32> to vector<16x8xf32>
    %32 = vector.extract_strided_slice %0 {offsets = [0, 37], sizes = [8, 326], strides = [1, 1]} : vector<8x396xf32> to vector<8x326xf32>
    %cst_22 = arith.constant dense<0.000000e+00> : vector<16x326xf32>
    %33 = tpu.matmul %31, %32, %cst_22 {dimension_numbers = #tpu.dot_dimension_numbers<[1], [0], [0], [1], [0, 0, 1, 1], [], []>} : vector<16x8xf32>, vector<8x326xf32>, vector<16x326xf32> -> vector<16x326xf32>
    %34 = arith.addf %29, %33 : vector<16x326xf32>
    %c6 = arith.constant 6 : index
    %c0_23 = arith.constant 0 : index
    %c0_24 = arith.constant 0 : index
    %35 = vector.load %arg1[%c6, %c0_23, %c0_24] : memref<9x16x8xf32, #tpu.memory_space<vmem>>, vector<1x16x8xf32>
    %36 = vector.shape_cast %35 : vector<1x16x8xf32> to vector<16x8xf32>
    %37 = vector.extract_strided_slice %0 {offsets = [0, 53], sizes = [8, 326], strides = [1, 1]} : vector<8x396xf32> to vector<8x326xf32>
    %cst_25 = arith.constant dense<0.000000e+00> : vector<16x326xf32>
    %38 = tpu.matmul %36, %37, %cst_25 {dimension_numbers = #tpu.dot_dimension_numbers<[1], [0], [0], [1], [0, 0, 1, 1], [], []>} : vector<16x8xf32>, vector<8x326xf32>, vector<16x326xf32> -> vector<16x326xf32>
    %39 = arith.addf %34, %38 : vector<16x326xf32>
    %c7 = arith.constant 7 : index
    %c0_26 = arith.constant 0 : index
    %c0_27 = arith.constant 0 : index
    %40 = vector.load %arg1[%c7, %c0_26, %c0_27] : memref<9x16x8xf32, #tpu.memory_space<vmem>>, vector<1x16x8xf32>
    %41 = vector.shape_cast %40 : vector<1x16x8xf32> to vector<16x8xf32>
    %42 = vector.extract_strided_slice %0 {offsets = [0, 54], sizes = [8, 326], strides = [1, 1]} : vector<8x396xf32> to vector<8x326xf32>
    %cst_28 = arith.constant dense<0.000000e+00> : vector<16x326xf32>
    %43 = tpu.matmul %41, %42, %cst_28 {dimension_numbers = #tpu.dot_dimension_numbers<[1], [0], [0], [1], [0, 0, 1, 1], [], []>} : vector<16x8xf32>, vector<8x326xf32>, vector<16x326xf32> -> vector<16x326xf32>
    %44 = arith.addf %39, %43 : vector<16x326xf32>
    %c8 = arith.constant 8 : index
    %c0_29 = arith.constant 0 : index
    %c0_30 = arith.constant 0 : index
    %45 = vector.load %arg1[%c8, %c0_29, %c0_30] : memref<9x16x8xf32, #tpu.memory_space<vmem>>, vector<1x16x8xf32>
    %46 = vector.shape_cast %45 : vector<1x16x8xf32> to vector<16x8xf32>
    %47 = vector.extract_strided_slice %0 {offsets = [0, 55], sizes = [8, 326], strides = [1, 1]} : vector<8x396xf32> to vector<8x326xf32>
    %cst_31 = arith.constant dense<0.000000e+00> : vector<16x326xf32>
    %48 = tpu.matmul %46, %47, %cst_31 {dimension_numbers = #tpu.dot_dimension_numbers<[1], [0], [0], [1], [0, 0, 1, 1], [], []>} : vector<16x8xf32>, vector<8x326xf32>, vector<16x326xf32> -> vector<16x326xf32>
    %49 = arith.addf %44, %48 : vector<16x326xf32>
    %c0_32 = arith.constant 0 : index
    %c0_33 = arith.constant 0 : index
    %50 = vector.load %arg2[%c0_32, %c0_33] : memref<16x1xf32, #tpu.memory_space<vmem>>, vector<16x1xf32>
    %51 = vector.broadcast %50 : vector<16x1xf32> to vector<16x326xf32>
    %52 = arith.addf %49, %51 : vector<16x326xf32>
    %53 = vector.broadcast %1 : f32 to vector<16x326xf32>
    %54 = arith.mulf %52, %53 : vector<16x326xf32>
    %cst_34 = arith.constant 0.000000e+00 : f32
    %55 = vector.broadcast %cst_34 : f32 to vector<16x326xf32>
    %56 = arith.maximumf %54, %55 : vector<16x326xf32>
    %57 = vector.broadcast %2 : f32 to vector<16x326xf32>
    %58 = arith.mulf %56, %57 : vector<16x326xf32>
    %c0_35 = arith.constant 0 : index
    %c0_36 = arith.constant 0 : index
    %59 = vector.load %arg5[%c0_35, %c0_36] : memref<1x326xf32, #tpu.memory_space<vmem>>, vector<1x326xf32>
    %60 = vector.broadcast %59 : vector<1x326xf32> to vector<16x326xf32>
    %61 = arith.mulf %58, %60 : vector<16x326xf32>
    %cst_37 = arith.constant 0.000000e+00 : f32
    %62 = vector.broadcast %cst_37 : f32 to vector<8x288xf32>
    %c0_38 = arith.constant 0 : index
    %c0_39 = arith.constant 0 : index
    %c0_40 = arith.constant 0 : index
    %63 = vector.load %arg3[%c0_38, %c0_39, %c0_40] : memref<9x8x16xf32, #tpu.memory_space<vmem>>, vector<1x8x16xf32>
    %64 = vector.shape_cast %63 : vector<1x8x16xf32> to vector<8x16xf32>
    %65 = vector.extract_strided_slice %61 {offsets = [0, 0], sizes = [16, 288], strides = [1, 1]} : vector<16x326xf32> to vector<16x288xf32>
    %cst_41 = arith.constant dense<0.000000e+00> : vector<8x288xf32>
    %66 = tpu.matmul %64, %65, %cst_41 {dimension_numbers = #tpu.dot_dimension_numbers<[1], [0], [0], [1], [0, 0, 1, 1], [], []>} : vector<8x16xf32>, vector<16x288xf32>, vector<8x288xf32> -> vector<8x288xf32>
    %67 = arith.addf %62, %66 : vector<8x288xf32>
    %c1_42 = arith.constant 1 : index
    %c0_43 = arith.constant 0 : index
    %c0_44 = arith.constant 0 : index
    %68 = vector.load %arg3[%c1_42, %c0_43, %c0_44] : memref<9x8x16xf32, #tpu.memory_space<vmem>>, vector<1x8x16xf32>
    %69 = vector.shape_cast %68 : vector<1x8x16xf32> to vector<8x16xf32>
    %70 = vector.extract_strided_slice %61 {offsets = [0, 1], sizes = [16, 288], strides = [1, 1]} : vector<16x326xf32> to vector<16x288xf32>
    %cst_45 = arith.constant dense<0.000000e+00> : vector<8x288xf32>
    %71 = tpu.matmul %69, %70, %cst_45 {dimension_numbers = #tpu.dot_dimension_numbers<[1], [0], [0], [1], [0, 0, 1, 1], [], []>} : vector<8x16xf32>, vector<16x288xf32>, vector<8x288xf32> -> vector<8x288xf32>
    %72 = arith.addf %67, %71 : vector<8x288xf32>
    %c2_46 = arith.constant 2 : index
    %c0_47 = arith.constant 0 : index
    %c0_48 = arith.constant 0 : index
    %73 = vector.load %arg3[%c2_46, %c0_47, %c0_48] : memref<9x8x16xf32, #tpu.memory_space<vmem>>, vector<1x8x16xf32>
    %74 = vector.shape_cast %73 : vector<1x8x16xf32> to vector<8x16xf32>
    %75 = vector.extract_strided_slice %61 {offsets = [0, 2], sizes = [16, 288], strides = [1, 1]} : vector<16x326xf32> to vector<16x288xf32>
    %cst_49 = arith.constant dense<0.000000e+00> : vector<8x288xf32>
    %76 = tpu.matmul %74, %75, %cst_49 {dimension_numbers = #tpu.dot_dimension_numbers<[1], [0], [0], [1], [0, 0, 1, 1], [], []>} : vector<8x16xf32>, vector<16x288xf32>, vector<8x288xf32> -> vector<8x288xf32>
    %77 = arith.addf %72, %76 : vector<8x288xf32>
    %c3_50 = arith.constant 3 : index
    %c0_51 = arith.constant 0 : index
    %c0_52 = arith.constant 0 : index
    %78 = vector.load %arg3[%c3_50, %c0_51, %c0_52] : memref<9x8x16xf32, #tpu.memory_space<vmem>>, vector<1x8x16xf32>
    %79 = vector.shape_cast %78 : vector<1x8x16xf32> to vector<8x16xf32>
    %80 = vector.extract_strided_slice %61 {offsets = [0, 18], sizes = [16, 288], strides = [1, 1]} : vector<16x326xf32> to vector<16x288xf32>
    %cst_53 = arith.constant dense<0.000000e+00> : vector<8x288xf32>
    %81 = tpu.matmul %79, %80, %cst_53 {dimension_numbers = #tpu.dot_dimension_numbers<[1], [0], [0], [1], [0, 0, 1, 1], [], []>} : vector<8x16xf32>, vector<16x288xf32>, vector<8x288xf32> -> vector<8x288xf32>
    %82 = arith.addf %77, %81 : vector<8x288xf32>
    %c4_54 = arith.constant 4 : index
    %c0_55 = arith.constant 0 : index
    %c0_56 = arith.constant 0 : index
    %83 = vector.load %arg3[%c4_54, %c0_55, %c0_56] : memref<9x8x16xf32, #tpu.memory_space<vmem>>, vector<1x8x16xf32>
    %84 = vector.shape_cast %83 : vector<1x8x16xf32> to vector<8x16xf32>
    %85 = vector.extract_strided_slice %61 {offsets = [0, 19], sizes = [16, 288], strides = [1, 1]} : vector<16x326xf32> to vector<16x288xf32>
    %cst_57 = arith.constant dense<0.000000e+00> : vector<8x288xf32>
    %86 = tpu.matmul %84, %85, %cst_57 {dimension_numbers = #tpu.dot_dimension_numbers<[1], [0], [0], [1], [0, 0, 1, 1], [], []>} : vector<8x16xf32>, vector<16x288xf32>, vector<8x288xf32> -> vector<8x288xf32>
    %87 = arith.addf %82, %86 : vector<8x288xf32>
    %c5_58 = arith.constant 5 : index
    %c0_59 = arith.constant 0 : index
    %c0_60 = arith.constant 0 : index
    %88 = vector.load %arg3[%c5_58, %c0_59, %c0_60] : memref<9x8x16xf32, #tpu.memory_space<vmem>>, vector<1x8x16xf32>
    %89 = vector.shape_cast %88 : vector<1x8x16xf32> to vector<8x16xf32>
    %90 = vector.extract_strided_slice %61 {offsets = [0, 20], sizes = [16, 288], strides = [1, 1]} : vector<16x326xf32> to vector<16x288xf32>
    %cst_61 = arith.constant dense<0.000000e+00> : vector<8x288xf32>
    %91 = tpu.matmul %89, %90, %cst_61 {dimension_numbers = #tpu.dot_dimension_numbers<[1], [0], [0], [1], [0, 0, 1, 1], [], []>} : vector<8x16xf32>, vector<16x288xf32>, vector<8x288xf32> -> vector<8x288xf32>
    %92 = arith.addf %87, %91 : vector<8x288xf32>
    %c6_62 = arith.constant 6 : index
    %c0_63 = arith.constant 0 : index
    %c0_64 = arith.constant 0 : index
    %93 = vector.load %arg3[%c6_62, %c0_63, %c0_64] : memref<9x8x16xf32, #tpu.memory_space<vmem>>, vector<1x8x16xf32>
    %94 = vector.shape_cast %93 : vector<1x8x16xf32> to vector<8x16xf32>
    %95 = vector.extract_strided_slice %61 {offsets = [0, 36], sizes = [16, 288], strides = [1, 1]} : vector<16x326xf32> to vector<16x288xf32>
    %cst_65 = arith.constant dense<0.000000e+00> : vector<8x288xf32>
    %96 = tpu.matmul %94, %95, %cst_65 {dimension_numbers = #tpu.dot_dimension_numbers<[1], [0], [0], [1], [0, 0, 1, 1], [], []>} : vector<8x16xf32>, vector<16x288xf32>, vector<8x288xf32> -> vector<8x288xf32>
    %97 = arith.addf %92, %96 : vector<8x288xf32>
    %c7_66 = arith.constant 7 : index
    %c0_67 = arith.constant 0 : index
    %c0_68 = arith.constant 0 : index
    %98 = vector.load %arg3[%c7_66, %c0_67, %c0_68] : memref<9x8x16xf32, #tpu.memory_space<vmem>>, vector<1x8x16xf32>
    %99 = vector.shape_cast %98 : vector<1x8x16xf32> to vector<8x16xf32>
    %100 = vector.extract_strided_slice %61 {offsets = [0, 37], sizes = [16, 288], strides = [1, 1]} : vector<16x326xf32> to vector<16x288xf32>
    %cst_69 = arith.constant dense<0.000000e+00> : vector<8x288xf32>
    %101 = tpu.matmul %99, %100, %cst_69 {dimension_numbers = #tpu.dot_dimension_numbers<[1], [0], [0], [1], [0, 0, 1, 1], [], []>} : vector<8x16xf32>, vector<16x288xf32>, vector<8x288xf32> -> vector<8x288xf32>
    %102 = arith.addf %97, %101 : vector<8x288xf32>
    %c8_70 = arith.constant 8 : index
    %c0_71 = arith.constant 0 : index
    %c0_72 = arith.constant 0 : index
    %103 = vector.load %arg3[%c8_70, %c0_71, %c0_72] : memref<9x8x16xf32, #tpu.memory_space<vmem>>, vector<1x8x16xf32>
    %104 = vector.shape_cast %103 : vector<1x8x16xf32> to vector<8x16xf32>
    %105 = vector.extract_strided_slice %61 {offsets = [0, 38], sizes = [16, 288], strides = [1, 1]} : vector<16x326xf32> to vector<16x288xf32>
    %cst_73 = arith.constant dense<0.000000e+00> : vector<8x288xf32>
    %106 = tpu.matmul %104, %105, %cst_73 {dimension_numbers = #tpu.dot_dimension_numbers<[1], [0], [0], [1], [0, 0, 1, 1], [], []>} : vector<8x16xf32>, vector<16x288xf32>, vector<8x288xf32> -> vector<8x288xf32>
    %107 = arith.addf %102, %106 : vector<8x288xf32>
    %c0_74 = arith.constant 0 : index
    %c0_75 = arith.constant 0 : index
    %108 = vector.load %arg4[%c0_74, %c0_75] : memref<8x1xf32, #tpu.memory_space<vmem>>, vector<8x1xf32>
    %109 = vector.broadcast %108 : vector<8x1xf32> to vector<8x288xf32>
    %110 = arith.addf %107, %109 : vector<8x288xf32>
    %111 = vector.broadcast %3 : f32 to vector<8x288xf32>
    %112 = arith.mulf %110, %111 : vector<8x288xf32>
    %c0_76 = arith.constant 0 : index
    %c0_77 = arith.constant 0 : index
    %113 = vector.load %arg7[%c0_76, %c0_77] : memref<8x288xf32, #tpu.memory_space<vmem>>, vector<8x288xf32>
    tpu.vector_store %arg7[%c0_76, %c0_77], %112 {strides = array<i32>} : memref<8x288xf32, #tpu.memory_space<vmem>>, vector<8x288xf32>,
    return
  }
}

</mosaic_0001>

<llo_original>
// kernel: _forward.1
$region0: #{_forward.1}
  #allocation0 [shape = 'u32[]', space=smem, size = 0x4, offset = 0x4, fixed_abs, tag = 'smem constant byte address 0x4 - core index']
  #allocation1 [shape = 'u32[144,128]{1,0:T(1,128)}', space=vmem, size = 0x12000, scoped, tag = 'internal scratch']
  %s0 = inlined_call_operand.vmem [shape: f32[8,396], index: 0, kind: input, shape index: {}]
  %s1 = inlined_call_operand.vmem [shape: f32[9,16,8], index: 1, kind: input, shape index: {}]
  %s2 = inlined_call_operand.vmem [shape: f32[16,1], index: 2, kind: input, shape index: {}]
  %s3 = inlined_call_operand.vmem [shape: f32[9,8,16], index: 3, kind: input, shape index: {}]
  %s4 = inlined_call_operand.vmem [shape: f32[8,1], index: 4, kind: input, shape index: {}]
  %s5 = inlined_call_operand.vmem [shape: f32[1,326], index: 5, kind: input, shape index: {}]
  %s6 = inlined_call_operand.vmem [shape: f32[3], index: 6, kind: input, shape index: {}]
  %s7 = inlined_call_operand.vmem [shape: f32[8,288], index: 7, kind: output, shape index: {}]
  %s8 = sld [smem:[#allocation0]]
  $region42: #{_forward.1} parent=0
    _
  %s10 = ssub.s32 1, %s8
  %s11 = scalar_select 0, %s10, %s8
  $region1: #{_forward.1} parent=0
    #allocation2 [shape = 'u8[512]{0}', space=smem, size = 0x200, scoped, tag = 'input window, operand 6, single buffered']
    #allocation3 [shape = 's32[1]{0}', space=sflag, size = 0x4, scoped, tag = 'scoped memory for _forward.1']
    %12 = vsyncpa [#allocation3], 0
    // Predicated region
    $region2: #{_forward.1} parent=1 // pred_check
      _
    $region3: #{_forward.1} parent=1 // pred_check_branch
      %14 = sbr.rel (0) target = $region5
    $region4: #{_forward.1} parent=1 // pred_region
      _
    $region5: #{_forward.1} parent=1 // pred_fallthru
      _
    // Predicated region
    $region6: #{_forward.1} parent=1 // pred_check
      _
    $region7: #{_forward.1} parent=1 // pred_check_branch
      %16 = sbr.rel (0) target = $region9
    $region8: #{_forward.1} parent=1 // pred_region
      _
    $region9: #{_forward.1} parent=1 // pred_fallthru
      _
    // Predicated region
    $region10: #{_forward.1} parent=1 // pred_check
      _
    $region11: #{_forward.1} parent=1 // pred_check_branch
      %18 = sbr.rel (0) target = $region13
    $region12: #{_forward.1} parent=1 // pred_region
      _
    $region13: #{_forward.1} parent=1 // pred_fallthru
      _
    // Predicated region
    $region14: #{_forward.1} parent=1 // pred_check
      _
    $region15: #{_forward.1} parent=1 // pred_check_branch
      %20 = sbr.rel (0) target = $region17
    $region16: #{_forward.1} parent=1 // pred_region
      _
    $region17: #{_forward.1} parent=1 // pred_fallthru
      _
    // Predicated region
    $region18: #{_forward.1} parent=1 // pred_check
      _
    $region19: #{_forward.1} parent=1 // pred_check_branch
      %22 = sbr.rel (0) target = $region21
    $region20: #{_forward.1} parent=1 // pred_region
      _
    $region21: #{_forward.1} parent=1 // pred_fallthru
      _
    // Predicated region
    $region22: #{_forward.1} parent=1 // pred_check
      _
    $region23: #{_forward.1} parent=1 // pred_check_branch
      %24 = sbr.rel (0) target = $region25
    $region24: #{_forward.1} parent=1 // pred_region
      _
    $region25: #{_forward.1} parent=1 // pred_fallthru
      _
    // Predicated region
    $region26: #{_forward.1} parent=1 // pred_check
      _
    $region27: #{_forward.1} parent=1 // pred_check_branch
      %26 = sbr.rel (0) target = $region29
    $region28: #{_forward.1} parent=1 // pred_region
      %s28 = ssub.s32 16, 16
      %29 = vsyncadd [#allocation3], %s28
      %s31 = sshll.u32 %s6, 4
      %s32 = int_to_ptr.vmem [resolvable:$true] %s31
      %34 = dma.vmem_to_smem %s32, 16, [#allocation2], [#allocation3]
    $region29: #{_forward.1} parent=1 // pred_fallthru
      _
    // Predicated region
    $region30: #{_forward.1} parent=1 // pred_check
      _
    $region31: #{_forward.1} parent=1 // pred_check_branch
      %36 = sbr.rel (0) target = $region33
    $region32: #{_forward.1} parent=1 // pred_region
      %37 = dma.done [#allocation3], 16
    $region33: #{_forward.1} parent=1 // pred_fallthru
      _
    %38 = sfence
    %v39 = vld [vmem:[%s0] sm:$0xff]
    %v40 = vld [vmem:[%s0 + $0x8] sm:$0xff]
    %v41 = vld [vmem:[%s0 + $0x10] sm:$0xff]
    %s42 = sld [smem:[#allocation2]]
    %s43 = sld [smem:[#allocation2 + $0x1]]
    %s44 = sld [smem:[#allocation2 + $0x2]]
    %v45 = vld [vmem:[%s1] sm:$0xff]
    %v46 = vld [vmem:[%s1 + $0x8] sm:$0xff]
    %s47 = scalar_lea.vmem %s1, 16
    %v48 = vld [vmem:[%s47] sm:$0xff]
    %v49 = vld [vmem:[%s47 + $0x8] sm:$0xff]
    %53 = vrot.lane.b32.xlu0 %v39, 110
    %v54 = vpop.permute.xlu0 %53
    %55 = vrot.lane.b32.xlu0 %v40, 110
    %v56 = vpop.permute.xlu0 %55
    %57 = vrot.lane.b32.xlu0 %v41, 110
    %v58 = vpop.permute.xlu0 %57
    %vm59 = vcmask 900096
    %v60 = vsel %vm59, %v54, %v56
    %v61 = vsel %vm59, %v56, %v58
    %vm65 = vcmask 64512
    %v67 = vsel %vm65, %v48, 0
    %v70 = vsel %vm65, %v49, 0
    %72 = vmatprep.subr.mxu0 0.0
    %73 = vmatpush1.msra.mxu0 0.0
    %74 = vmatprep.subr.mxu0 0.0
    %75 = vmatpush1.msra.mxu0 0.0
    %76 = vmatprep.subr.mxu0 0.0
    %77 = vmatpush1.msra.mxu0 0.0
    %78 = vmatprep.subr.mxu0 0.0
    %79 = vmatpush1.msra.mxu0 0.0
    %80 = vmatprep.subr.mxu0 0.0
    %81 = vmatpush1.msra.mxu0 0.0
    %82 = vmatprep.subr.mxu0 0.0
    %83 = vmatpush1.msra.mxu0 0.0
    %84 = vmatprep.subr.mxu0 0.0
    %85 = vmatpush1.msra.mxu0 0.0
    %86 = vmatprep.subr.mxu0 0.0
    %87 = vmatpush1.msra.mxu0 0.0
    %88 = vmatprep.subr.mxu0 0.0
    %89 = vmatpush1.msra.mxu0 0.0
    %90 = vmatprep.subr.mxu0 0.0
    %91 = vmatpush1.msra.mxu0 0.0
    %92 = vmatprep.subr.mxu0 0.0
    %93 = vmatpush1.msra.mxu0 0.0
    %94 = vmatprep.subr.mxu0 0.0
    %95 = vmatpush1.msra.mxu0 0.0
    %96 = vmatprep.subr.mxu0 0.0
    %97 = vmatpush1.msra.mxu0 0.0
    %98 = vmatprep.subr.mxu0 0.0
    %99 = vmatpush1.msra.mxu0 0.0
    %100 = vmatprep.subr.mxu0 0.0
    %101 = vmatpush1.msra.mxu0 0.0
    %102 = vmatprep.subr.mxu0 %v61
    %103 = vmatpush1.msra.mxu0 %v60
    %104 = vmatprep.subr.mxu0 0.0
    %105 = vmatpush2.msra.mxu0 0.0
    %106 = vmatprep.subr.mxu0 0.0
    %107 = vmatpush2.msra.mxu0 0.0
    %108 = vmatprep.subr.mxu0 0.0
    %109 = vmatpush2.msra.mxu0 0.0
    %110 = vmatprep.subr.mxu0 0.0
    %111 = vmatpush2.msra.mxu0 0.0
    %112 = vmatprep.subr.mxu0 0.0
    %113 = vmatpush2.msra.mxu0 0.0
    %114 = vmatprep.subr.mxu0 0.0
    %115 = vmatpush2.msra.mxu0 0.0
    %116 = vmatprep.subr.mxu0 0.0
    %117 = vmatpush2.msra.mxu0 0.0
    %118 = vmatprep.subr.mxu0 0.0
    %119 = vmatpush2.msra.mxu0 0.0
    %120 = vmatprep.subr.mxu0 0.0
    %121 = vmatpush2.msra.mxu0 0.0
    %122 = vmatprep.subr.mxu0 0.0
    %123 = vmatpush2.msra.mxu0 0.0
    %124 = vmatprep.subr.mxu0 0.0
    %125 = vmatpush2.msra.mxu0 0.0
    %126 = vmatprep.subr.mxu0 0.0
    %127 = vmatpush2.msra.mxu0 0.0
    %128 = vmatprep.subr.mxu0 0.0
    %129 = vmatpush2.msra.mxu0 0.0
    %130 = vmatprep.subr.mxu0 0.0
    %131 = vmatpush2.msra.mxu0 0.0
    %132 = vmatprep.subr.mxu0 0.0
    %133 = vmatpush2.msra.mxu0 0.0
    %134 = vmatprep.subr.mxu0 0.0
    %135 = vmatpush2.msra.mxu0 0.0
    %136 = vmatprep.mubr.f32.mxu0 0.0
    %137 = vmatmul.mubr.f32.gmra.mxu0 %v67
    %v138 = vpop.f32.mrf.mxu0
    %v139 = vadd.f32 0.0, %v138
    %v140 = vpop.f32.mrf.mxu0
    %v141 = vadd.f32 0.0, %v140
    %142 = vmatprep.mubr.f32.mxu0 0.0
    %143 = vmatmul.mubr.f32.gmra.mxu0 %v70
    %v144 = vpop.f32.mrf.mxu0
    %v145 = vadd.f32 0.0, %v144
    %v146 = vpop.f32.mrf.mxu0
    %v147 = vadd.f32 0.0, %v146
    %148 = vdwg.mxu0
    %149 = vmatprep.subr.mxu0 0.0
    %150 = vmatpush1.msra.mxu0 0.0
    %151 = vmatprep.subr.mxu0 0.0
    %152 = vmatpush1.msra.mxu0 0.0
    %153 = vmatprep.subr.mxu0 0.0
    %154 = vmatpush1.msra.mxu0 0.0
    %155 = vmatprep.subr.mxu0 0.0
    %156 = vmatpush1.msra.mxu0 0.0
    %157 = vmatprep.subr.mxu0 0.0
    %158 = vmatpush1.msra.mxu0 0.0
    %159 = vmatprep.subr.mxu0 0.0
    %160 = vmatpush1.msra.mxu0 0.0
    %161 = vmatprep.subr.mxu0 0.0
    %162 = vmatpush1.msra.mxu0 0.0
    %163 = vmatprep.subr.mxu0 0.0
    %164 = vmatpush1.msra.mxu0 0.0
    %165 = vmatprep.subr.mxu0 0.0
    %166 = vmatpush1.msra.mxu0 0.0
    %167 = vmatprep.subr.mxu0 0.0
    %168 = vmatpush1.msra.mxu0 0.0
    %169 = vmatprep.subr.mxu0 0.0
    %170 = vmatpush1.msra.mxu0 0.0
    %171 = vmatprep.subr.mxu0 0.0
    %172 = vmatpush1.msra.mxu0 0.0
    %173 = vmatprep.subr.mxu0 0.0
    %174 = vmatpush1.msra.mxu0 0.0
    %175 = vmatprep.subr.mxu0 0.0
    %176 = vmatpush1.msra.mxu0 0.0
    %177 = vmatprep.subr.mxu0 0.0
    %178 = vmatpush1.msra.mxu0 0.0
    %179 = vmatprep.subr.mxu0 0.0
    %180 = vmatpush1.msra.mxu0 %v58
    %181 = vmatprep.subr.mxu0 0.0
    %182 = vmatpush2.msra.mxu0 0.0
    %183 = vmatprep.subr.mxu0 0.0
    %184 = vmatpush2.msra.mxu0 0.0
    %185 = vmatprep.subr.mxu0 0.0
    %186 = vmatpush2.msra.mxu0 0.0
    %187 = vmatprep.subr.mxu0 0.0
    %188 = vmatpush2.msra.mxu0 0.0
    %189 = vmatprep.subr.mxu0 0.0
    %190 = vmatpush2.msra.mxu0 0.0
    %191 = vmatprep.subr.mxu0 0.0
    %192 = vmatpush2.msra.mxu0 0.0
    %193 = vmatprep.subr.mxu0 0.0
    %194 = vmatpush2.msra.mxu0 0.0
    %195 = vmatprep.subr.mxu0 0.0
    %196 = vmatpush2.msra.mxu0 0.0
    %197 = vmatprep.subr.mxu0 0.0
    %198 = vmatpush2.msra.mxu0 0.0
    %199 = vmatprep.subr.mxu0 0.0
    %200 = vmatpush2.msra.mxu0 0.0
    %201 = vmatprep.subr.mxu0 0.0
    %202 = vmatpush2.msra.mxu0 0.0
    %203 = vmatprep.subr.mxu0 0.0
    %204 = vmatpush2.msra.mxu0 0.0
    %205 = vmatprep.subr.mxu0 0.0
    %206 = vmatpush2.msra.mxu0 0.0
    %207 = vmatprep.subr.mxu0 0.0
    %208 = vmatpush2.msra.mxu0 0.0
    %209 = vmatprep.subr.mxu0 0.0
    %210 = vmatpush2.msra.mxu0 0.0
    %211 = vmatprep.subr.mxu0 0.0
    %212 = vmatpush2.msra.mxu0 0.0
    %213 = vmatprep.mubr.f32.mxu0 0.0
    %214 = vmatmul.mubr.f32.gmra.mxu0 %v67
    %v215 = vpop.f32.mrf.mxu0
    %v216 = vadd.f32 0.0, %v215
    %v217 = vpop.f32.mrf.mxu0
    %218 = vmatprep.mubr.f32.mxu0 0.0
    %219 = vmatmul.mubr.f32.gmra.mxu0 %v70
    %v220 = vpop.f32.mrf.mxu0
    %v221 = vadd.f32 0.0, %v220
    %v222 = vpop.f32.mrf.mxu0
    %223 = vdwg.mxu0
    %224 = vrot.lane.b32.xlu0 %v39, 111
    %v225 = vpop.permute.xlu0 %224
    %226 = vrot.lane.b32.xlu0 %v40, 111
    %v227 = vpop.permute.xlu0 %226
    %228 = vrot.lane.b32.xlu0 %v41, 111
    %v229 = vpop.permute.xlu0 %228
    %vm230 = vcmask 908288
    %v231 = vsel %vm230, %v225, %v227
    %v232 = vsel %vm230, %v227, %v229
    %v237 = vsel %vm65, %v45, 0
    %v240 = vsel %vm65, %v46, 0
    %242 = vmatprep.subr.mxu0 0.0
    %243 = vmatpush1.msra.mxu0 0.0
    %244 = vmatprep.subr.mxu0 0.0
    %245 = vmatpush1.msra.mxu0 0.0
    %246 = vmatprep.subr.mxu0 0.0
    %247 = vmatpush1.msra.mxu0 0.0
    %248 = vmatprep.subr.mxu0 0.0
    %249 = vmatpush1.msra.mxu0 0.0
    %250 = vmatprep.subr.mxu0 0.0
    %251 = vmatpush1.msra.mxu0 0.0
    %252 = vmatprep.subr.mxu0 0.0
    %253 = vmatpush1.msra.mxu0 0.0
    %254 = vmatprep.subr.mxu0 0.0
    %255 = vmatpush1.msra.mxu0 0.0
    %256 = vmatprep.subr.mxu0 0.0
    %257 = vmatpush1.msra.mxu0 0.0
    %258 = vmatprep.subr.mxu0 0.0
    %259 = vmatpush1.msra.mxu0 0.0
    %260 = vmatprep.subr.mxu0 0.0
    %261 = vmatpush1.msra.mxu0 0.0
    %262 = vmatprep.subr.mxu0 0.0
    %263 = vmatpush1.msra.mxu0 0.0
    %264 = vmatprep.subr.mxu0 0.0
    %265 = vmatpush1.msra.mxu0 0.0
    %266 = vmatprep.subr.mxu0 0.0
    %267 = vmatpush1.msra.mxu0 0.0
    %268 = vmatprep.subr.mxu0 0.0
    %269 = vmatpush1.msra.mxu0 0.0
    %270 = vmatprep.subr.mxu0 0.0
    %271 = vmatpush1.msra.mxu0 0.0
    %272 = vmatprep.subr.mxu0 %v232
    %273 = vmatpush1.msra.mxu0 %v231
    %274 = vmatprep.subr.mxu0 0.0
    %275 = vmatpush2.msra.mxu0 0.0
    %276 = vmatprep.subr.mxu0 0.0
    %277 = vmatpush2.msra.mxu0 0.0
    %278 = vmatprep.subr.mxu0 0.0
    %279 = vmatpush2.msra.mxu0 0.0
    %280 = vmatprep.subr.mxu0 0.0
    %281 = vmatpush2.msra.mxu0 0.0
    %282 = vmatprep.subr.mxu0 0.0
    %283 = vmatpush2.msra.mxu0 0.0
    %284 = vmatprep.subr.mxu0 0.0
    %285 = vmatpush2.msra.mxu0 0.0
    %286 = vmatprep.subr.mxu0 0.0
    %287 = vmatpush2.msra.mxu0 0.0
    %288 = vmatprep.subr.mxu0 0.0
    %289 = vmatpush2.msra.mxu0 0.0
    %290 = vmatprep.subr.mxu0 0.0
    %291 = vmatpush2.msra.mxu0 0.0
    %292 = vmatprep.subr.mxu0 0.0
    %293 = vmatpush2.msra.mxu0 0.0
    %294 = vmatprep.subr.mxu0 0.0
    %295 = vmatpush2.msra.mxu0 0.0
    %296 = vmatprep.subr.mxu0 0.0
    %297 = vmatpush2.msra.mxu0 0.0
    %298 = vmatprep.subr.mxu0 0.0
    %299 = vmatpush2.msra.mxu0 0.0
    %300 = vmatprep.subr.mxu0 0.0
    %301 = vmatpush2.msra.mxu0 0.0
    %302 = vmatprep.subr.mxu0 0.0
    %303 = vmatpush2.msra.mxu0 0.0
    %304 = vmatprep.subr.mxu0 0.0
    %305 = vmatpush2.msra.mxu0 0.0
    %306 = vmatprep.mubr.f32.mxu0 0.0
    %307 = vmatmul.mubr.f32.gmra.mxu0 %v237
    %v308 = vpop.f32.mrf.mxu0
    %v309 = vadd.f32 %v139, %v308
    %v310 = vpop.f32.mrf.mxu0
    %v311 = vadd.f32 %v141, %v310
    %312 = vmatprep.mubr.f32.mxu0 0.0
    %313 = vmatmul.mubr.f32.gmra.mxu0 %v240
    %v314 = vpop.f32.mrf.mxu0
    %v315 = vadd.f32 %v145, %v314
    %v316 = vpop.f32.mrf.mxu0
    %v317 = vadd.f32 %v147, %v316
    %318 = vdwg.mxu0
    %319 = vmatprep.subr.mxu0 0.0
    %320 = vmatpush1.msra.mxu0 0.0
    %321 = vmatprep.subr.mxu0 0.0
    %322 = vmatpush1.msra.mxu0 0.0
    %323 = vmatprep.subr.mxu0 0.0
    %324 = vmatpush1.msra.mxu0 0.0
    %325 = vmatprep.subr.mxu0 0.0
    %326 = vmatpush1.msra.mxu0 0.0
    %327 = vmatprep.subr.mxu0 0.0
    %328 = vmatpush1.msra.mxu0 0.0
    %329 = vmatprep.subr.mxu0 0.0
    %330 = vmatpush1.msra.mxu0 0.0
    %331 = vmatprep.subr.mxu0 0.0
    %332 = vmatpush1.msra.mxu0 0.0
    %333 = vmatprep.subr.mxu0 0.0
    %334 = vmatpush1.msra.mxu0 0.0
    %335 = vmatprep.subr.mxu0 0.0
    %336 = vmatpush1.msra.mxu0 0.0
    %337 = vmatprep.subr.mxu0 0.0
    %338 = vmatpush1.msra.mxu0 0.0
    %339 = vmatprep.subr.mxu0 0.0
    %340 = vmatpush1.msra.mxu0 0.0
    %341 = vmatprep.subr.mxu0 0.0
    %342 = vmatpush1.msra.mxu0 0.0
    %343 = vmatprep.subr.mxu0 0.0
    %344 = vmatpush1.msra.mxu0 0.0
    %345 = vmatprep.subr.mxu0 0.0
    %346 = vmatpush1.msra.mxu0 0.0
    %347 = vmatprep.subr.mxu0 0.0
    %348 = vmatpush1.msra.mxu0 0.0
    %349 = vmatprep.subr.mxu0 0.0
    %350 = vmatpush1.msra.mxu0 %v229
    %351 = vmatprep.subr.mxu0 0.0
    %352 = vmatpush2.msra.mxu0 0.0
    %353 = vmatprep.subr.mxu0 0.0
    %354 = vmatpush2.msra.mxu0 0.0
    %355 = vmatprep.subr.mxu0 0.0
    %356 = vmatpush2.msra.mxu0 0.0
    %357 = vmatprep.subr.mxu0 0.0
    %358 = vmatpush2.msra.mxu0 0.0
    %359 = vmatprep.subr.mxu0 0.0
    %360 = vmatpush2.msra.mxu0 0.0
    %361 = vmatprep.subr.mxu0 0.0
    %362 = vmatpush2.msra.mxu0 0.0
    %363 = vmatprep.subr.mxu0 0.0
    %364 = vmatpush2.msra.mxu0 0.0
    %365 = vmatprep.subr.mxu0 0.0
    %366 = vmatpush2.msra.mxu0 0.0
    %367 = vmatprep.subr.mxu0 0.0
    %368 = vmatpush2.msra.mxu0 0.0
    %369 = vmatprep.subr.mxu0 0.0
    %370 = vmatpush2.msra.mxu0 0.0
    %371 = vmatprep.subr.mxu0 0.0
    %372 = vmatpush2.msra.mxu0 0.0
    %373 = vmatprep.subr.mxu0 0.0
    %374 = vmatpush2.msra.mxu0 0.0
    %375 = vmatprep.subr.mxu0 0.0
    %376 = vmatpush2.msra.mxu0 0.0
    %377 = vmatprep.subr.mxu0 0.0
    %378 = vmatpush2.msra.mxu0 0.0
    %379 = vmatprep.subr.mxu0 0.0
    %380 = vmatpush2.msra.mxu0 0.0
    %381 = vmatprep.subr.mxu0 0.0
    %382 = vmatpush2.msra.mxu0 0.0
    %383 = vmatprep.mubr.f32.mxu0 0.0
    %384 = vmatmul.mubr.f32.gmra.mxu0 %v237
    %v385 = vpop.f32.mrf.mxu0
    %v386 = vadd.f32 %v216, %v385
    %v387 = vpop.f32.mrf.mxu0
    %388 = vmatprep.mubr.f32.mxu0 0.0
    %389 = vmatmul.mubr.f32.gmra.mxu0 %v240
    %v390 = vpop.f32.mrf.mxu0
    %v391 = vadd.f32 %v221, %v390
    %v392 = vpop.f32.mrf.mxu0
    %393 = vdwg.mxu0
    %s394 = scalar_lea.vmem %s1, 32
    %v395 = vld [vmem:[%s394] sm:$0xff]
    %v396 = vld [vmem:[%s394 + $0x8] sm:$0xff]
    %397 = vrot.lane.b32.xlu0 %v39, 109
    %v398 = vpop.permute.xlu0 %397
    %399 = vrot.lane.b32.xlu0 %v40, 109
    %v400 = vpop.permute.xlu0 %399
    %401 = vrot.lane.b32.xlu0 %v41, 109
    %v402 = vpop.permute.xlu0 %401
    %vm403 = vcmask 891904
    %v404 = vsel %vm403, %v398, %v400
    %v405 = vsel %vm403, %v400, %v402
    %v410 = vsel %vm65, %v395, 0
    %v413 = vsel %vm65, %v396, 0
    %415 = vmatprep.subr.mxu0 0.0
    %416 = vmatpush1.msra.mxu0 0.0
    %417 = vmatprep.subr.mxu0 0.0
    %418 = vmatpush1.msra.mxu0 0.0
    %419 = vmatprep.subr.mxu0 0.0
    %420 = vmatpush1.msra.mxu0 0.0
    %421 = vmatprep.subr.mxu0 0.0
    %422 = vmatpush1.msra.mxu0 0.0
    %423 = vmatprep.subr.mxu0 0.0
    %424 = vmatpush1.msra.mxu0 0.0
    %425 = vmatprep.subr.mxu0 0.0
    %426 = vmatpush1.msra.mxu0 0.0
    %427 = vmatprep.subr.mxu0 0.0
    %428 = vmatpush1.msra.mxu0 0.0
    %429 = vmatprep.subr.mxu0 0.0
    %430 = vmatpush1.msra.mxu0 0.0
    %431 = vmatprep.subr.mxu0 0.0
    %432 = vmatpush1.msra.mxu0 0.0
    %433 = vmatprep.subr.mxu0 0.0
    %434 = vmatpush1.msra.mxu0 0.0
    %435 = vmatprep.subr.mxu0 0.0
    %436 = vmatpush1.msra.mxu0 0.0
    %437 = vmatprep.subr.mxu0 0.0
    %438 = vmatpush1.msra.mxu0 0.0
    %439 = vmatprep.subr.mxu0 0.0
    %440 = vmatpush1.msra.mxu0 0.0
    %441 = vmatprep.subr.mxu0 0.0
    %442 = vmatpush1.msra.mxu0 0.0
    %443 = vmatprep.subr.mxu0 0.0
    %444 = vmatpush1.msra.mxu0 0.0
    %445 = vmatprep.subr.mxu0 %v405
    %446 = vmatpush1.msra.mxu0 %v404
    %447 = vmatprep.subr.mxu0 0.0
    %448 = vmatpush2.msra.mxu0 0.0
    %449 = vmatprep.subr.mxu0 0.0
    %450 = vmatpush2.msra.mxu0 0.0
    %451 = vmatprep.subr.mxu0 0.0
    %452 = vmatpush2.msra.mxu0 0.0
    %453 = vmatprep.subr.mxu0 0.0
    %454 = vmatpush2.msra.mxu0 0.0
    %455 = vmatprep.subr.mxu0 0.0
    %456 = vmatpush2.msra.mxu0 0.0
    %457 = vmatprep.subr.mxu0 0.0
    %458 = vmatpush2.msra.mxu0 0.0
    %459 = vmatprep.subr.mxu0 0.0
    %460 = vmatpush2.msra.mxu0 0.0
    %461 = vmatprep.subr.mxu0 0.0
    %462 = vmatpush2.msra.mxu0 0.0
    %463 = vmatprep.subr.mxu0 0.0
    %464 = vmatpush2.msra.mxu0 0.0
    %465 = vmatprep.subr.mxu0 0.0
    %466 = vmatpush2.msra.mxu0 0.0
    %467 = vmatprep.subr.mxu0 0.0
    %468 = vmatpush2.msra.mxu0 0.0
    %469 = vmatprep.subr.mxu0 0.0
    %470 = vmatpush2.msra.mxu0 0.0
    %471 = vmatprep.subr.mxu0 0.0
    %472 = vmatpush2.msra.mxu0 0.0
    %473 = vmatprep.subr.mxu0 0.0
    %474 = vmatpush2.msra.mxu0 0.0
    %475 = vmatprep.subr.mxu0 0.0
    %476 = vmatpush2.msra.mxu0 0.0
    %477 = vmatprep.subr.mxu0 0.0
    %478 = vmatpush2.msra.mxu0 0.0
    %479 = vmatprep.mubr.f32.mxu0 0.0
    %480 = vmatmul.mubr.f32.gmra.mxu0 %v410
    %v481 = vpop.f32.mrf.mxu0
    %v482 = vadd.f32 0.0, %v481
    %v483 = vpop.f32.mrf.mxu0
    %v484 = vadd.f32 0.0, %v483
    %485 = vmatprep.mubr.f32.mxu0 0.0
    %486 = vmatmul.mubr.f32.gmra.mxu0 %v413
    %v487 = vpop.f32.mrf.mxu0
    %v488 = vadd.f32 0.0, %v487
    %v489 = vpop.f32.mrf.mxu0
    %v490 = vadd.f32 0.0, %v489
    %491 = vdwg.mxu0
    %492 = vmatprep.subr.mxu0 0.0
    %493 = vmatpush1.msra.mxu0 0.0
    %494 = vmatprep.subr.mxu0 0.0
    %495 = vmatpush1.msra.mxu0 0.0
    %496 = vmatprep.subr.mxu0 0.0
    %497 = vmatpush1.msra.mxu0 0.0
    %498 = vmatprep.subr.mxu0 0.0
    %499 = vmatpush1.msra.mxu0 0.0
    %500 = vmatprep.subr.mxu0 0.0
    %501 = vmatpush1.msra.mxu0 0.0
    %502 = vmatprep.subr.mxu0 0.0
    %503 = vmatpush1.msra.mxu0 0.0
    %504 = vmatprep.subr.mxu0 0.0
    %505 = vmatpush1.msra.mxu0 0.0
    %506 = vmatprep.subr.mxu0 0.0
    %507 = vmatpush1.msra.mxu0 0.0
    %508 = vmatprep.subr.mxu0 0.0
    %509 = vmatpush1.msra.mxu0 0.0
    %510 = vmatprep.subr.mxu0 0.0
    %511 = vmatpush1.msra.mxu0 0.0
    %512 = vmatprep.subr.mxu0 0.0
    %513 = vmatpush1.msra.mxu0 0.0
    %514 = vmatprep.subr.mxu0 0.0
    %515 = vmatpush1.msra.mxu0 0.0
    %516 = vmatprep.subr.mxu0 0.0
    %517 = vmatpush1.msra.mxu0 0.0
    %518 = vmatprep.subr.mxu0 0.0
    %519 = vmatpush1.msra.mxu0 0.0
    %520 = vmatprep.subr.mxu0 0.0
    %521 = vmatpush1.msra.mxu0 0.0
    %522 = vmatprep.subr.mxu0 0.0
    %523 = vmatpush1.msra.mxu0 %v402
    %524 = vmatprep.subr.mxu0 0.0
    %525 = vmatpush2.msra.mxu0 0.0
    %526 = vmatprep.subr.mxu0 0.0
    %527 = vmatpush2.msra.mxu0 0.0
    %528 = vmatprep.subr.mxu0 0.0
    %529 = vmatpush2.msra.mxu0 0.0
    %530 = vmatprep.subr.mxu0 0.0
    %531 = vmatpush2.msra.mxu0 0.0
    %532 = vmatprep.subr.mxu0 0.0
    %533 = vmatpush2.msra.mxu0 0.0
    %534 = vmatprep.subr.mxu0 0.0
    %535 = vmatpush2.msra.mxu0 0.0
    %536 = vmatprep.subr.mxu0 0.0
    %537 = vmatpush2.msra.mxu0 0.0
    %538 = vmatprep.subr.mxu0 0.0
    %539 = vmatpush2.msra.mxu0 0.0
    %540 = vmatprep.subr.mxu0 0.0
    %541 = vmatpush2.msra.mxu0 0.0
    %542 = vmatprep.subr.mxu0 0.0
    %543 = vmatpush2.msra.mxu0 0.0
    %544 = vmatprep.subr.mxu0 0.0
    %545 = vmatpush2.msra.mxu0 0.0
    %546 = vmatprep.subr.mxu0 0.0
    %547 = vmatpush2.msra.mxu0 0.0
    %548 = vmatprep.subr.mxu0 0.0
    %549 = vmatpush2.msra.mxu0 0.0
    %550 = vmatprep.subr.mxu0 0.0
    %551 = vmatpush2.msra.mxu0 0.0
    %552 = vmatprep.subr.mxu0 0.0
    %553 = vmatpush2.msra.mxu0 0.0
    %554 = vmatprep.subr.mxu0 0.0
    %555 = vmatpush2.msra.mxu0 0.0
    %556 = vmatprep.mubr.f32.mxu0 0.0
    %557 = vmatmul.mubr.f32.gmra.mxu0 %v410
    %v558 = vpop.f32.mrf.mxu0
    %v559 = vadd.f32 0.0, %v558
    %v560 = vpop.f32.mrf.mxu0
    %561 = vmatprep.mubr.f32.mxu0 0.0
    %562 = vmatmul.mubr.f32.gmra.mxu0 %v413
    %v563 = vpop.f32.mrf.mxu0
    %v564 = vadd.f32 0.0, %v563
    %v565 = vpop.f32.mrf.mxu0
    %566 = vdwg.mxu0
    %v567 = vadd.f32 %v309, %v482
    %v568 = vadd.f32 %v311, %v484
    %v569 = vadd.f32 %v386, %v559
    %v570 = vadd.f32 %v315, %v488
    %v571 = vadd.f32 %v317, %v490
    %v572 = vadd.f32 %v391, %v564
    %s573 = scalar_lea.vmem %s1, 48
    %v574 = vld [vmem:[%s573] sm:$0xff]
    %v575 = vld [vmem:[%s573 + $0x8] sm:$0xff]
    %576 = vrot.lane.b32.xlu0 %v39, 93
    %v577 = vpop.permute.xlu0 %576
    %578 = vrot.lane.b32.xlu0 %v40, 93
    %v579 = vpop.permute.xlu0 %578
    %580 = vrot.lane.b32.xlu0 %v41, 93
    %v581 = vpop.permute.xlu0 %580
    %vm582 = vcmask 760832
    %v583 = vsel %vm582, %v577, %v579
    %v584 = vsel %vm582, %v579, %v581
    %v589 = vsel %vm65, %v574, 0
    %v592 = vsel %vm65, %v575, 0
    %594 = vmatprep.subr.mxu0 0.0
    %595 = vmatpush1.msra.mxu0 0.0
    %596 = vmatprep.subr.mxu0 0.0
    %597 = vmatpush1.msra.mxu0 0.0
    %598 = vmatprep.subr.mxu0 0.0
    %599 = vmatpush1.msra.mxu0 0.0
    %600 = vmatprep.subr.mxu0 0.0
    %601 = vmatpush1.msra.mxu0 0.0
    %602 = vmatprep.subr.mxu0 0.0
    %603 = vmatpush1.msra.mxu0 0.0
    %604 = vmatprep.subr.mxu0 0.0
    %605 = vmatpush1.msra.mxu0 0.0
    %606 = vmatprep.subr.mxu0 0.0
    %607 = vmatpush1.msra.mxu0 0.0
    %608 = vmatprep.subr.mxu0 0.0
    %609 = vmatpush1.msra.mxu0 0.0
    %610 = vmatprep.subr.mxu0 0.0
    %611 = vmatpush1.msra.mxu0 0.0
    %612 = vmatprep.subr.mxu0 0.0
    %613 = vmatpush1.msra.mxu0 0.0
    %614 = vmatprep.subr.mxu0 0.0
    %615 = vmatpush1.msra.mxu0 0.0
    %616 = vmatprep.subr.mxu0 0.0
    %617 = vmatpush1.msra.mxu0 0.0
    %618 = vmatprep.subr.mxu0 0.0
    %619 = vmatpush1.msra.mxu0 0.0
    %620 = vmatprep.subr.mxu0 0.0
    %621 = vmatpush1.msra.mxu0 0.0
    %622 = vmatprep.subr.mxu0 0.0
    %623 = vmatpush1.msra.mxu0 0.0
    %624 = vmatprep.subr.mxu0 %v584
    %625 = vmatpush1.msra.mxu0 %v583
    %626 = vmatprep.subr.mxu0 0.0
    %627 = vmatpush2.msra.mxu0 0.0
    %628 = vmatprep.subr.mxu0 0.0
    %629 = vmatpush2.msra.mxu0 0.0
    %630 = vmatprep.subr.mxu0 0.0
    %631 = vmatpush2.msra.mxu0 0.0
    %632 = vmatprep.subr.mxu0 0.0
    %633 = vmatpush2.msra.mxu0 0.0
    %634 = vmatprep.subr.mxu0 0.0
    %635 = vmatpush2.msra.mxu0 0.0
    %636 = vmatprep.subr.mxu0 0.0
    %637 = vmatpush2.msra.mxu0 0.0
    %638 = vmatprep.subr.mxu0 0.0
    %639 = vmatpush2.msra.mxu0 0.0
    %640 = vmatprep.subr.mxu0 0.0
    %641 = vmatpush2.msra.mxu0 0.0
    %642 = vmatprep.subr.mxu0 0.0
    %643 = vmatpush2.msra.mxu0 0.0
    %644 = vmatprep.subr.mxu0 0.0
    %645 = vmatpush2.msra.mxu0 0.0
    %646 = vmatprep.subr.mxu0 0.0
    %647 = vmatpush2.msra.mxu0 0.0
    %648 = vmatprep.subr.mxu0 0.0
    %649 = vmatpush2.msra.mxu0 0.0
    %650 = vmatprep.subr.mxu0 0.0
    %651 = vmatpush2.msra.mxu0 0.0
    %652 = vmatprep.subr.mxu0 0.0
    %653 = vmatpush2.msra.mxu0 0.0
    %654 = vmatprep.subr.mxu0 0.0
    %655 = vmatpush2.msra.mxu0 0.0
    %656 = vmatprep.subr.mxu0 0.0
    %657 = vmatpush2.msra.mxu0 0.0
    %658 = vmatprep.mubr.f32.mxu0 0.0
    %659 = vmatmul.mubr.f32.gmra.mxu0 %v589
    %v660 = vpop.f32.mrf.mxu0
    %v661 = vadd.f32 0.0, %v660
    %v662 = vpop.f32.mrf.mxu0
    %v663 = vadd.f32 0.0, %v662
    %664 = vmatprep.mubr.f32.mxu0 0.0
    %665 = vmatmul.mubr.f32.gmra.mxu0 %v592
    %v666 = vpop.f32.mrf.mxu0
    %v667 = vadd.f32 0.0, %v666
    %v668 = vpop.f32.mrf.mxu0
    %v669 = vadd.f32 0.0, %v668
    %670 = vdwg.mxu0
    %671 = vmatprep.subr.mxu0 0.0
    %672 = vmatpush1.msra.mxu0 0.0
    %673 = vmatprep.subr.mxu0 0.0
    %674 = vmatpush1.msra.mxu0 0.0
    %675 = vmatprep.subr.mxu0 0.0
    %676 = vmatpush1.msra.mxu0 0.0
    %677 = vmatprep.subr.mxu0 0.0
    %678 = vmatpush1.msra.mxu0 0.0
    %679 = vmatprep.subr.mxu0 0.0
    %680 = vmatpush1.msra.mxu0 0.0
    %681 = vmatprep.subr.mxu0 0.0
    %682 = vmatpush1.msra.mxu0 0.0
    %683 = vmatprep.subr.mxu0 0.0
    %684 = vmatpush1.msra.mxu0 0.0
    %685 = vmatprep.subr.mxu0 0.0
    %686 = vmatpush1.msra.mxu0 0.0
    %687 = vmatprep.subr.mxu0 0.0
    %688 = vmatpush1.msra.mxu0 0.0
    %689 = vmatprep.subr.mxu0 0.0
    %690 = vmatpush1.msra.mxu0 0.0
    %691 = vmatprep.subr.mxu0 0.0
    %692 = vmatpush1.msra.mxu0 0.0
    %693 = vmatprep.subr.mxu0 0.0
    %694 = vmatpush1.msra.mxu0 0.0
    %695 = vmatprep.subr.mxu0 0.0
    %696 = vmatpush1.msra.mxu0 0.0
    %697 = vmatprep.subr.mxu0 0.0
    %698 = vmatpush1.msra.mxu0 0.0
    %699 = vmatprep.subr.mxu0 0.0
    %700 = vmatpush1.msra.mxu0 0.0
    %701 = vmatprep.subr.mxu0 0.0
    %702 = vmatpush1.msra.mxu0 %v581
    %703 = vmatprep.subr.mxu0 0.0
    %704 = vmatpush2.msra.mxu0 0.0
    %705 = vmatprep.subr.mxu0 0.0
    %706 = vmatpush2.msra.mxu0 0.0
    %707 = vmatprep.subr.mxu0 0.0
    %708 = vmatpush2.msra.mxu0 0.0
    %709 = vmatprep.subr.mxu0 0.0
    %710 = vmatpush2.msra.mxu0 0.0
    %711 = vmatprep.subr.mxu0 0.0
    %712 = vmatpush2.msra.mxu0 0.0
    %713 = vmatprep.subr.mxu0 0.0
    %714 = vmatpush2.msra.mxu0 0.0
    %715 = vmatprep.subr.mxu0 0.0
    %716 = vmatpush2.msra.mxu0 0.0
    %717 = vmatprep.subr.mxu0 0.0
    %718 = vmatpush2.msra.mxu0 0.0
    %719 = vmatprep.subr.mxu0 0.0
    %720 = vmatpush2.msra.mxu0 0.0
    %721 = vmatprep.subr.mxu0 0.0
    %722 = vmatpush2.msra.mxu0 0.0
    %723 = vmatprep.subr.mxu0 0.0
    %724 = vmatpush2.msra.mxu0 0.0
    %725 = vmatprep.subr.mxu0 0.0
    %726 = vmatpush2.msra.mxu0 0.0
    %727 = vmatprep.subr.mxu0 0.0
    %728 = vmatpush2.msra.mxu0 0.0
    %729 = vmatprep.subr.mxu0 0.0
    %730 = vmatpush2.msra.mxu0 0.0
    %731 = vmatprep.subr.mxu0 0.0
    %732 = vmatpush2.msra.mxu0 0.0
    %733 = vmatprep.subr.mxu0 0.0
    %734 = vmatpush2.msra.mxu0 0.0
    %735 = vmatprep.mubr.f32.mxu0 0.0
    %736 = vmatmul.mubr.f32.gmra.mxu0 %v589
    %v737 = vpop.f32.mrf.mxu0
    %v738 = vadd.f32 0.0, %v737
    %v739 = vpop.f32.mrf.mxu0
    %740 = vmatprep.mubr.f32.mxu0 0.0
    %741 = vmatmul.mubr.f32.gmra.mxu0 %v592
    %v742 = vpop.f32.mrf.mxu0
    %v743 = vadd.f32 0.0, %v742
    %v744 = vpop.f32.mrf.mxu0
    %745 = vdwg.mxu0
    %v746 = vadd.f32 %v567, %v661
    %v747 = vadd.f32 %v568, %v663
    %v748 = vadd.f32 %v569, %v738
    %v749 = vadd.f32 %v570, %v667
    %v750 = vadd.f32 %v571, %v669
    %v751 = vadd.f32 %v572, %v743
    %s752 = scalar_lea.vmem %s1, 64
    %v753 = vld [vmem:[%s752] sm:$0xff]
    %v754 = vld [vmem:[%s752 + $0x8] sm:$0xff]
    %755 = vrot.lane.b32.xlu0 %v39, 92
    %v756 = vpop.permute.xlu0 %755
    %757 = vrot.lane.b32.xlu0 %v40, 92
    %v758 = vpop.permute.xlu0 %757
    %759 = vrot.lane.b32.xlu0 %v41, 92
    %v760 = vpop.permute.xlu0 %759
    %vm761 = vcmask 752640
    %v762 = vsel %vm761, %v756, %v758
    %v763 = vsel %vm761, %v758, %v760
    %v768 = vsel %vm65, %v753, 0
    %v771 = vsel %vm65, %v754, 0
    %773 = vmatprep.subr.mxu0 0.0
    %774 = vmatpush1.msra.mxu0 0.0
    %775 = vmatprep.subr.mxu0 0.0
    %776 = vmatpush1.msra.mxu0 0.0
    %777 = vmatprep.subr.mxu0 0.0
    %778 = vmatpush1.msra.mxu0 0.0
    %779 = vmatprep.subr.mxu0 0.0
    %780 = vmatpush1.msra.mxu0 0.0
    %781 = vmatprep.subr.mxu0 0.0
    %782 = vmatpush1.msra.mxu0 0.0
    %783 = vmatprep.subr.mxu0 0.0
    %784 = vmatpush1.msra.mxu0 0.0
    %785 = vmatprep.subr.mxu0 0.0
    %786 = vmatpush1.msra.mxu0 0.0
    %787 = vmatprep.subr.mxu0 0.0
    %788 = vmatpush1.msra.mxu0 0.0
    %789 = vmatprep.subr.mxu0 0.0
    %790 = vmatpush1.msra.mxu0 0.0
    %791 = vmatprep.subr.mxu0 0.0
    %792 = vmatpush1.msra.mxu0 0.0
    %793 = vmatprep.subr.mxu0 0.0
    %794 = vmatpush1.msra.mxu0 0.0
    %795 = vmatprep.subr.mxu0 0.0
    %796 = vmatpush1.msra.mxu0 0.0
    %797 = vmatprep.subr.mxu0 0.0
    %798 = vmatpush1.msra.mxu0 0.0
    %799 = vmatprep.subr.mxu0 0.0
    %800 = vmatpush1.msra.mxu0 0.0
    %801 = vmatprep.subr.mxu0 0.0
    %802 = vmatpush1.msra.mxu0 0.0
    %803 = vmatprep.subr.mxu0 %v763
    %804 = vmatpush1.msra.mxu0 %v762
    %805 = vmatprep.subr.mxu0 0.0
    %806 = vmatpush2.msra.mxu0 0.0
    %807 = vmatprep.subr.mxu0 0.0
    %808 = vmatpush2.msra.mxu0 0.0
    %809 = vmatprep.subr.mxu0 0.0
    %810 = vmatpush2.msra.mxu0 0.0
    %811 = vmatprep.subr.mxu0 0.0
    %812 = vmatpush2.msra.mxu0 0.0
    %813 = vmatprep.subr.mxu0 0.0
    %814 = vmatpush2.msra.mxu0 0.0
    %815 = vmatprep.subr.mxu0 0.0
    %816 = vmatpush2.msra.mxu0 0.0
    %817 = vmatprep.subr.mxu0 0.0
    %818 = vmatpush2.msra.mxu0 0.0
    %819 = vmatprep.subr.mxu0 0.0
    %820 = vmatpush2.msra.mxu0 0.0
    %821 = vmatprep.subr.mxu0 0.0
    %822 = vmatpush2.msra.mxu0 0.0
    %823 = vmatprep.subr.mxu0 0.0
    %824 = vmatpush2.msra.mxu0 0.0
    %825 = vmatprep.subr.mxu0 0.0
    %826 = vmatpush2.msra.mxu0 0.0
    %827 = vmatprep.subr.mxu0 0.0
    %828 = vmatpush2.msra.mxu0 0.0
    %829 = vmatprep.subr.mxu0 0.0
    %830 = vmatpush2.msra.mxu0 0.0
    %831 = vmatprep.subr.mxu0 0.0
    %832 = vmatpush2.msra.mxu0 0.0
    %833 = vmatprep.subr.mxu0 0.0
    %834 = vmatpush2.msra.mxu0 0.0
    %835 = vmatprep.subr.mxu0 0.0
    %836 = vmatpush2.msra.mxu0 0.0
    %837 = vmatprep.mubr.f32.mxu0 0.0
    %838 = vmatmul.mubr.f32.gmra.mxu0 %v768
    %v839 = vpop.f32.mrf.mxu0
    %v840 = vadd.f32 0.0, %v839
    %v841 = vpop.f32.mrf.mxu0
    %v842 = vadd.f32 0.0, %v841
    %843 = vmatprep.mubr.f32.mxu0 0.0
    %844 = vmatmul.mubr.f32.gmra.mxu0 %v771
    %v845 = vpop.f32.mrf.mxu0
    %v846 = vadd.f32 0.0, %v845
    %v847 = vpop.f32.mrf.mxu0
    %v848 = vadd.f32 0.0, %v847
    %849 = vdwg.mxu0
    %850 = vmatprep.subr.mxu0 0.0
    %851 = vmatpush1.msra.mxu0 0.0
    %852 = vmatprep.subr.mxu0 0.0
    %853 = vmatpush1.msra.mxu0 0.0
    %854 = vmatprep.subr.mxu0 0.0
    %855 = vmatpush1.msra.mxu0 0.0
    %856 = vmatprep.subr.mxu0 0.0
    %857 = vmatpush1.msra.mxu0 0.0
    %858 = vmatprep.subr.mxu0 0.0
    %859 = vmatpush1.msra.mxu0 0.0
    %860 = vmatprep.subr.mxu0 0.0
    %861 = vmatpush1.msra.mxu0 0.0
    %862 = vmatprep.subr.mxu0 0.0
    %863 = vmatpush1.msra.mxu0 0.0
    %864 = vmatprep.subr.mxu0 0.0
    %865 = vmatpush1.msra.mxu0 0.0
    %866 = vmatprep.subr.mxu0 0.0
    %867 = vmatpush1.msra.mxu0 0.0
    %868 = vmatprep.subr.mxu0 0.0
    %869 = vmatpush1.msra.mxu0 0.0
    %870 = vmatprep.subr.mxu0 0.0
    %871 = vmatpush1.msra.mxu0 0.0
    %872 = vmatprep.subr.mxu0 0.0
    %873 = vmatpush1.msra.mxu0 0.0
    %874 = vmatprep.subr.mxu0 0.0
    %875 = vmatpush1.msra.mxu0 0.0
    %876 = vmatprep.subr.mxu0 0.0
    %877 = vmatpush1.msra.mxu0 0.0
    %878 = vmatprep.subr.mxu0 0.0
    %879 = vmatpush1.msra.mxu0 0.0
    %880 = vmatprep.subr.mxu0 0.0
    %881 = vmatpush1.msra.mxu0 %v760
    %882 = vmatprep.subr.mxu0 0.0
    %883 = vmatpush2.msra.mxu0 0.0
    %884 = vmatprep.subr.mxu0 0.0
    %885 = vmatpush2.msra.mxu0 0.0
    %886 = vmatprep.subr.mxu0 0.0
    %887 = vmatpush2.msra.mxu0 0.0
    %888 = vmatprep.subr.mxu0 0.0
    %889 = vmatpush2.msra.mxu0 0.0
    %890 = vmatprep.subr.mxu0 0.0
    %891 = vmatpush2.msra.mxu0 0.0
    %892 = vmatprep.subr.mxu0 0.0
    %893 = vmatpush2.msra.mxu0 0.0
    %894 = vmatprep.subr.mxu0 0.0
    %895 = vmatpush2.msra.mxu0 0.0
    %896 = vmatprep.subr.mxu0 0.0
    %897 = vmatpush2.msra.mxu0 0.0
    %898 = vmatprep.subr.mxu0 0.0
    %899 = vmatpush2.msra.mxu0 0.0
    %900 = vmatprep.subr.mxu0 0.0
    %901 = vmatpush2.msra.mxu0 0.0
    %902 = vmatprep.subr.mxu0 0.0
    %903 = vmatpush2.msra.mxu0 0.0
    %904 = vmatprep.subr.mxu0 0.0
    %905 = vmatpush2.msra.mxu0 0.0
    %906 = vmatprep.subr.mxu0 0.0
    %907 = vmatpush2.msra.mxu0 0.0
    %908 = vmatprep.subr.mxu0 0.0
    %909 = vmatpush2.msra.mxu0 0.0
    %910 = vmatprep.subr.mxu0 0.0
    %911 = vmatpush2.msra.mxu0 0.0
    %912 = vmatprep.subr.mxu0 0.0
    %913 = vmatpush2.msra.mxu0 0.0
    %914 = vmatprep.mubr.f32.mxu0 0.0
    %915 = vmatmul.mubr.f32.gmra.mxu0 %v768
    %v916 = vpop.f32.mrf.mxu0
    %v917 = vadd.f32 0.0, %v916
    %v918 = vpop.f32.mrf.mxu0
    %919 = vmatprep.mubr.f32.mxu0 0.0
    %920 = vmatmul.mubr.f32.gmra.mxu0 %v771
    %v921 = vpop.f32.mrf.mxu0
    %v922 = vadd.f32 0.0, %v921
    %v923 = vpop.f32.mrf.mxu0
    %924 = vdwg.mxu0
    %v925 = vadd.f32 %v746, %v840
    %v926 = vadd.f32 %v747, %v842
    %v927 = vadd.f32 %v748, %v917
    %v928 = vadd.f32 %v749, %v846
    %v929 = vadd.f32 %v750, %v848
    %v930 = vadd.f32 %v751, %v922
    %s931 = scalar_lea.vmem %s1, 80
    %v932 = vld [vmem:[%s931] sm:$0xff]
    %v933 = vld [vmem:[%s931 + $0x8] sm:$0xff]
    %934 = vrot.lane.b32.xlu0 %v39, 91
    %v935 = vpop.permute.xlu0 %934
    %936 = vrot.lane.b32.xlu0 %v40, 91
    %v937 = vpop.permute.xlu0 %936
    %938 = vrot.lane.b32.xlu0 %v41, 91
    %v939 = vpop.permute.xlu0 %938
    %vm940 = vcmask 744448
    %v941 = vsel %vm940, %v935, %v937
    %v942 = vsel %vm940, %v937, %v939
    %v947 = vsel %vm65, %v932, 0
    %v950 = vsel %vm65, %v933, 0
    %952 = vmatprep.subr.mxu0 0.0
    %953 = vmatpush1.msra.mxu0 0.0
    %954 = vmatprep.subr.mxu0 0.0
    %955 = vmatpush1.msra.mxu0 0.0
    %956 = vmatprep.subr.mxu0 0.0
    %957 = vmatpush1.msra.mxu0 0.0
    %958 = vmatprep.subr.mxu0 0.0
    %959 = vmatpush1.msra.mxu0 0.0
    %960 = vmatprep.subr.mxu0 0.0
    %961 = vmatpush1.msra.mxu0 0.0
    %962 = vmatprep.subr.mxu0 0.0
    %963 = vmatpush1.msra.mxu0 0.0
    %964 = vmatprep.subr.mxu0 0.0
    %965 = vmatpush1.msra.mxu0 0.0
    %966 = vmatprep.subr.mxu0 0.0
    %967 = vmatpush1.msra.mxu0 0.0
    %968 = vmatprep.subr.mxu0 0.0
    %969 = vmatpush1.msra.mxu0 0.0
    %970 = vmatprep.subr.mxu0 0.0
    %971 = vmatpush1.msra.mxu0 0.0
    %972 = vmatprep.subr.mxu0 0.0
    %973 = vmatpush1.msra.mxu0 0.0
    %974 = vmatprep.subr.mxu0 0.0
    %975 = vmatpush1.msra.mxu0 0.0
    %976 = vmatprep.subr.mxu0 0.0
    %977 = vmatpush1.msra.mxu0 0.0
    %978 = vmatprep.subr.mxu0 0.0
    %979 = vmatpush1.msra.mxu0 0.0
    %980 = vmatprep.subr.mxu0 0.0
    %981 = vmatpush1.msra.mxu0 0.0
    %982 = vmatprep.subr.mxu0 %v942
    %983 = vmatpush1.msra.mxu0 %v941
    %984 = vmatprep.subr.mxu0 0.0
    %985 = vmatpush2.msra.mxu0 0.0
    %986 = vmatprep.subr.mxu0 0.0
    %987 = vmatpush2.msra.mxu0 0.0
    %988 = vmatprep.subr.mxu0 0.0
    %989 = vmatpush2.msra.mxu0 0.0
    %990 = vmatprep.subr.mxu0 0.0
    %991 = vmatpush2.msra.mxu0 0.0
    %992 = vmatprep.subr.mxu0 0.0
    %993 = vmatpush2.msra.mxu0 0.0
    %994 = vmatprep.subr.mxu0 0.0
    %995 = vmatpush2.msra.mxu0 0.0
    %996 = vmatprep.subr.mxu0 0.0
    %997 = vmatpush2.msra.mxu0 0.0
    %998 = vmatprep.subr.mxu0 0.0
    %999 = vmatpush2.msra.mxu0 0.0
    %1000 = vmatprep.subr.mxu0 0.0
    %1001 = vmatpush2.msra.mxu0 0.0
    %1002 = vmatprep.subr.mxu0 0.0
    %1003 = vmatpush2.msra.mxu0 0.0
    %1004 = vmatprep.subr.mxu0 0.0
    %1005 = vmatpush2.msra.mxu0 0.0
    %1006 = vmatprep.subr.mxu0 0.0
    %1007 = vmatpush2.msra.mxu0 0.0
    %1008 = vmatprep.subr.mxu0 0.0
    %1009 = vmatpush2.msra.mxu0 0.0
    %1010 = vmatprep.subr.mxu0 0.0
    %1011 = vmatpush2.msra.mxu0 0.0
    %1012 = vmatprep.subr.mxu0 0.0
    %1013 = vmatpush2.msra.mxu0 0.0
    %1014 = vmatprep.subr.mxu0 0.0
    %1015 = vmatpush2.msra.mxu0 0.0
    %1016 = vmatprep.mubr.f32.mxu0 0.0
    %1017 = vmatmul.mubr.f32.gmra.mxu0 %v947
    %v1018 = vpop.f32.mrf.mxu0
    %v1019 = vadd.f32 0.0, %v1018
    %v1020 = vpop.f32.mrf.mxu0
    %v1021 = vadd.f32 0.0, %v1020
    %1022 = vmatprep.mubr.f32.mxu0 0.0
    %1023 = vmatmul.mubr.f32.gmra.mxu0 %v950
    %v1024 = vpop.f32.mrf.mxu0
    %v1025 = vadd.f32 0.0, %v1024
    %v1026 = vpop.f32.mrf.mxu0
    %v1027 = vadd.f32 0.0, %v1026
    %1028 = vdwg.mxu0
    %1029 = vmatprep.subr.mxu0 0.0
    %1030 = vmatpush1.msra.mxu0 0.0
    %1031 = vmatprep.subr.mxu0 0.0
    %1032 = vmatpush1.msra.mxu0 0.0
    %1033 = vmatprep.subr.mxu0 0.0
    %1034 = vmatpush1.msra.mxu0 0.0
    %1035 = vmatprep.subr.mxu0 0.0
    %1036 = vmatpush1.msra.mxu0 0.0
    %1037 = vmatprep.subr.mxu0 0.0
    %1038 = vmatpush1.msra.mxu0 0.0
    %1039 = vmatprep.subr.mxu0 0.0
    %1040 = vmatpush1.msra.mxu0 0.0
    %1041 = vmatprep.subr.mxu0 0.0
    %1042 = vmatpush1.msra.mxu0 0.0
    %1043 = vmatprep.subr.mxu0 0.0
    %1044 = vmatpush1.msra.mxu0 0.0
    %1045 = vmatprep.subr.mxu0 0.0
    %1046 = vmatpush1.msra.mxu0 0.0
    %1047 = vmatprep.subr.mxu0 0.0
    %1048 = vmatpush1.msra.mxu0 0.0
    %1049 = vmatprep.subr.mxu0 0.0
    %1050 = vmatpush1.msra.mxu0 0.0
    %1051 = vmatprep.subr.mxu0 0.0
    %1052 = vmatpush1.msra.mxu0 0.0
    %1053 = vmatprep.subr.mxu0 0.0
    %1054 = vmatpush1.msra.mxu0 0.0
    %1055 = vmatprep.subr.mxu0 0.0
    %1056 = vmatpush1.msra.mxu0 0.0
    %1057 = vmatprep.subr.mxu0 0.0
    %1058 = vmatpush1.msra.mxu0 0.0
    %1059 = vmatprep.subr.mxu0 0.0
    %1060 = vmatpush1.msra.mxu0 %v939
    %1061 = vmatprep.subr.mxu0 0.0
    %1062 = vmatpush2.msra.mxu0 0.0
    %1063 = vmatprep.subr.mxu0 0.0
    %1064 = vmatpush2.msra.mxu0 0.0
    %1065 = vmatprep.subr.mxu0 0.0
    %1066 = vmatpush2.msra.mxu0 0.0
    %1067 = vmatprep.subr.mxu0 0.0
    %1068 = vmatpush2.msra.mxu0 0.0
    %1069 = vmatprep.subr.mxu0 0.0
    %1070 = vmatpush2.msra.mxu0 0.0
    %1071 = vmatprep.subr.mxu0 0.0
    %1072 = vmatpush2.msra.mxu0 0.0
    %1073 = vmatprep.subr.mxu0 0.0
    %1074 = vmatpush2.msra.mxu0 0.0
    %1075 = vmatprep.subr.mxu0 0.0
    %1076 = vmatpush2.msra.mxu0 0.0
    %1077 = vmatprep.subr.mxu0 0.0
    %1078 = vmatpush2.msra.mxu0 0.0
    %1079 = vmatprep.subr.mxu0 0.0
    %1080 = vmatpush2.msra.mxu0 0.0
    %1081 = vmatprep.subr.mxu0 0.0
    %1082 = vmatpush2.msra.mxu0 0.0
    %1083 = vmatprep.subr.mxu0 0.0
    %1084 = vmatpush2.msra.mxu0 0.0
    %1085 = vmatprep.subr.mxu0 0.0
    %1086 = vmatpush2.msra.mxu0 0.0
    %1087 = vmatprep.subr.mxu0 0.0
    %1088 = vmatpush2.msra.mxu0 0.0
    %1089 = vmatprep.subr.mxu0 0.0
    %1090 = vmatpush2.msra.mxu0 0.0
    %1091 = vmatprep.subr.mxu0 0.0
    %1092 = vmatpush2.msra.mxu0 0.0
    %1093 = vmatprep.mubr.f32.mxu0 0.0
    %1094 = vmatmul.mubr.f32.gmra.mxu0 %v947
    %v1095 = vpop.f32.mrf.mxu0
    %v1096 = vadd.f32 0.0, %v1095
    %v1097 = vpop.f32.mrf.mxu0
    %1098 = vmatprep.mubr.f32.mxu0 0.0
    %1099 = vmatmul.mubr.f32.gmra.mxu0 %v950
    %v1100 = vpop.f32.mrf.mxu0
    %v1101 = vadd.f32 0.0, %v1100
    %v1102 = vpop.f32.mrf.mxu0
    %1103 = vdwg.mxu0
    %v1104 = vadd.f32 %v925, %v1019
    %v1105 = vadd.f32 %v926, %v1021
    %v1106 = vadd.f32 %v927, %v1096
    %v1107 = vadd.f32 %v928, %v1025
    %v1108 = vadd.f32 %v929, %v1027
    %v1109 = vadd.f32 %v930, %v1101
    %s1110 = scalar_lea.vmem %s1, 96
    %v1111 = vld [vmem:[%s1110] sm:$0xff]
    %v1112 = vld [vmem:[%s1110 + $0x8] sm:$0xff]
    %1113 = vrot.lane.b32.xlu0 %v39, 75
    %v1114 = vpop.permute.xlu0 %1113
    %1115 = vrot.lane.b32.xlu0 %v40, 75
    %v1116 = vpop.permute.xlu0 %1115
    %1117 = vrot.lane.b32.xlu0 %v41, 75
    %v1118 = vpop.permute.xlu0 %1117
    %vm1119 = vcmask 613376
    %v1120 = vsel %vm1119, %v1114, %v1116
    %v1121 = vsel %vm1119, %v1116, %v1118
    %v1126 = vsel %vm65, %v1111, 0
    %v1129 = vsel %vm65, %v1112, 0
    %1131 = vmatprep.subr.mxu0 0.0
    %1132 = vmatpush1.msra.mxu0 0.0
    %1133 = vmatprep.subr.mxu0 0.0
    %1134 = vmatpush1.msra.mxu0 0.0
    %1135 = vmatprep.subr.mxu0 0.0
    %1136 = vmatpush1.msra.mxu0 0.0
    %1137 = vmatprep.subr.mxu0 0.0
    %1138 = vmatpush1.msra.mxu0 0.0
    %1139 = vmatprep.subr.mxu0 0.0
    %1140 = vmatpush1.msra.mxu0 0.0
    %1141 = vmatprep.subr.mxu0 0.0
    %1142 = vmatpush1.msra.mxu0 0.0
    %1143 = vmatprep.subr.mxu0 0.0
    %1144 = vmatpush1.msra.mxu0 0.0
    %1145 = vmatprep.subr.mxu0 0.0
    %1146 = vmatpush1.msra.mxu0 0.0
    %1147 = vmatprep.subr.mxu0 0.0
    %1148 = vmatpush1.msra.mxu0 0.0
    %1149 = vmatprep.subr.mxu0 0.0
    %1150 = vmatpush1.msra.mxu0 0.0
    %1151 = vmatprep.subr.mxu0 0.0
    %1152 = vmatpush1.msra.mxu0 0.0
    %1153 = vmatprep.subr.mxu0 0.0
    %1154 = vmatpush1.msra.mxu0 0.0
    %1155 = vmatprep.subr.mxu0 0.0
    %1156 = vmatpush1.msra.mxu0 0.0
    %1157 = vmatprep.subr.mxu0 0.0
    %1158 = vmatpush1.msra.mxu0 0.0
    %1159 = vmatprep.subr.mxu0 0.0
    %1160 = vmatpush1.msra.mxu0 0.0
    %1161 = vmatprep.subr.mxu0 %v1121
    %1162 = vmatpush1.msra.mxu0 %v1120
    %1163 = vmatprep.subr.mxu0 0.0
    %1164 = vmatpush2.msra.mxu0 0.0
    %1165 = vmatprep.subr.mxu0 0.0
    %1166 = vmatpush2.msra.mxu0 0.0
    %1167 = vmatprep.subr.mxu0 0.0
    %1168 = vmatpush2.msra.mxu0 0.0
    %1169 = vmatprep.subr.mxu0 0.0
    %1170 = vmatpush2.msra.mxu0 0.0
    %1171 = vmatprep.subr.mxu0 0.0
    %1172 = vmatpush2.msra.mxu0 0.0
    %1173 = vmatprep.subr.mxu0 0.0
    %1174 = vmatpush2.msra.mxu0 0.0
    %1175 = vmatprep.subr.mxu0 0.0
    %1176 = vmatpush2.msra.mxu0 0.0
    %1177 = vmatprep.subr.mxu0 0.0
    %1178 = vmatpush2.msra.mxu0 0.0
    %1179 = vmatprep.subr.mxu0 0.0
    %1180 = vmatpush2.msra.mxu0 0.0
    %1181 = vmatprep.subr.mxu0 0.0
    %1182 = vmatpush2.msra.mxu0 0.0
    %1183 = vmatprep.subr.mxu0 0.0
    %1184 = vmatpush2.msra.mxu0 0.0
    %1185 = vmatprep.subr.mxu0 0.0
    %1186 = vmatpush2.msra.mxu0 0.0
    %1187 = vmatprep.subr.mxu0 0.0
    %1188 = vmatpush2.msra.mxu0 0.0
    %1189 = vmatprep.subr.mxu0 0.0
    %1190 = vmatpush2.msra.mxu0 0.0
    %1191 = vmatprep.subr.mxu0 0.0
    %1192 = vmatpush2.msra.mxu0 0.0
    %1193 = vmatprep.subr.mxu0 0.0
    %1194 = vmatpush2.msra.mxu0 0.0
    %1195 = vmatprep.mubr.f32.mxu0 0.0
    %1196 = vmatmul.mubr.f32.gmra.mxu0 %v1126
    %v1197 = vpop.f32.mrf.mxu0
    %v1198 = vadd.f32 0.0, %v1197
    %v1199 = vpop.f32.mrf.mxu0
    %v1200 = vadd.f32 0.0, %v1199
    %1201 = vmatprep.mubr.f32.mxu0 0.0
    %1202 = vmatmul.mubr.f32.gmra.mxu0 %v1129
    %v1203 = vpop.f32.mrf.mxu0
    %v1204 = vadd.f32 0.0, %v1203
    %v1205 = vpop.f32.mrf.mxu0
    %v1206 = vadd.f32 0.0, %v1205
    %1207 = vdwg.mxu0
    %1208 = vmatprep.subr.mxu0 0.0
    %1209 = vmatpush1.msra.mxu0 0.0
    %1210 = vmatprep.subr.mxu0 0.0
    %1211 = vmatpush1.msra.mxu0 0.0
    %1212 = vmatprep.subr.mxu0 0.0
    %1213 = vmatpush1.msra.mxu0 0.0
    %1214 = vmatprep.subr.mxu0 0.0
    %1215 = vmatpush1.msra.mxu0 0.0
    %1216 = vmatprep.subr.mxu0 0.0
    %1217 = vmatpush1.msra.mxu0 0.0
    %1218 = vmatprep.subr.mxu0 0.0
    %1219 = vmatpush1.msra.mxu0 0.0
    %1220 = vmatprep.subr.mxu0 0.0
    %1221 = vmatpush1.msra.mxu0 0.0
    %1222 = vmatprep.subr.mxu0 0.0
    %1223 = vmatpush1.msra.mxu0 0.0
    %1224 = vmatprep.subr.mxu0 0.0
    %1225 = vmatpush1.msra.mxu0 0.0
    %1226 = vmatprep.subr.mxu0 0.0
    %1227 = vmatpush1.msra.mxu0 0.0
    %1228 = vmatprep.subr.mxu0 0.0
    %1229 = vmatpush1.msra.mxu0 0.0
    %1230 = vmatprep.subr.mxu0 0.0
    %1231 = vmatpush1.msra.mxu0 0.0
    %1232 = vmatprep.subr.mxu0 0.0
    %1233 = vmatpush1.msra.mxu0 0.0
    %1234 = vmatprep.subr.mxu0 0.0
    %1235 = vmatpush1.msra.mxu0 0.0
    %1236 = vmatprep.subr.mxu0 0.0
    %1237 = vmatpush1.msra.mxu0 0.0
    %1238 = vmatprep.subr.mxu0 0.0
    %1239 = vmatpush1.msra.mxu0 %v1118
    %1240 = vmatprep.subr.mxu0 0.0
    %1241 = vmatpush2.msra.mxu0 0.0
    %1242 = vmatprep.subr.mxu0 0.0
    %1243 = vmatpush2.msra.mxu0 0.0
    %1244 = vmatprep.subr.mxu0 0.0
    %1245 = vmatpush2.msra.mxu0 0.0
    %1246 = vmatprep.subr.mxu0 0.0
    %1247 = vmatpush2.msra.mxu0 0.0
    %1248 = vmatprep.subr.mxu0 0.0
    %1249 = vmatpush2.msra.mxu0 0.0
    %1250 = vmatprep.subr.mxu0 0.0
    %1251 = vmatpush2.msra.mxu0 0.0
    %1252 = vmatprep.subr.mxu0 0.0
    %1253 = vmatpush2.msra.mxu0 0.0
    %1254 = vmatprep.subr.mxu0 0.0
    %1255 = vmatpush2.msra.mxu0 0.0
    %1256 = vmatprep.subr.mxu0 0.0
    %1257 = vmatpush2.msra.mxu0 0.0
    %1258 = vmatprep.subr.mxu0 0.0
    %1259 = vmatpush2.msra.mxu0 0.0
    %1260 = vmatprep.subr.mxu0 0.0
    %1261 = vmatpush2.msra.mxu0 0.0
    %1262 = vmatprep.subr.mxu0 0.0
    %1263 = vmatpush2.msra.mxu0 0.0
    %1264 = vmatprep.subr.mxu0 0.0
    %1265 = vmatpush2.msra.mxu0 0.0
    %1266 = vmatprep.subr.mxu0 0.0
    %1267 = vmatpush2.msra.mxu0 0.0
    %1268 = vmatprep.subr.mxu0 0.0
    %1269 = vmatpush2.msra.mxu0 0.0
    %1270 = vmatprep.subr.mxu0 0.0
    %1271 = vmatpush2.msra.mxu0 0.0
    %1272 = vmatprep.mubr.f32.mxu0 0.0
    %1273 = vmatmul.mubr.f32.gmra.mxu0 %v1126
    %v1274 = vpop.f32.mrf.mxu0
    %v1275 = vadd.f32 0.0, %v1274
    %v1276 = vpop.f32.mrf.mxu0
    %1277 = vmatprep.mubr.f32.mxu0 0.0
    %1278 = vmatmul.mubr.f32.gmra.mxu0 %v1129
    %v1279 = vpop.f32.mrf.mxu0
    %v1280 = vadd.f32 0.0, %v1279
    %v1281 = vpop.f32.mrf.mxu0
    %1282 = vdwg.mxu0
    %v1283 = vadd.f32 %v1104, %v1198
    %v1284 = vadd.f32 %v1105, %v1200
    %v1285 = vadd.f32 %v1106, %v1275
    %v1286 = vadd.f32 %v1107, %v1204
    %v1287 = vadd.f32 %v1108, %v1206
    %v1288 = vadd.f32 %v1109, %v1280
    %s1289 = scalar_lea.vmem %s1, 112
    %v1290 = vld [vmem:[%s1289] sm:$0xff]
    %v1291 = vld [vmem:[%s1289 + $0x8] sm:$0xff]
    %1292 = vrot.lane.b32.xlu0 %v39, 74
    %v1293 = vpop.permute.xlu0 %1292
    %1294 = vrot.lane.b32.xlu0 %v40, 74
    %v1295 = vpop.permute.xlu0 %1294
    %1296 = vrot.lane.b32.xlu0 %v41, 74
    %v1297 = vpop.permute.xlu0 %1296
    %vm1298 = vcmask 605184
    %v1299 = vsel %vm1298, %v1293, %v1295
    %v1300 = vsel %vm1298, %v1295, %v1297
    %v1305 = vsel %vm65, %v1290, 0
    %v1308 = vsel %vm65, %v1291, 0
    %1310 = vmatprep.subr.mxu0 0.0
    %1311 = vmatpush1.msra.mxu0 0.0
    %1312 = vmatprep.subr.mxu0 0.0
    %1313 = vmatpush1.msra.mxu0 0.0
    %1314 = vmatprep.subr.mxu0 0.0
    %1315 = vmatpush1.msra.mxu0 0.0
    %1316 = vmatprep.subr.mxu0 0.0
    %1317 = vmatpush1.msra.mxu0 0.0
    %1318 = vmatprep.subr.mxu0 0.0
    %1319 = vmatpush1.msra.mxu0 0.0
    %1320 = vmatprep.subr.mxu0 0.0
    %1321 = vmatpush1.msra.mxu0 0.0
    %1322 = vmatprep.subr.mxu0 0.0
    %1323 = vmatpush1.msra.mxu0 0.0
    %1324 = vmatprep.subr.mxu0 0.0
    %1325 = vmatpush1.msra.mxu0 0.0
    %1326 = vmatprep.subr.mxu0 0.0
    %1327 = vmatpush1.msra.mxu0 0.0
    %1328 = vmatprep.subr.mxu0 0.0
    %1329 = vmatpush1.msra.mxu0 0.0
    %1330 = vmatprep.subr.mxu0 0.0
    %1331 = vmatpush1.msra.mxu0 0.0
    %1332 = vmatprep.subr.mxu0 0.0
    %1333 = vmatpush1.msra.mxu0 0.0
    %1334 = vmatprep.subr.mxu0 0.0
    %1335 = vmatpush1.msra.mxu0 0.0
    %1336 = vmatprep.subr.mxu0 0.0
    %1337 = vmatpush1.msra.mxu0 0.0
    %1338 = vmatprep.subr.mxu0 0.0
    %1339 = vmatpush1.msra.mxu0 0.0
    %1340 = vmatprep.subr.mxu0 %v1300
    %1341 = vmatpush1.msra.mxu0 %v1299
    %1342 = vmatprep.subr.mxu0 0.0
    %1343 = vmatpush2.msra.mxu0 0.0
    %1344 = vmatprep.subr.mxu0 0.0
    %1345 = vmatpush2.msra.mxu0 0.0
    %1346 = vmatprep.subr.mxu0 0.0
    %1347 = vmatpush2.msra.mxu0 0.0
    %1348 = vmatprep.subr.mxu0 0.0
    %1349 = vmatpush2.msra.mxu0 0.0
    %1350 = vmatprep.subr.mxu0 0.0
    %1351 = vmatpush2.msra.mxu0 0.0
    %1352 = vmatprep.subr.mxu0 0.0
    %1353 = vmatpush2.msra.mxu0 0.0
    %1354 = vmatprep.subr.mxu0 0.0
    %1355 = vmatpush2.msra.mxu0 0.0
    %1356 = vmatprep.subr.mxu0 0.0
    %1357 = vmatpush2.msra.mxu0 0.0
    %1358 = vmatprep.subr.mxu0 0.0
    %1359 = vmatpush2.msra.mxu0 0.0
    %1360 = vmatprep.subr.mxu0 0.0
    %1361 = vmatpush2.msra.mxu0 0.0
    %1362 = vmatprep.subr.mxu0 0.0
    %1363 = vmatpush2.msra.mxu0 0.0
    %1364 = vmatprep.subr.mxu0 0.0
    %1365 = vmatpush2.msra.mxu0 0.0
    %1366 = vmatprep.subr.mxu0 0.0
    %1367 = vmatpush2.msra.mxu0 0.0
    %1368 = vmatprep.subr.mxu0 0.0
    %1369 = vmatpush2.msra.mxu0 0.0
    %1370 = vmatprep.subr.mxu0 0.0
    %1371 = vmatpush2.msra.mxu0 0.0
    %1372 = vmatprep.subr.mxu0 0.0
    %1373 = vmatpush2.msra.mxu0 0.0
    %1374 = vmatprep.mubr.f32.mxu0 0.0
    %1375 = vmatmul.mubr.f32.gmra.mxu0 %v1305
    %v1376 = vpop.f32.mrf.mxu0
    %v1377 = vadd.f32 0.0, %v1376
    %v1378 = vpop.f32.mrf.mxu0
    %v1379 = vadd.f32 0.0, %v1378
    %1380 = vmatprep.mubr.f32.mxu0 0.0
    %1381 = vmatmul.mubr.f32.gmra.mxu0 %v1308
    %v1382 = vpop.f32.mrf.mxu0
    %v1383 = vadd.f32 0.0, %v1382
    %v1384 = vpop.f32.mrf.mxu0
    %v1385 = vadd.f32 0.0, %v1384
    %1386 = vdwg.mxu0
    %1387 = vmatprep.subr.mxu0 0.0
    %1388 = vmatpush1.msra.mxu0 0.0
    %1389 = vmatprep.subr.mxu0 0.0
    %1390 = vmatpush1.msra.mxu0 0.0
    %1391 = vmatprep.subr.mxu0 0.0
    %1392 = vmatpush1.msra.mxu0 0.0
    %1393 = vmatprep.subr.mxu0 0.0
    %1394 = vmatpush1.msra.mxu0 0.0
    %1395 = vmatprep.subr.mxu0 0.0
    %1396 = vmatpush1.msra.mxu0 0.0
    %1397 = vmatprep.subr.mxu0 0.0
    %1398 = vmatpush1.msra.mxu0 0.0
    %1399 = vmatprep.subr.mxu0 0.0
    %1400 = vmatpush1.msra.mxu0 0.0
    %1401 = vmatprep.subr.mxu0 0.0
    %1402 = vmatpush1.msra.mxu0 0.0
    %1403 = vmatprep.subr.mxu0 0.0
    %1404 = vmatpush1.msra.mxu0 0.0
    %1405 = vmatprep.subr.mxu0 0.0
    %1406 = vmatpush1.msra.mxu0 0.0
    %1407 = vmatprep.subr.mxu0 0.0
    %1408 = vmatpush1.msra.mxu0 0.0
    %1409 = vmatprep.subr.mxu0 0.0
    %1410 = vmatpush1.msra.mxu0 0.0
    %1411 = vmatprep.subr.mxu0 0.0
    %1412 = vmatpush1.msra.mxu0 0.0
    %1413 = vmatprep.subr.mxu0 0.0
    %1414 = vmatpush1.msra.mxu0 0.0
    %1415 = vmatprep.subr.mxu0 0.0
    %1416 = vmatpush1.msra.mxu0 0.0
    %1417 = vmatprep.subr.mxu0 0.0
    %1418 = vmatpush1.msra.mxu0 %v1297
    %1419 = vmatprep.subr.mxu0 0.0
    %1420 = vmatpush2.msra.mxu0 0.0
    %1421 = vmatprep.subr.mxu0 0.0
    %1422 = vmatpush2.msra.mxu0 0.0
    %1423 = vmatprep.subr.mxu0 0.0
    %1424 = vmatpush2.msra.mxu0 0.0
    %1425 = vmatprep.subr.mxu0 0.0
    %1426 = vmatpush2.msra.mxu0 0.0
    %1427 = vmatprep.subr.mxu0 0.0
    %1428 = vmatpush2.msra.mxu0 0.0
    %1429 = vmatprep.subr.mxu0 0.0
    %1430 = vmatpush2.msra.mxu0 0.0
    %1431 = vmatprep.subr.mxu0 0.0
    %1432 = vmatpush2.msra.mxu0 0.0
    %1433 = vmatprep.subr.mxu0 0.0
    %1434 = vmatpush2.msra.mxu0 0.0
    %1435 = vmatprep.subr.mxu0 0.0
    %1436 = vmatpush2.msra.mxu0 0.0
    %1437 = vmatprep.subr.mxu0 0.0
    %1438 = vmatpush2.msra.mxu0 0.0
    %1439 = vmatprep.subr.mxu0 0.0
    %1440 = vmatpush2.msra.mxu0 0.0
    %1441 = vmatprep.subr.mxu0 0.0
    %1442 = vmatpush2.msra.mxu0 0.0
    %1443 = vmatprep.subr.mxu0 0.0
    %1444 = vmatpush2.msra.mxu0 0.0
    %1445 = vmatprep.subr.mxu0 0.0
    %1446 = vmatpush2.msra.mxu0 0.0
    %1447 = vmatprep.subr.mxu0 0.0
    %1448 = vmatpush2.msra.mxu0 0.0
    %1449 = vmatprep.subr.mxu0 0.0
    %1450 = vmatpush2.msra.mxu0 0.0
    %1451 = vmatprep.mubr.f32.mxu0 0.0
    %1452 = vmatmul.mubr.f32.gmra.mxu0 %v1305
    %v1453 = vpop.f32.mrf.mxu0
    %v1454 = vadd.f32 0.0, %v1453
    %v1455 = vpop.f32.mrf.mxu0
    %1456 = vmatprep.mubr.f32.mxu0 0.0
    %1457 = vmatmul.mubr.f32.gmra.mxu0 %v1308
    %v1458 = vpop.f32.mrf.mxu0
    %v1459 = vadd.f32 0.0, %v1458
    %v1460 = vpop.f32.mrf.mxu0
    %1461 = vdwg.mxu0
    %v1462 = vadd.f32 %v1283, %v1377
    %v1463 = vadd.f32 %v1284, %v1379
    %v1464 = vadd.f32 %v1285, %v1454
    %v1465 = vadd.f32 %v1286, %v1383
    %v1466 = vadd.f32 %v1287, %v1385
    %v1467 = vadd.f32 %v1288, %v1459
    %s1468 = scalar_lea.vmem %s1, 128
    %v1469 = vld [vmem:[%s1468] sm:$0xff]
    %v1470 = vld [vmem:[%s1468 + $0x8] sm:$0xff]
    %1471 = vrot.lane.b32.xlu0 %v39, 73
    %v1472 = vpop.permute.xlu0 %1471
    %1473 = vrot.lane.b32.xlu0 %v40, 73
    %v1474 = vpop.permute.xlu0 %1473
    %1475 = vrot.lane.b32.xlu0 %v41, 73
    %v1476 = vpop.permute.xlu0 %1475
    %vm1477 = vcmask 596992
    %v1478 = vsel %vm1477, %v1472, %v1474
    %v1479 = vsel %vm1477, %v1474, %v1476
    %v1484 = vsel %vm65, %v1469, 0
    %v1487 = vsel %vm65, %v1470, 0
    %1489 = vmatprep.subr.mxu0 0.0
    %1490 = vmatpush1.msra.mxu0 0.0
    %1491 = vmatprep.subr.mxu0 0.0
    %1492 = vmatpush1.msra.mxu0 0.0
    %1493 = vmatprep.subr.mxu0 0.0
    %1494 = vmatpush1.msra.mxu0 0.0
    %1495 = vmatprep.subr.mxu0 0.0
    %1496 = vmatpush1.msra.mxu0 0.0
    %1497 = vmatprep.subr.mxu0 0.0
    %1498 = vmatpush1.msra.mxu0 0.0
    %1499 = vmatprep.subr.mxu0 0.0
    %1500 = vmatpush1.msra.mxu0 0.0
    %1501 = vmatprep.subr.mxu0 0.0
    %1502 = vmatpush1.msra.mxu0 0.0
    %1503 = vmatprep.subr.mxu0 0.0
    %1504 = vmatpush1.msra.mxu0 0.0
    %1505 = vmatprep.subr.mxu0 0.0
    %1506 = vmatpush1.msra.mxu0 0.0
    %1507 = vmatprep.subr.mxu0 0.0
    %1508 = vmatpush1.msra.mxu0 0.0
    %1509 = vmatprep.subr.mxu0 0.0
    %1510 = vmatpush1.msra.mxu0 0.0
    %1511 = vmatprep.subr.mxu0 0.0
    %1512 = vmatpush1.msra.mxu0 0.0
    %1513 = vmatprep.subr.mxu0 0.0
    %1514 = vmatpush1.msra.mxu0 0.0
    %1515 = vmatprep.subr.mxu0 0.0
    %1516 = vmatpush1.msra.mxu0 0.0
    %1517 = vmatprep.subr.mxu0 0.0
    %1518 = vmatpush1.msra.mxu0 0.0
    %1519 = vmatprep.subr.mxu0 %v1479
    %1520 = vmatpush1.msra.mxu0 %v1478
    %1521 = vmatprep.subr.mxu0 0.0
    %1522 = vmatpush2.msra.mxu0 0.0
    %1523 = vmatprep.subr.mxu0 0.0
    %1524 = vmatpush2.msra.mxu0 0.0
    %1525 = vmatprep.subr.mxu0 0.0
    %1526 = vmatpush2.msra.mxu0 0.0
    %1527 = vmatprep.subr.mxu0 0.0
    %1528 = vmatpush2.msra.mxu0 0.0
    %1529 = vmatprep.subr.mxu0 0.0
    %1530 = vmatpush2.msra.mxu0 0.0
    %1531 = vmatprep.subr.mxu0 0.0
    %1532 = vmatpush2.msra.mxu0 0.0
    %1533 = vmatprep.subr.mxu0 0.0
    %1534 = vmatpush2.msra.mxu0 0.0
    %1535 = vmatprep.subr.mxu0 0.0
    %1536 = vmatpush2.msra.mxu0 0.0
    %1537 = vmatprep.subr.mxu0 0.0
    %1538 = vmatpush2.msra.mxu0 0.0
    %1539 = vmatprep.subr.mxu0 0.0
    %1540 = vmatpush2.msra.mxu0 0.0
    %1541 = vmatprep.subr.mxu0 0.0
    %1542 = vmatpush2.msra.mxu0 0.0
    %1543 = vmatprep.subr.mxu0 0.0
    %1544 = vmatpush2.msra.mxu0 0.0
    %1545 = vmatprep.subr.mxu0 0.0
    %1546 = vmatpush2.msra.mxu0 0.0
    %1547 = vmatprep.subr.mxu0 0.0
    %1548 = vmatpush2.msra.mxu0 0.0
    %1549 = vmatprep.subr.mxu0 0.0
    %1550 = vmatpush2.msra.mxu0 0.0
    %1551 = vmatprep.subr.mxu0 0.0
    %1552 = vmatpush2.msra.mxu0 0.0
    %1553 = vmatprep.mubr.f32.mxu0 0.0
    %1554 = vmatmul.mubr.f32.gmra.mxu0 %v1484
    %v1555 = vpop.f32.mrf.mxu0
    %v1556 = vadd.f32 0.0, %v1555
    %v1557 = vpop.f32.mrf.mxu0
    %v1558 = vadd.f32 0.0, %v1557
    %1559 = vmatprep.mubr.f32.mxu0 0.0
    %1560 = vmatmul.mubr.f32.gmra.mxu0 %v1487
    %v1561 = vpop.f32.mrf.mxu0
    %v1562 = vadd.f32 0.0, %v1561
    %v1563 = vpop.f32.mrf.mxu0
    %v1564 = vadd.f32 0.0, %v1563
    %1565 = vdwg.mxu0
    %1566 = vmatprep.subr.mxu0 0.0
    %1567 = vmatpush1.msra.mxu0 0.0
    %1568 = vmatprep.subr.mxu0 0.0
    %1569 = vmatpush1.msra.mxu0 0.0
    %1570 = vmatprep.subr.mxu0 0.0
    %1571 = vmatpush1.msra.mxu0 0.0
    %1572 = vmatprep.subr.mxu0 0.0
    %1573 = vmatpush1.msra.mxu0 0.0
    %1574 = vmatprep.subr.mxu0 0.0
    %1575 = vmatpush1.msra.mxu0 0.0
    %1576 = vmatprep.subr.mxu0 0.0
    %1577 = vmatpush1.msra.mxu0 0.0
    %1578 = vmatprep.subr.mxu0 0.0
    %1579 = vmatpush1.msra.mxu0 0.0
    %1580 = vmatprep.subr.mxu0 0.0
    %1581 = vmatpush1.msra.mxu0 0.0
    %1582 = vmatprep.subr.mxu0 0.0
    %1583 = vmatpush1.msra.mxu0 0.0
    %1584 = vmatprep.subr.mxu0 0.0
    %1585 = vmatpush1.msra.mxu0 0.0
    %1586 = vmatprep.subr.mxu0 0.0
    %1587 = vmatpush1.msra.mxu0 0.0
    %1588 = vmatprep.subr.mxu0 0.0
    %1589 = vmatpush1.msra.mxu0 0.0
    %1590 = vmatprep.subr.mxu0 0.0
    %1591 = vmatpush1.msra.mxu0 0.0
    %1592 = vmatprep.subr.mxu0 0.0
    %1593 = vmatpush1.msra.mxu0 0.0
    %1594 = vmatprep.subr.mxu0 0.0
    %1595 = vmatpush1.msra.mxu0 0.0
    %1596 = vmatprep.subr.mxu0 0.0
    %1597 = vmatpush1.msra.mxu0 %v1476
    %1598 = vmatprep.subr.mxu0 0.0
    %1599 = vmatpush2.msra.mxu0 0.0
    %1600 = vmatprep.subr.mxu0 0.0
    %1601 = vmatpush2.msra.mxu0 0.0
    %1602 = vmatprep.subr.mxu0 0.0
    %1603 = vmatpush2.msra.mxu0 0.0
    %1604 = vmatprep.subr.mxu0 0.0
    %1605 = vmatpush2.msra.mxu0 0.0
    %1606 = vmatprep.subr.mxu0 0.0
    %1607 = vmatpush2.msra.mxu0 0.0
    %1608 = vmatprep.subr.mxu0 0.0
    %1609 = vmatpush2.msra.mxu0 0.0
    %1610 = vmatprep.subr.mxu0 0.0
    %1611 = vmatpush2.msra.mxu0 0.0
    %1612 = vmatprep.subr.mxu0 0.0
    %1613 = vmatpush2.msra.mxu0 0.0
    %1614 = vmatprep.subr.mxu0 0.0
    %1615 = vmatpush2.msra.mxu0 0.0
    %1616 = vmatprep.subr.mxu0 0.0
    %1617 = vmatpush2.msra.mxu0 0.0
    %1618 = vmatprep.subr.mxu0 0.0
    %1619 = vmatpush2.msra.mxu0 0.0
    %1620 = vmatprep.subr.mxu0 0.0
    %1621 = vmatpush2.msra.mxu0 0.0
    %1622 = vmatprep.subr.mxu0 0.0
    %1623 = vmatpush2.msra.mxu0 0.0
    %1624 = vmatprep.subr.mxu0 0.0
    %1625 = vmatpush2.msra.mxu0 0.0
    %1626 = vmatprep.subr.mxu0 0.0
    %1627 = vmatpush2.msra.mxu0 0.0
    %1628 = vmatprep.subr.mxu0 0.0
    %1629 = vmatpush2.msra.mxu0 0.0
    %1630 = vmatprep.mubr.f32.mxu0 0.0
    %1631 = vmatmul.mubr.f32.gmra.mxu0 %v1484
    %v1632 = vpop.f32.mrf.mxu0
    %v1633 = vadd.f32 0.0, %v1632
    %v1634 = vpop.f32.mrf.mxu0
    %1635 = vmatprep.mubr.f32.mxu0 0.0
    %1636 = vmatmul.mubr.f32.gmra.mxu0 %v1487
    %v1637 = vpop.f32.mrf.mxu0
    %v1638 = vadd.f32 0.0, %v1637
    %v1639 = vpop.f32.mrf.mxu0
    %1640 = vdwg.mxu0
    %v1641 = vadd.f32 %v1462, %v1556
    %v1642 = vadd.f32 %v1463, %v1558
    %v1643 = vadd.f32 %v1464, %v1633
    %v1644 = vadd.f32 %v1465, %v1562
    %v1645 = vadd.f32 %v1466, %v1564
    %v1646 = vadd.f32 %v1467, %v1638
    %v1647 = vld [vmem:[%s2] sm:$0xff]
    %v1648 = vld [vmem:[%s2 + $0x8] sm:$0xff]
    %1650 = vset.pattern.permute.xlu0 0
    %1651 = vperm.xlu0 %1650, %v1647
    %v1652 = vpop.permute.xlu0 %1651
    %1655 = vset.pattern.permute.xlu0 0
    %1656 = vperm.xlu0 %1655, %v1648
    %v1657 = vpop.permute.xlu0 %1656
    %v1659 = vadd.f32 %v1641, %v1652
    %v1660 = vadd.f32 %v1642, %v1652
    %v1661 = vadd.f32 %v1643, %v1652
    %v1662 = vadd.f32 %v1644, %v1657
    %v1663 = vadd.f32 %v1645, %v1657
    %v1664 = vadd.f32 %v1646, %v1657
    %v1665 = vstv %s42
    %v1666 = vmul.f32 %v1659, %v1665
    %v1667 = vmul.f32 %v1660, %v1665
    %v1668 = vmul.f32 %v1661, %v1665
    %v1669 = vmul.f32 %v1662, %v1665
    %v1670 = vmul.f32 %v1663, %v1665
    %v1671 = vmul.f32 %v1664, %v1665
    %v1672 = vmax.f32 %v1666, 0.0
    %v1673 = vmax.f32 %v1667, 0.0
    %v1674 = vmax.f32 %v1668, 0.0
    %v1675 = vmax.f32 %v1669, 0.0
    %v1676 = vmax.f32 %v1670, 0.0
    %v1677 = vmax.f32 %v1671, 0.0
    %v1678 = vstv %s43
    %v1679 = vmul.f32 %v1672, %v1678
    %v1680 = vmul.f32 %v1673, %v1678
    %v1681 = vmul.f32 %v1674, %v1678
    %v1682 = vmul.f32 %v1675, %v1678
    %v1683 = vmul.f32 %v1676, %v1678
    %v1684 = vmul.f32 %v1677, %v1678
    %v1685 = vld [vmem:[%s5] sm:$0x7]
    %v1687 = vlaneseq
    %v1688 = vshrl.u32 %v1687, 7
    %v1689 = vsub.s32 0, %v1688
    %v1690 = vrot.slane %v1685, %v1689
    %v1691 = vlaneseq
    %v1692 = vshrl.u32 %v1691, 7
    %v1693 = vsub.s32 1, %v1692
    %v1694 = vrot.slane %v1685, %v1693
    %v1695 = vlaneseq
    %v1696 = vshrl.u32 %v1695, 7
    %v1697 = vsub.s32 2, %v1696
    %v1698 = vrot.slane %v1685, %v1697
    %v1702 = vmul.f32 %v1679, %v1690
    %v1703 = vmul.f32 %v1680, %v1694
    %v1704 = vmul.f32 %v1681, %v1698
    %v1705 = vmul.f32 %v1682, %v1690
    %v1706 = vmul.f32 %v1683, %v1694
    %v1707 = vmul.f32 %v1684, %v1698
    %v1708 = vld [vmem:[%s3] sm:$0xff]
    %s1709 = scalar_lea.vmem %s3, 8
    %v1710 = vld [vmem:[%s1709] sm:$0xff]
    %1717 = vrot.lane.b32.xlu0 %v1702, 127
    %v1718 = vpop.permute.xlu0 %1717
    %1719 = vrot.lane.b32.xlu0 %v1703, 127
    %v1720 = vpop.permute.xlu0 %1719
    %1721 = vrot.lane.b32.xlu0 %v1704, 127
    %v1722 = vpop.permute.xlu0 %1721
    %1723 = vrot.lane.b32.xlu0 %v1705, 127
    %v1724 = vpop.permute.xlu0 %1723
    %1725 = vrot.lane.b32.xlu0 %v1706, 127
    %v1726 = vpop.permute.xlu0 %1725
    %1727 = vrot.lane.b32.xlu0 %v1707, 127
    %v1728 = vpop.permute.xlu0 %1727
    %vm1729 = vcmask 1039360
    %v1730 = vsel %vm1729, %v1718, %v1720
    %v1731 = vsel %vm1729, %v1720, %v1722
    %v1732 = vsel %vm1729, %v1724, %v1726
    %v1733 = vsel %vm1729, %v1726, %v1728
    %vm1740 = vcmask 130048
    %v1742 = vsel %vm1740, %v1710, 0
    %1744 = vmatprep.subr.mxu0 0.0
    %1745 = vmatpush1.msra.mxu0 0.0
    %1746 = vmatprep.subr.mxu0 0.0
    %1747 = vmatpush1.msra.mxu0 0.0
    %1748 = vmatprep.subr.mxu0 0.0
    %1749 = vmatpush1.msra.mxu0 0.0
    %1750 = vmatprep.subr.mxu0 0.0
    %1751 = vmatpush1.msra.mxu0 0.0
    %1752 = vmatprep.subr.mxu0 0.0
    %1753 = vmatpush1.msra.mxu0 0.0
    %1754 = vmatprep.subr.mxu0 0.0
    %1755 = vmatpush1.msra.mxu0 0.0
    %1756 = vmatprep.subr.mxu0 0.0
    %1757 = vmatpush1.msra.mxu0 0.0
    %1758 = vmatprep.subr.mxu0 0.0
    %1759 = vmatpush1.msra.mxu0 0.0
    %1760 = vmatprep.subr.mxu0 0.0
    %1761 = vmatpush1.msra.mxu0 0.0
    %1762 = vmatprep.subr.mxu0 0.0
    %1763 = vmatpush1.msra.mxu0 0.0
    %1764 = vmatprep.subr.mxu0 0.0
    %1765 = vmatpush1.msra.mxu0 0.0
    %1766 = vmatprep.subr.mxu0 0.0
    %1767 = vmatpush1.msra.mxu0 0.0
    %1768 = vmatprep.subr.mxu0 0.0
    %1769 = vmatpush1.msra.mxu0 0.0
    %1770 = vmatprep.subr.mxu0 0.0
    %1771 = vmatpush1.msra.mxu0 0.0
    %1772 = vmatprep.subr.mxu0 %v1733
    %1773 = vmatpush1.msra.mxu0 %v1732
    %1774 = vmatprep.subr.mxu0 %v1731
    %1775 = vmatpush1.msra.mxu0 %v1730
    %1776 = vmatprep.subr.mxu0 0.0
    %1777 = vmatpush2.msra.mxu0 0.0
    %1778 = vmatprep.subr.mxu0 0.0
    %1779 = vmatpush2.msra.mxu0 0.0
    %1780 = vmatprep.subr.mxu0 0.0
    %1781 = vmatpush2.msra.mxu0 0.0
    %1782 = vmatprep.subr.mxu0 0.0
    %1783 = vmatpush2.msra.mxu0 0.0
    %1784 = vmatprep.subr.mxu0 0.0
    %1785 = vmatpush2.msra.mxu0 0.0
    %1786 = vmatprep.subr.mxu0 0.0
    %1787 = vmatpush2.msra.mxu0 0.0
    %1788 = vmatprep.subr.mxu0 0.0
    %1789 = vmatpush2.msra.mxu0 0.0
    %1790 = vmatprep.subr.mxu0 0.0
    %1791 = vmatpush2.msra.mxu0 0.0
    %1792 = vmatprep.subr.mxu0 0.0
    %1793 = vmatpush2.msra.mxu0 0.0
    %1794 = vmatprep.subr.mxu0 0.0
    %1795 = vmatpush2.msra.mxu0 0.0
    %1796 = vmatprep.subr.mxu0 0.0
    %1797 = vmatpush2.msra.mxu0 0.0
    %1798 = vmatprep.subr.mxu0 0.0
    %1799 = vmatpush2.msra.mxu0 0.0
    %1800 = vmatprep.subr.mxu0 0.0
    %1801 = vmatpush2.msra.mxu0 0.0
    %1802 = vmatprep.subr.mxu0 0.0
    %1803 = vmatpush2.msra.mxu0 0.0
    %1804 = vmatprep.subr.mxu0 0.0
    %1805 = vmatpush2.msra.mxu0 0.0
    %1806 = vmatprep.subr.mxu0 0.0
    %1807 = vmatpush2.msra.mxu0 0.0
    %1808 = vmatprep.mubr.f32.mxu0 0.0
    %1809 = vmatmul.mubr.f32.gmra.mxu0 %v1742
    %v1810 = vpop.f32.mrf.mxu0
    %v1811 = vadd.f32 0.0, %v1810
    %v1812 = vpop.f32.mrf.mxu0
    %v1813 = vadd.f32 0.0, %v1812
    %1814 = vdwg.mxu0
    %1815 = vmatprep.subr.mxu0 0.0
    %1816 = vmatpush1.msra.mxu0 0.0
    %1817 = vmatprep.subr.mxu0 0.0
    %1818 = vmatpush1.msra.mxu0 0.0
    %1819 = vmatprep.subr.mxu0 0.0
    %1820 = vmatpush1.msra.mxu0 0.0
    %1821 = vmatprep.subr.mxu0 0.0
    %1822 = vmatpush1.msra.mxu0 0.0
    %1823 = vmatprep.subr.mxu0 0.0
    %1824 = vmatpush1.msra.mxu0 0.0
    %1825 = vmatprep.subr.mxu0 0.0
    %1826 = vmatpush1.msra.mxu0 0.0
    %1827 = vmatprep.subr.mxu0 0.0
    %1828 = vmatpush1.msra.mxu0 0.0
    %1829 = vmatprep.subr.mxu0 0.0
    %1830 = vmatpush1.msra.mxu0 0.0
    %1831 = vmatprep.subr.mxu0 0.0
    %1832 = vmatpush1.msra.mxu0 0.0
    %1833 = vmatprep.subr.mxu0 0.0
    %1834 = vmatpush1.msra.mxu0 0.0
    %1835 = vmatprep.subr.mxu0 0.0
    %1836 = vmatpush1.msra.mxu0 0.0
    %1837 = vmatprep.subr.mxu0 0.0
    %1838 = vmatpush1.msra.mxu0 0.0
    %1839 = vmatprep.subr.mxu0 0.0
    %1840 = vmatpush1.msra.mxu0 0.0
    %1841 = vmatprep.subr.mxu0 0.0
    %1842 = vmatpush1.msra.mxu0 0.0
    %1843 = vmatprep.subr.mxu0 0.0
    %1844 = vmatpush1.msra.mxu0 %v1728
    %1845 = vmatprep.subr.mxu0 0.0
    %1846 = vmatpush1.msra.mxu0 %v1722
    %1847 = vmatprep.subr.mxu0 0.0
    %1848 = vmatpush2.msra.mxu0 0.0
    %1849 = vmatprep.subr.mxu0 0.0
    %1850 = vmatpush2.msra.mxu0 0.0
    %1851 = vmatprep.subr.mxu0 0.0
    %1852 = vmatpush2.msra.mxu0 0.0
    %1853 = vmatprep.subr.mxu0 0.0
    %1854 = vmatpush2.msra.mxu0 0.0
    %1855 = vmatprep.subr.mxu0 0.0
    %1856 = vmatpush2.msra.mxu0 0.0
    %1857 = vmatprep.subr.mxu0 0.0
    %1858 = vmatpush2.msra.mxu0 0.0
    %1859 = vmatprep.subr.mxu0 0.0
    %1860 = vmatpush2.msra.mxu0 0.0
    %1861 = vmatprep.subr.mxu0 0.0
    %1862 = vmatpush2.msra.mxu0 0.0
    %1863 = vmatprep.subr.mxu0 0.0
    %1864 = vmatpush2.msra.mxu0 0.0
    %1865 = vmatprep.subr.mxu0 0.0
    %1866 = vmatpush2.msra.mxu0 0.0
    %1867 = vmatprep.subr.mxu0 0.0
    %1868 = vmatpush2.msra.mxu0 0.0
    %1869 = vmatprep.subr.mxu0 0.0
    %1870 = vmatpush2.msra.mxu0 0.0
    %1871 = vmatprep.subr.mxu0 0.0
    %1872 = vmatpush2.msra.mxu0 0.0
    %1873 = vmatprep.subr.mxu0 0.0
    %1874 = vmatpush2.msra.mxu0 0.0
    %1875 = vmatprep.subr.mxu0 0.0
    %1876 = vmatpush2.msra.mxu0 0.0
    %1877 = vmatprep.subr.mxu0 0.0
    %1878 = vmatpush2.msra.mxu0 0.0
    %1879 = vmatprep.mubr.f32.mxu0 0.0
    %1880 = vmatmul.mubr.f32.gmra.mxu0 %v1742
    %v1881 = vpop.f32.mrf.mxu0
    %v1882 = vadd.f32 0.0, %v1881
    %v1883 = vpop.f32.mrf.mxu0
    %1884 = vdwg.mxu0
    %v1886 = vsel %vm1740, %v1708, 0
    %1888 = vmatprep.subr.mxu0 0.0
    %1889 = vmatpush1.msra.mxu0 0.0
    %1890 = vmatprep.subr.mxu0 0.0
    %1891 = vmatpush1.msra.mxu0 0.0
    %1892 = vmatprep.subr.mxu0 0.0
    %1893 = vmatpush1.msra.mxu0 0.0
    %1894 = vmatprep.subr.mxu0 0.0
    %1895 = vmatpush1.msra.mxu0 0.0
    %1896 = vmatprep.subr.mxu0 0.0
    %1897 = vmatpush1.msra.mxu0 0.0
    %1898 = vmatprep.subr.mxu0 0.0
    %1899 = vmatpush1.msra.mxu0 0.0
    %1900 = vmatprep.subr.mxu0 0.0
    %1901 = vmatpush1.msra.mxu0 0.0
    %1902 = vmatprep.subr.mxu0 0.0
    %1903 = vmatpush1.msra.mxu0 0.0
    %1904 = vmatprep.subr.mxu0 0.0
    %1905 = vmatpush1.msra.mxu0 0.0
    %1906 = vmatprep.subr.mxu0 0.0
    %1907 = vmatpush1.msra.mxu0 0.0
    %1908 = vmatprep.subr.mxu0 0.0
    %1909 = vmatpush1.msra.mxu0 0.0
    %1910 = vmatprep.subr.mxu0 0.0
    %1911 = vmatpush1.msra.mxu0 0.0
    %1912 = vmatprep.subr.mxu0 0.0
    %1913 = vmatpush1.msra.mxu0 0.0
    %1914 = vmatprep.subr.mxu0 0.0
    %1915 = vmatpush1.msra.mxu0 0.0
    %1916 = vmatprep.subr.mxu0 %v1706
    %1917 = vmatpush1.msra.mxu0 %v1705
    %1918 = vmatprep.subr.mxu0 %v1703
    %1919 = vmatpush1.msra.mxu0 %v1702
    %1920 = vmatprep.subr.mxu0 0.0
    %1921 = vmatpush2.msra.mxu0 0.0
    %1922 = vmatprep.subr.mxu0 0.0
    %1923 = vmatpush2.msra.mxu0 0.0
    %1924 = vmatprep.subr.mxu0 0.0
    %1925 = vmatpush2.msra.mxu0 0.0
    %1926 = vmatprep.subr.mxu0 0.0
    %1927 = vmatpush2.msra.mxu0 0.0
    %1928 = vmatprep.subr.mxu0 0.0
    %1929 = vmatpush2.msra.mxu0 0.0
    %1930 = vmatprep.subr.mxu0 0.0
    %1931 = vmatpush2.msra.mxu0 0.0
    %1932 = vmatprep.subr.mxu0 0.0
    %1933 = vmatpush2.msra.mxu0 0.0
    %1934 = vmatprep.subr.mxu0 0.0
    %1935 = vmatpush2.msra.mxu0 0.0
    %1936 = vmatprep.subr.mxu0 0.0
    %1937 = vmatpush2.msra.mxu0 0.0
    %1938 = vmatprep.subr.mxu0 0.0
    %1939 = vmatpush2.msra.mxu0 0.0
    %1940 = vmatprep.subr.mxu0 0.0
    %1941 = vmatpush2.msra.mxu0 0.0
    %1942 = vmatprep.subr.mxu0 0.0
    %1943 = vmatpush2.msra.mxu0 0.0
    %1944 = vmatprep.subr.mxu0 0.0
    %1945 = vmatpush2.msra.mxu0 0.0
    %1946 = vmatprep.subr.mxu0 0.0
    %1947 = vmatpush2.msra.mxu0 0.0
    %1948 = vmatprep.subr.mxu0 0.0
    %1949 = vmatpush2.msra.mxu0 0.0
    %1950 = vmatprep.subr.mxu0 0.0
    %1951 = vmatpush2.msra.mxu0 0.0
    %1952 = vmatprep.mubr.f32.mxu0 0.0
    %1953 = vmatmul.mubr.f32.gmra.mxu0 %v1886
    %v1954 = vpop.f32.mrf.mxu0
    %v1955 = vadd.f32 %v1811, %v1954
    %v1956 = vpop.f32.mrf.mxu0
    %v1957 = vadd.f32 %v1813, %v1956
    %1958 = vdwg.mxu0
    %1959 = vmatprep.subr.mxu0 0.0
    %1960 = vmatpush1.msra.mxu0 0.0
    %1961 = vmatprep.subr.mxu0 0.0
    %1962 = vmatpush1.msra.mxu0 0.0
    %1963 = vmatprep.subr.mxu0 0.0
    %1964 = vmatpush1.msra.mxu0 0.0
    %1965 = vmatprep.subr.mxu0 0.0
    %1966 = vmatpush1.msra.mxu0 0.0
    %1967 = vmatprep.subr.mxu0 0.0
    %1968 = vmatpush1.msra.mxu0 0.0
    %1969 = vmatprep.subr.mxu0 0.0
    %1970 = vmatpush1.msra.mxu0 0.0
    %1971 = vmatprep.subr.mxu0 0.0
    %1972 = vmatpush1.msra.mxu0 0.0
    %1973 = vmatprep.subr.mxu0 0.0
    %1974 = vmatpush1.msra.mxu0 0.0
    %1975 = vmatprep.subr.mxu0 0.0
    %1976 = vmatpush1.msra.mxu0 0.0
    %1977 = vmatprep.subr.mxu0 0.0
    %1978 = vmatpush1.msra.mxu0 0.0
    %1979 = vmatprep.subr.mxu0 0.0
    %1980 = vmatpush1.msra.mxu0 0.0
    %1981 = vmatprep.subr.mxu0 0.0
    %1982 = vmatpush1.msra.mxu0 0.0
    %1983 = vmatprep.subr.mxu0 0.0
    %1984 = vmatpush1.msra.mxu0 0.0
    %1985 = vmatprep.subr.mxu0 0.0
    %1986 = vmatpush1.msra.mxu0 0.0
    %1987 = vmatprep.subr.mxu0 0.0
    %1988 = vmatpush1.msra.mxu0 %v1707
    %1989 = vmatprep.subr.mxu0 0.0
    %1990 = vmatpush1.msra.mxu0 %v1704
    %1991 = vmatprep.subr.mxu0 0.0
    %1992 = vmatpush2.msra.mxu0 0.0
    %1993 = vmatprep.subr.mxu0 0.0
    %1994 = vmatpush2.msra.mxu0 0.0
    %1995 = vmatprep.subr.mxu0 0.0
    %1996 = vmatpush2.msra.mxu0 0.0
    %1997 = vmatprep.subr.mxu0 0.0
    %1998 = vmatpush2.msra.mxu0 0.0
    %1999 = vmatprep.subr.mxu0 0.0
    %2000 = vmatpush2.msra.mxu0 0.0
    %2001 = vmatprep.subr.mxu0 0.0
    %2002 = vmatpush2.msra.mxu0 0.0
    %2003 = vmatprep.subr.mxu0 0.0
    %2004 = vmatpush2.msra.mxu0 0.0
    %2005 = vmatprep.subr.mxu0 0.0
    %2006 = vmatpush2.msra.mxu0 0.0
    %2007 = vmatprep.subr.mxu0 0.0
    %2008 = vmatpush2.msra.mxu0 0.0
    %2009 = vmatprep.subr.mxu0 0.0
    %2010 = vmatpush2.msra.mxu0 0.0
    %2011 = vmatprep.subr.mxu0 0.0
    %2012 = vmatpush2.msra.mxu0 0.0
    %2013 = vmatprep.subr.mxu0 0.0
    %2014 = vmatpush2.msra.mxu0 0.0
    %2015 = vmatprep.subr.mxu0 0.0
    %2016 = vmatpush2.msra.mxu0 0.0
    %2017 = vmatprep.subr.mxu0 0.0
    %2018 = vmatpush2.msra.mxu0 0.0
    %2019 = vmatprep.subr.mxu0 0.0
    %2020 = vmatpush2.msra.mxu0 0.0
    %2021 = vmatprep.subr.mxu0 0.0
    %2022 = vmatpush2.msra.mxu0 0.0
    %2023 = vmatprep.mubr.f32.mxu0 0.0
    %2024 = vmatmul.mubr.f32.gmra.mxu0 %v1886
    %v2025 = vpop.f32.mrf.mxu0
    %v2026 = vadd.f32 %v1882, %v2025
    %v2027 = vpop.f32.mrf.mxu0
    %2028 = vdwg.mxu0
    %s2029 = scalar_lea.vmem %s3, 16
    %v2030 = vld [vmem:[%s2029] sm:$0xff]
    %2031 = vrot.lane.b32.xlu0 %v1702, 126
    %v2032 = vpop.permute.xlu0 %2031
    %2033 = vrot.lane.b32.xlu0 %v1703, 126
    %v2034 = vpop.permute.xlu0 %2033
    %2035 = vrot.lane.b32.xlu0 %v1704, 126
    %v2036 = vpop.permute.xlu0 %2035
    %2037 = vrot.lane.b32.xlu0 %v1705, 126
    %v2038 = vpop.permute.xlu0 %2037
    %2039 = vrot.lane.b32.xlu0 %v1706, 126
    %v2040 = vpop.permute.xlu0 %2039
    %2041 = vrot.lane.b32.xlu0 %v1707, 126
    %v2042 = vpop.permute.xlu0 %2041
    %vm2043 = vcmask 1031168
    %v2044 = vsel %vm2043, %v2032, %v2034
    %v2045 = vsel %vm2043, %v2034, %v2036
    %v2046 = vsel %vm2043, %v2038, %v2040
    %v2047 = vsel %vm2043, %v2040, %v2042
    %v2055 = vsel %vm1740, %v2030, 0
    %2057 = vmatprep.subr.mxu0 0.0
    %2058 = vmatpush1.msra.mxu0 0.0
    %2059 = vmatprep.subr.mxu0 0.0
    %2060 = vmatpush1.msra.mxu0 0.0
    %2061 = vmatprep.subr.mxu0 0.0
    %2062 = vmatpush1.msra.mxu0 0.0
    %2063 = vmatprep.subr.mxu0 0.0
    %2064 = vmatpush1.msra.mxu0 0.0
    %2065 = vmatprep.subr.mxu0 0.0
    %2066 = vmatpush1.msra.mxu0 0.0
    %2067 = vmatprep.subr.mxu0 0.0
    %2068 = vmatpush1.msra.mxu0 0.0
    %2069 = vmatprep.subr.mxu0 0.0
    %2070 = vmatpush1.msra.mxu0 0.0
    %2071 = vmatprep.subr.mxu0 0.0
    %2072 = vmatpush1.msra.mxu0 0.0
    %2073 = vmatprep.subr.mxu0 0.0
    %2074 = vmatpush1.msra.mxu0 0.0
    %2075 = vmatprep.subr.mxu0 0.0
    %2076 = vmatpush1.msra.mxu0 0.0
    %2077 = vmatprep.subr.mxu0 0.0
    %2078 = vmatpush1.msra.mxu0 0.0
    %2079 = vmatprep.subr.mxu0 0.0
    %2080 = vmatpush1.msra.mxu0 0.0
    %2081 = vmatprep.subr.mxu0 0.0
    %2082 = vmatpush1.msra.mxu0 0.0
    %2083 = vmatprep.subr.mxu0 0.0
    %2084 = vmatpush1.msra.mxu0 0.0
    %2085 = vmatprep.subr.mxu0 %v2047
    %2086 = vmatpush1.msra.mxu0 %v2046
    %2087 = vmatprep.subr.mxu0 %v2045
    %2088 = vmatpush1.msra.mxu0 %v2044
    %2089 = vmatprep.subr.mxu0 0.0
    %2090 = vmatpush2.msra.mxu0 0.0
    %2091 = vmatprep.subr.mxu0 0.0
    %2092 = vmatpush2.msra.mxu0 0.0
    %2093 = vmatprep.subr.mxu0 0.0
    %2094 = vmatpush2.msra.mxu0 0.0
    %2095 = vmatprep.subr.mxu0 0.0
    %2096 = vmatpush2.msra.mxu0 0.0
    %2097 = vmatprep.subr.mxu0 0.0
    %2098 = vmatpush2.msra.mxu0 0.0
    %2099 = vmatprep.subr.mxu0 0.0
    %2100 = vmatpush2.msra.mxu0 0.0
    %2101 = vmatprep.subr.mxu0 0.0
    %2102 = vmatpush2.msra.mxu0 0.0
    %2103 = vmatprep.subr.mxu0 0.0
    %2104 = vmatpush2.msra.mxu0 0.0
    %2105 = vmatprep.subr.mxu0 0.0
    %2106 = vmatpush2.msra.mxu0 0.0
    %2107 = vmatprep.subr.mxu0 0.0
    %2108 = vmatpush2.msra.mxu0 0.0
    %2109 = vmatprep.subr.mxu0 0.0
    %2110 = vmatpush2.msra.mxu0 0.0
    %2111 = vmatprep.subr.mxu0 0.0
    %2112 = vmatpush2.msra.mxu0 0.0
    %2113 = vmatprep.subr.mxu0 0.0
    %2114 = vmatpush2.msra.mxu0 0.0
    %2115 = vmatprep.subr.mxu0 0.0
    %2116 = vmatpush2.msra.mxu0 0.0
    %2117 = vmatprep.subr.mxu0 0.0
    %2118 = vmatpush2.msra.mxu0 0.0
    %2119 = vmatprep.subr.mxu0 0.0
    %2120 = vmatpush2.msra.mxu0 0.0
    %2121 = vmatprep.mubr.f32.mxu0 0.0
    %2122 = vmatmul.mubr.f32.gmra.mxu0 %v2055
    %v2123 = vpop.f32.mrf.mxu0
    %v2124 = vadd.f32 0.0, %v2123
    %v2125 = vpop.f32.mrf.mxu0
    %v2126 = vadd.f32 0.0, %v2125
    %2127 = vdwg.mxu0
    %2128 = vmatprep.subr.mxu0 0.0
    %2129 = vmatpush1.msra.mxu0 0.0
    %2130 = vmatprep.subr.mxu0 0.0
    %2131 = vmatpush1.msra.mxu0 0.0
    %2132 = vmatprep.subr.mxu0 0.0
    %2133 = vmatpush1.msra.mxu0 0.0
    %2134 = vmatprep.subr.mxu0 0.0
    %2135 = vmatpush1.msra.mxu0 0.0
    %2136 = vmatprep.subr.mxu0 0.0
    %2137 = vmatpush1.msra.mxu0 0.0
    %2138 = vmatprep.subr.mxu0 0.0
    %2139 = vmatpush1.msra.mxu0 0.0
    %2140 = vmatprep.subr.mxu0 0.0
    %2141 = vmatpush1.msra.mxu0 0.0
    %2142 = vmatprep.subr.mxu0 0.0
    %2143 = vmatpush1.msra.mxu0 0.0
    %2144 = vmatprep.subr.mxu0 0.0
    %2145 = vmatpush1.msra.mxu0 0.0
    %2146 = vmatprep.subr.mxu0 0.0
    %2147 = vmatpush1.msra.mxu0 0.0
    %2148 = vmatprep.subr.mxu0 0.0
    %2149 = vmatpush1.msra.mxu0 0.0
    %2150 = vmatprep.subr.mxu0 0.0
    %2151 = vmatpush1.msra.mxu0 0.0
    %2152 = vmatprep.subr.mxu0 0.0
    %2153 = vmatpush1.msra.mxu0 0.0
    %2154 = vmatprep.subr.mxu0 0.0
    %2155 = vmatpush1.msra.mxu0 0.0
    %2156 = vmatprep.subr.mxu0 0.0
    %2157 = vmatpush1.msra.mxu0 %v2042
    %2158 = vmatprep.subr.mxu0 0.0
    %2159 = vmatpush1.msra.mxu0 %v2036
    %2160 = vmatprep.subr.mxu0 0.0
    %2161 = vmatpush2.msra.mxu0 0.0
    %2162 = vmatprep.subr.mxu0 0.0
    %2163 = vmatpush2.msra.mxu0 0.0
    %2164 = vmatprep.subr.mxu0 0.0
    %2165 = vmatpush2.msra.mxu0 0.0
    %2166 = vmatprep.subr.mxu0 0.0
    %2167 = vmatpush2.msra.mxu0 0.0
    %2168 = vmatprep.subr.mxu0 0.0
    %2169 = vmatpush2.msra.mxu0 0.0
    %2170 = vmatprep.subr.mxu0 0.0
    %2171 = vmatpush2.msra.mxu0 0.0
    %2172 = vmatprep.subr.mxu0 0.0
    %2173 = vmatpush2.msra.mxu0 0.0
    %2174 = vmatprep.subr.mxu0 0.0
    %2175 = vmatpush2.msra.mxu0 0.0
    %2176 = vmatprep.subr.mxu0 0.0
    %2177 = vmatpush2.msra.mxu0 0.0
    %2178 = vmatprep.subr.mxu0 0.0
    %2179 = vmatpush2.msra.mxu0 0.0
    %2180 = vmatprep.subr.mxu0 0.0
    %2181 = vmatpush2.msra.mxu0 0.0
    %2182 = vmatprep.subr.mxu0 0.0
    %2183 = vmatpush2.msra.mxu0 0.0
    %2184 = vmatprep.subr.mxu0 0.0
    %2185 = vmatpush2.msra.mxu0 0.0
    %2186 = vmatprep.subr.mxu0 0.0
    %2187 = vmatpush2.msra.mxu0 0.0
    %2188 = vmatprep.subr.mxu0 0.0
    %2189 = vmatpush2.msra.mxu0 0.0
    %2190 = vmatprep.subr.mxu0 0.0
    %2191 = vmatpush2.msra.mxu0 0.0
    %2192 = vmatprep.mubr.f32.mxu0 0.0
    %2193 = vmatmul.mubr.f32.gmra.mxu0 %v2055
    %v2194 = vpop.f32.mrf.mxu0
    %v2195 = vadd.f32 0.0, %v2194
    %v2196 = vpop.f32.mrf.mxu0
    %2197 = vdwg.mxu0
    %v2198 = vadd.f32 %v1955, %v2124
    %v2199 = vadd.f32 %v1957, %v2126
    %v2200 = vadd.f32 %v2026, %v2195
    %s2201 = scalar_lea.vmem %s3, 24
    %v2202 = vld [vmem:[%s2201] sm:$0xff]
    %2203 = vrot.lane.b32.xlu0 %v1702, 110
    %v2204 = vpop.permute.xlu0 %2203
    %2205 = vrot.lane.b32.xlu0 %v1703, 110
    %v2206 = vpop.permute.xlu0 %2205
    %2207 = vrot.lane.b32.xlu0 %v1704, 110
    %v2208 = vpop.permute.xlu0 %2207
    %2209 = vrot.lane.b32.xlu0 %v1705, 110
    %v2210 = vpop.permute.xlu0 %2209
    %2211 = vrot.lane.b32.xlu0 %v1706, 110
    %v2212 = vpop.permute.xlu0 %2211
    %2213 = vrot.lane.b32.xlu0 %v1707, 110
    %v2214 = vpop.permute.xlu0 %2213
    %v2215 = vsel %vm59, %v2204, %v2206
    %v2216 = vsel %vm59, %v2206, %v2208
    %v2217 = vsel %vm59, %v2210, %v2212
    %v2218 = vsel %vm59, %v2212, %v2214
    %v2226 = vsel %vm1740, %v2202, 0
    %2228 = vmatprep.subr.mxu0 0.0
    %2229 = vmatpush1.msra.mxu0 0.0
    %2230 = vmatprep.subr.mxu0 0.0
    %2231 = vmatpush1.msra.mxu0 0.0
    %2232 = vmatprep.subr.mxu0 0.0
    %2233 = vmatpush1.msra.mxu0 0.0
    %2234 = vmatprep.subr.mxu0 0.0
    %2235 = vmatpush1.msra.mxu0 0.0
    %2236 = vmatprep.subr.mxu0 0.0
    %2237 = vmatpush1.msra.mxu0 0.0
    %2238 = vmatprep.subr.mxu0 0.0
    %2239 = vmatpush1.msra.mxu0 0.0
    %2240 = vmatprep.subr.mxu0 0.0
    %2241 = vmatpush1.msra.mxu0 0.0
    %2242 = vmatprep.subr.mxu0 0.0
    %2243 = vmatpush1.msra.mxu0 0.0
    %2244 = vmatprep.subr.mxu0 0.0
    %2245 = vmatpush1.msra.mxu0 0.0
    %2246 = vmatprep.subr.mxu0 0.0
    %2247 = vmatpush1.msra.mxu0 0.0
    %2248 = vmatprep.subr.mxu0 0.0
    %2249 = vmatpush1.msra.mxu0 0.0
    %2250 = vmatprep.subr.mxu0 0.0
    %2251 = vmatpush1.msra.mxu0 0.0
    %2252 = vmatprep.subr.mxu0 0.0
    %2253 = vmatpush1.msra.mxu0 0.0
    %2254 = vmatprep.subr.mxu0 0.0
    %2255 = vmatpush1.msra.mxu0 0.0
    %2256 = vmatprep.subr.mxu0 %v2218
    %2257 = vmatpush1.msra.mxu0 %v2217
    %2258 = vmatprep.subr.mxu0 %v2216
    %2259 = vmatpush1.msra.mxu0 %v2215
    %2260 = vmatprep.subr.mxu0 0.0
    %2261 = vmatpush2.msra.mxu0 0.0
    %2262 = vmatprep.subr.mxu0 0.0
    %2263 = vmatpush2.msra.mxu0 0.0
    %2264 = vmatprep.subr.mxu0 0.0
    %2265 = vmatpush2.msra.mxu0 0.0
    %2266 = vmatprep.subr.mxu0 0.0
    %2267 = vmatpush2.msra.mxu0 0.0
    %2268 = vmatprep.subr.mxu0 0.0
    %2269 = vmatpush2.msra.mxu0 0.0
    %2270 = vmatprep.subr.mxu0 0.0
    %2271 = vmatpush2.msra.mxu0 0.0
    %2272 = vmatprep.subr.mxu0 0.0
    %2273 = vmatpush2.msra.mxu0 0.0
    %2274 = vmatprep.subr.mxu0 0.0
    %2275 = vmatpush2.msra.mxu0 0.0
    %2276 = vmatprep.subr.mxu0 0.0
    %2277 = vmatpush2.msra.mxu0 0.0
    %2278 = vmatprep.subr.mxu0 0.0
    %2279 = vmatpush2.msra.mxu0 0.0
    %2280 = vmatprep.subr.mxu0 0.0
    %2281 = vmatpush2.msra.mxu0 0.0
    %2282 = vmatprep.subr.mxu0 0.0
    %2283 = vmatpush2.msra.mxu0 0.0
    %2284 = vmatprep.subr.mxu0 0.0
    %2285 = vmatpush2.msra.mxu0 0.0
    %2286 = vmatprep.subr.mxu0 0.0
    %2287 = vmatpush2.msra.mxu0 0.0
    %2288 = vmatprep.subr.mxu0 0.0
    %2289 = vmatpush2.msra.mxu0 0.0
    %2290 = vmatprep.subr.mxu0 0.0
    %2291 = vmatpush2.msra.mxu0 0.0
    %2292 = vmatprep.mubr.f32.mxu0 0.0
    %2293 = vmatmul.mubr.f32.gmra.mxu0 %v2226
    %v2294 = vpop.f32.mrf.mxu0
    %v2295 = vadd.f32 0.0, %v2294
    %v2296 = vpop.f32.mrf.mxu0
    %v2297 = vadd.f32 0.0, %v2296
    %2298 = vdwg.mxu0
    %2299 = vmatprep.subr.mxu0 0.0
    %2300 = vmatpush1.msra.mxu0 0.0
    %2301 = vmatprep.subr.mxu0 0.0
    %2302 = vmatpush1.msra.mxu0 0.0
    %2303 = vmatprep.subr.mxu0 0.0
    %2304 = vmatpush1.msra.mxu0 0.0
    %2305 = vmatprep.subr.mxu0 0.0
    %2306 = vmatpush1.msra.mxu0 0.0
    %2307 = vmatprep.subr.mxu0 0.0
    %2308 = vmatpush1.msra.mxu0 0.0
    %2309 = vmatprep.subr.mxu0 0.0
    %2310 = vmatpush1.msra.mxu0 0.0
    %2311 = vmatprep.subr.mxu0 0.0
    %2312 = vmatpush1.msra.mxu0 0.0
    %2313 = vmatprep.subr.mxu0 0.0
    %2314 = vmatpush1.msra.mxu0 0.0
    %2315 = vmatprep.subr.mxu0 0.0
    %2316 = vmatpush1.msra.mxu0 0.0
    %2317 = vmatprep.subr.mxu0 0.0
    %2318 = vmatpush1.msra.mxu0 0.0
    %2319 = vmatprep.subr.mxu0 0.0
    %2320 = vmatpush1.msra.mxu0 0.0
    %2321 = vmatprep.subr.mxu0 0.0
    %2322 = vmatpush1.msra.mxu0 0.0
    %2323 = vmatprep.subr.mxu0 0.0
    %2324 = vmatpush1.msra.mxu0 0.0
    %2325 = vmatprep.subr.mxu0 0.0
    %2326 = vmatpush1.msra.mxu0 0.0
    %2327 = vmatprep.subr.mxu0 0.0
    %2328 = vmatpush1.msra.mxu0 %v2214
    %2329 = vmatprep.subr.mxu0 0.0
    %2330 = vmatpush1.msra.mxu0 %v2208
    %2331 = vmatprep.subr.mxu0 0.0
    %2332 = vmatpush2.msra.mxu0 0.0
    %2333 = vmatprep.subr.mxu0 0.0
    %2334 = vmatpush2.msra.mxu0 0.0
    %2335 = vmatprep.subr.mxu0 0.0
    %2336 = vmatpush2.msra.mxu0 0.0
    %2337 = vmatprep.subr.mxu0 0.0
    %2338 = vmatpush2.msra.mxu0 0.0
    %2339 = vmatprep.subr.mxu0 0.0
    %2340 = vmatpush2.msra.mxu0 0.0
    %2341 = vmatprep.subr.mxu0 0.0
    %2342 = vmatpush2.msra.mxu0 0.0
    %2343 = vmatprep.subr.mxu0 0.0
    %2344 = vmatpush2.msra.mxu0 0.0
    %2345 = vmatprep.subr.mxu0 0.0
    %2346 = vmatpush2.msra.mxu0 0.0
    %2347 = vmatprep.subr.mxu0 0.0
    %2348 = vmatpush2.msra.mxu0 0.0
    %2349 = vmatprep.subr.mxu0 0.0
    %2350 = vmatpush2.msra.mxu0 0.0
    %2351 = vmatprep.subr.mxu0 0.0
    %2352 = vmatpush2.msra.mxu0 0.0
    %2353 = vmatprep.subr.mxu0 0.0
    %2354 = vmatpush2.msra.mxu0 0.0
    %2355 = vmatprep.subr.mxu0 0.0
    %2356 = vmatpush2.msra.mxu0 0.0
    %2357 = vmatprep.subr.mxu0 0.0
    %2358 = vmatpush2.msra.mxu0 0.0
    %2359 = vmatprep.subr.mxu0 0.0
    %2360 = vmatpush2.msra.mxu0 0.0
    %2361 = vmatprep.subr.mxu0 0.0
    %2362 = vmatpush2.msra.mxu0 0.0
    %2363 = vmatprep.mubr.f32.mxu0 0.0
    %2364 = vmatmul.mubr.f32.gmra.mxu0 %v2226
    %v2365 = vpop.f32.mrf.mxu0
    %v2366 = vadd.f32 0.0, %v2365
    %v2367 = vpop.f32.mrf.mxu0
    %2368 = vdwg.mxu0
    %v2369 = vadd.f32 %v2198, %v2295
    %v2370 = vadd.f32 %v2199, %v2297
    %v2371 = vadd.f32 %v2200, %v2366
    %s2372 = scalar_lea.vmem %s3, 32
    %v2373 = vld [vmem:[%s2372] sm:$0xff]
    %2374 = vrot.lane.b32.xlu0 %v1702, 109
    %v2375 = vpop.permute.xlu0 %2374
    %2376 = vrot.lane.b32.xlu0 %v1703, 109
    %v2377 = vpop.permute.xlu0 %2376
    %2378 = vrot.lane.b32.xlu0 %v1704, 109
    %v2379 = vpop.permute.xlu0 %2378
    %2380 = vrot.lane.b32.xlu0 %v1705, 109
    %v2381 = vpop.permute.xlu0 %2380
    %2382 = vrot.lane.b32.xlu0 %v1706, 109
    %v2383 = vpop.permute.xlu0 %2382
    %2384 = vrot.lane.b32.xlu0 %v1707, 109
    %v2385 = vpop.permute.xlu0 %2384
    %v2386 = vsel %vm403, %v2375, %v2377
    %v2387 = vsel %vm403, %v2377, %v2379
    %v2388 = vsel %vm403, %v2381, %v2383
    %v2389 = vsel %vm403, %v2383, %v2385
    %v2397 = vsel %vm1740, %v2373, 0
    %2399 = vmatprep.subr.mxu0 0.0
    %2400 = vmatpush1.msra.mxu0 0.0
    %2401 = vmatprep.subr.mxu0 0.0
    %2402 = vmatpush1.msra.mxu0 0.0
    %2403 = vmatprep.subr.mxu0 0.0
    %2404 = vmatpush1.msra.mxu0 0.0
    %2405 = vmatprep.subr.mxu0 0.0
    %2406 = vmatpush1.msra.mxu0 0.0
    %2407 = vmatprep.subr.mxu0 0.0
    %2408 = vmatpush1.msra.mxu0 0.0
    %2409 = vmatprep.subr.mxu0 0.0
    %2410 = vmatpush1.msra.mxu0 0.0
    %2411 = vmatprep.subr.mxu0 0.0
    %2412 = vmatpush1.msra.mxu0 0.0
    %2413 = vmatprep.subr.mxu0 0.0
    %2414 = vmatpush1.msra.mxu0 0.0
    %2415 = vmatprep.subr.mxu0 0.0
    %2416 = vmatpush1.msra.mxu0 0.0
    %2417 = vmatprep.subr.mxu0 0.0
    %2418 = vmatpush1.msra.mxu0 0.0
    %2419 = vmatprep.subr.mxu0 0.0
    %2420 = vmatpush1.msra.mxu0 0.0
    %2421 = vmatprep.subr.mxu0 0.0
    %2422 = vmatpush1.msra.mxu0 0.0
    %2423 = vmatprep.subr.mxu0 0.0
    %2424 = vmatpush1.msra.mxu0 0.0
    %2425 = vmatprep.subr.mxu0 0.0
    %2426 = vmatpush1.msra.mxu0 0.0
    %2427 = vmatprep.subr.mxu0 %v2389
    %2428 = vmatpush1.msra.mxu0 %v2388
    %2429 = vmatprep.subr.mxu0 %v2387
    %2430 = vmatpush1.msra.mxu0 %v2386
    %2431 = vmatprep.subr.mxu0 0.0
    %2432 = vmatpush2.msra.mxu0 0.0
    %2433 = vmatprep.subr.mxu0 0.0
    %2434 = vmatpush2.msra.mxu0 0.0
    %2435 = vmatprep.subr.mxu0 0.0
    %2436 = vmatpush2.msra.mxu0 0.0
    %2437 = vmatprep.subr.mxu0 0.0
    %2438 = vmatpush2.msra.mxu0 0.0
    %2439 = vmatprep.subr.mxu0 0.0
    %2440 = vmatpush2.msra.mxu0 0.0
    %2441 = vmatprep.subr.mxu0 0.0
    %2442 = vmatpush2.msra.mxu0 0.0
    %2443 = vmatprep.subr.mxu0 0.0
    %2444 = vmatpush2.msra.mxu0 0.0
    %2445 = vmatprep.subr.mxu0 0.0
    %2446 = vmatpush2.msra.mxu0 0.0
    %2447 = vmatprep.subr.mxu0 0.0
    %2448 = vmatpush2.msra.mxu0 0.0
    %2449 = vmatprep.subr.mxu0 0.0
    %2450 = vmatpush2.msra.mxu0 0.0
    %2451 = vmatprep.subr.mxu0 0.0
    %2452 = vmatpush2.msra.mxu0 0.0
    %2453 = vmatprep.subr.mxu0 0.0
    %2454 = vmatpush2.msra.mxu0 0.0
    %2455 = vmatprep.subr.mxu0 0.0
    %2456 = vmatpush2.msra.mxu0 0.0
    %2457 = vmatprep.subr.mxu0 0.0
    %2458 = vmatpush2.msra.mxu0 0.0
    %2459 = vmatprep.subr.mxu0 0.0
    %2460 = vmatpush2.msra.mxu0 0.0
    %2461 = vmatprep.subr.mxu0 0.0
    %2462 = vmatpush2.msra.mxu0 0.0
    %2463 = vmatprep.mubr.f32.mxu0 0.0
    %2464 = vmatmul.mubr.f32.gmra.mxu0 %v2397
    %v2465 = vpop.f32.mrf.mxu0
    %v2466 = vadd.f32 0.0, %v2465
    %v2467 = vpop.f32.mrf.mxu0
    %v2468 = vadd.f32 0.0, %v2467
    %2469 = vdwg.mxu0
    %2470 = vmatprep.subr.mxu0 0.0
    %2471 = vmatpush1.msra.mxu0 0.0
    %2472 = vmatprep.subr.mxu0 0.0
    %2473 = vmatpush1.msra.mxu0 0.0
    %2474 = vmatprep.subr.mxu0 0.0
    %2475 = vmatpush1.msra.mxu0 0.0
    %2476 = vmatprep.subr.mxu0 0.0
    %2477 = vmatpush1.msra.mxu0 0.0
    %2478 = vmatprep.subr.mxu0 0.0
    %2479 = vmatpush1.msra.mxu0 0.0
    %2480 = vmatprep.subr.mxu0 0.0
    %2481 = vmatpush1.msra.mxu0 0.0
    %2482 = vmatprep.subr.mxu0 0.0
    %2483 = vmatpush1.msra.mxu0 0.0
    %2484 = vmatprep.subr.mxu0 0.0
    %2485 = vmatpush1.msra.mxu0 0.0
    %2486 = vmatprep.subr.mxu0 0.0
    %2487 = vmatpush1.msra.mxu0 0.0
    %2488 = vmatprep.subr.mxu0 0.0
    %2489 = vmatpush1.msra.mxu0 0.0
    %2490 = vmatprep.subr.mxu0 0.0
    %2491 = vmatpush1.msra.mxu0 0.0
    %2492 = vmatprep.subr.mxu0 0.0
    %2493 = vmatpush1.msra.mxu0 0.0
    %2494 = vmatprep.subr.mxu0 0.0
    %2495 = vmatpush1.msra.mxu0 0.0
    %2496 = vmatprep.subr.mxu0 0.0
    %2497 = vmatpush1.msra.mxu0 0.0
    %2498 = vmatprep.subr.mxu0 0.0
    %2499 = vmatpush1.msra.mxu0 %v2385
    %2500 = vmatprep.subr.mxu0 0.0
    %2501 = vmatpush1.msra.mxu0 %v2379
    %2502 = vmatprep.subr.mxu0 0.0
    %2503 = vmatpush2.msra.mxu0 0.0
    %2504 = vmatprep.subr.mxu0 0.0
    %2505 = vmatpush2.msra.mxu0 0.0
    %2506 = vmatprep.subr.mxu0 0.0
    %2507 = vmatpush2.msra.mxu0 0.0
    %2508 = vmatprep.subr.mxu0 0.0
    %2509 = vmatpush2.msra.mxu0 0.0
    %2510 = vmatprep.subr.mxu0 0.0
    %2511 = vmatpush2.msra.mxu0 0.0
    %2512 = vmatprep.subr.mxu0 0.0
    %2513 = vmatpush2.msra.mxu0 0.0
    %2514 = vmatprep.subr.mxu0 0.0
    %2515 = vmatpush2.msra.mxu0 0.0
    %2516 = vmatprep.subr.mxu0 0.0
    %2517 = vmatpush2.msra.mxu0 0.0
    %2518 = vmatprep.subr.mxu0 0.0
    %2519 = vmatpush2.msra.mxu0 0.0
    %2520 = vmatprep.subr.mxu0 0.0
    %2521 = vmatpush2.msra.mxu0 0.0
    %2522 = vmatprep.subr.mxu0 0.0
    %2523 = vmatpush2.msra.mxu0 0.0
    %2524 = vmatprep.subr.mxu0 0.0
    %2525 = vmatpush2.msra.mxu0 0.0
    %2526 = vmatprep.subr.mxu0 0.0
    %2527 = vmatpush2.msra.mxu0 0.0
    %2528 = vmatprep.subr.mxu0 0.0
    %2529 = vmatpush2.msra.mxu0 0.0
    %2530 = vmatprep.subr.mxu0 0.0
    %2531 = vmatpush2.msra.mxu0 0.0
    %2532 = vmatprep.subr.mxu0 0.0
    %2533 = vmatpush2.msra.mxu0 0.0
    %2534 = vmatprep.mubr.f32.mxu0 0.0
    %2535 = vmatmul.mubr.f32.gmra.mxu0 %v2397
    %v2536 = vpop.f32.mrf.mxu0
    %v2537 = vadd.f32 0.0, %v2536
    %v2538 = vpop.f32.mrf.mxu0
    %2539 = vdwg.mxu0
    %v2540 = vadd.f32 %v2369, %v2466
    %v2541 = vadd.f32 %v2370, %v2468
    %v2542 = vadd.f32 %v2371, %v2537
    %s2543 = scalar_lea.vmem %s3, 40
    %v2544 = vld [vmem:[%s2543] sm:$0xff]
    %2545 = vrot.lane.b32.xlu0 %v1702, 108
    %v2546 = vpop.permute.xlu0 %2545
    %2547 = vrot.lane.b32.xlu0 %v1703, 108
    %v2548 = vpop.permute.xlu0 %2547
    %2549 = vrot.lane.b32.xlu0 %v1704, 108
    %v2550 = vpop.permute.xlu0 %2549
    %2551 = vrot.lane.b32.xlu0 %v1705, 108
    %v2552 = vpop.permute.xlu0 %2551
    %2553 = vrot.lane.b32.xlu0 %v1706, 108
    %v2554 = vpop.permute.xlu0 %2553
    %2555 = vrot.lane.b32.xlu0 %v1707, 108
    %v2556 = vpop.permute.xlu0 %2555
    %vm2557 = vcmask 883712
    %v2558 = vsel %vm2557, %v2546, %v2548
    %v2559 = vsel %vm2557, %v2548, %v2550
    %v2560 = vsel %vm2557, %v2552, %v2554
    %v2561 = vsel %vm2557, %v2554, %v2556
    %v2569 = vsel %vm1740, %v2544, 0
    %2571 = vmatprep.subr.mxu0 0.0
    %2572 = vmatpush1.msra.mxu0 0.0
    %2573 = vmatprep.subr.mxu0 0.0
    %2574 = vmatpush1.msra.mxu0 0.0
    %2575 = vmatprep.subr.mxu0 0.0
    %2576 = vmatpush1.msra.mxu0 0.0
    %2577 = vmatprep.subr.mxu0 0.0
    %2578 = vmatpush1.msra.mxu0 0.0
    %2579 = vmatprep.subr.mxu0 0.0
    %2580 = vmatpush1.msra.mxu0 0.0
    %2581 = vmatprep.subr.mxu0 0.0
    %2582 = vmatpush1.msra.mxu0 0.0
    %2583 = vmatprep.subr.mxu0 0.0
    %2584 = vmatpush1.msra.mxu0 0.0
    %2585 = vmatprep.subr.mxu0 0.0
    %2586 = vmatpush1.msra.mxu0 0.0
    %2587 = vmatprep.subr.mxu0 0.0
    %2588 = vmatpush1.msra.mxu0 0.0
    %2589 = vmatprep.subr.mxu0 0.0
    %2590 = vmatpush1.msra.mxu0 0.0
    %2591 = vmatprep.subr.mxu0 0.0
    %2592 = vmatpush1.msra.mxu0 0.0
    %2593 = vmatprep.subr.mxu0 0.0
    %2594 = vmatpush1.msra.mxu0 0.0
    %2595 = vmatprep.subr.mxu0 0.0
    %2596 = vmatpush1.msra.mxu0 0.0
    %2597 = vmatprep.subr.mxu0 0.0
    %2598 = vmatpush1.msra.mxu0 0.0
    %2599 = vmatprep.subr.mxu0 %v2561
    %2600 = vmatpush1.msra.mxu0 %v2560
    %2601 = vmatprep.subr.mxu0 %v2559
    %2602 = vmatpush1.msra.mxu0 %v2558
    %2603 = vmatprep.subr.mxu0 0.0
    %2604 = vmatpush2.msra.mxu0 0.0
    %2605 = vmatprep.subr.mxu0 0.0
    %2606 = vmatpush2.msra.mxu0 0.0
    %2607 = vmatprep.subr.mxu0 0.0
    %2608 = vmatpush2.msra.mxu0 0.0
    %2609 = vmatprep.subr.mxu0 0.0
    %2610 = vmatpush2.msra.mxu0 0.0
    %2611 = vmatprep.subr.mxu0 0.0
    %2612 = vmatpush2.msra.mxu0 0.0
    %2613 = vmatprep.subr.mxu0 0.0
    %2614 = vmatpush2.msra.mxu0 0.0
    %2615 = vmatprep.subr.mxu0 0.0
    %2616 = vmatpush2.msra.mxu0 0.0
    %2617 = vmatprep.subr.mxu0 0.0
    %2618 = vmatpush2.msra.mxu0 0.0
    %2619 = vmatprep.subr.mxu0 0.0
    %2620 = vmatpush2.msra.mxu0 0.0
    %2621 = vmatprep.subr.mxu0 0.0
    %2622 = vmatpush2.msra.mxu0 0.0
    %2623 = vmatprep.subr.mxu0 0.0
    %2624 = vmatpush2.msra.mxu0 0.0
    %2625 = vmatprep.subr.mxu0 0.0
    %2626 = vmatpush2.msra.mxu0 0.0
    %2627 = vmatprep.subr.mxu0 0.0
    %2628 = vmatpush2.msra.mxu0 0.0
    %2629 = vmatprep.subr.mxu0 0.0
    %2630 = vmatpush2.msra.mxu0 0.0
    %2631 = vmatprep.subr.mxu0 0.0
    %2632 = vmatpush2.msra.mxu0 0.0
    %2633 = vmatprep.subr.mxu0 0.0
    %2634 = vmatpush2.msra.mxu0 0.0
    %2635 = vmatprep.mubr.f32.mxu0 0.0
    %2636 = vmatmul.mubr.f32.gmra.mxu0 %v2569
    %v2637 = vpop.f32.mrf.mxu0
    %v2638 = vadd.f32 0.0, %v2637
    %v2639 = vpop.f32.mrf.mxu0
    %v2640 = vadd.f32 0.0, %v2639
    %2641 = vdwg.mxu0
    %2642 = vmatprep.subr.mxu0 0.0
    %2643 = vmatpush1.msra.mxu0 0.0
    %2644 = vmatprep.subr.mxu0 0.0
    %2645 = vmatpush1.msra.mxu0 0.0
    %2646 = vmatprep.subr.mxu0 0.0
    %2647 = vmatpush1.msra.mxu0 0.0
    %2648 = vmatprep.subr.mxu0 0.0
    %2649 = vmatpush1.msra.mxu0 0.0
    %2650 = vmatprep.subr.mxu0 0.0
    %2651 = vmatpush1.msra.mxu0 0.0
    %2652 = vmatprep.subr.mxu0 0.0
    %2653 = vmatpush1.msra.mxu0 0.0
    %2654 = vmatprep.subr.mxu0 0.0
    %2655 = vmatpush1.msra.mxu0 0.0
    %2656 = vmatprep.subr.mxu0 0.0
    %2657 = vmatpush1.msra.mxu0 0.0
    %2658 = vmatprep.subr.mxu0 0.0
    %2659 = vmatpush1.msra.mxu0 0.0
    %2660 = vmatprep.subr.mxu0 0.0
    %2661 = vmatpush1.msra.mxu0 0.0
    %2662 = vmatprep.subr.mxu0 0.0
    %2663 = vmatpush1.msra.mxu0 0.0
    %2664 = vmatprep.subr.mxu0 0.0
    %2665 = vmatpush1.msra.mxu0 0.0
    %2666 = vmatprep.subr.mxu0 0.0
    %2667 = vmatpush1.msra.mxu0 0.0
    %2668 = vmatprep.subr.mxu0 0.0
    %2669 = vmatpush1.msra.mxu0 0.0
    %2670 = vmatprep.subr.mxu0 0.0
    %2671 = vmatpush1.msra.mxu0 %v2556
    %2672 = vmatprep.subr.mxu0 0.0
    %2673 = vmatpush1.msra.mxu0 %v2550
    %2674 = vmatprep.subr.mxu0 0.0
    %2675 = vmatpush2.msra.mxu0 0.0
    %2676 = vmatprep.subr.mxu0 0.0
    %2677 = vmatpush2.msra.mxu0 0.0
    %2678 = vmatprep.subr.mxu0 0.0
    %2679 = vmatpush2.msra.mxu0 0.0
    %2680 = vmatprep.subr.mxu0 0.0
    %2681 = vmatpush2.msra.mxu0 0.0
    %2682 = vmatprep.subr.mxu0 0.0
    %2683 = vmatpush2.msra.mxu0 0.0
    %2684 = vmatprep.subr.mxu0 0.0
    %2685 = vmatpush2.msra.mxu0 0.0
    %2686 = vmatprep.subr.mxu0 0.0
    %2687 = vmatpush2.msra.mxu0 0.0
    %2688 = vmatprep.subr.mxu0 0.0
    %2689 = vmatpush2.msra.mxu0 0.0
    %2690 = vmatprep.subr.mxu0 0.0
    %2691 = vmatpush2.msra.mxu0 0.0
    %2692 = vmatprep.subr.mxu0 0.0
    %2693 = vmatpush2.msra.mxu0 0.0
    %2694 = vmatprep.subr.mxu0 0.0
    %2695 = vmatpush2.msra.mxu0 0.0
    %2696 = vmatprep.subr.mxu0 0.0
    %2697 = vmatpush2.msra.mxu0 0.0
    %2698 = vmatprep.subr.mxu0 0.0
    %2699 = vmatpush2.msra.mxu0 0.0
    %2700 = vmatprep.subr.mxu0 0.0
    %2701 = vmatpush2.msra.mxu0 0.0
    %2702 = vmatprep.subr.mxu0 0.0
    %2703 = vmatpush2.msra.mxu0 0.0
    %2704 = vmatprep.subr.mxu0 0.0
    %2705 = vmatpush2.msra.mxu0 0.0
    %2706 = vmatprep.mubr.f32.mxu0 0.0
    %2707 = vmatmul.mubr.f32.gmra.mxu0 %v2569
    %v2708 = vpop.f32.mrf.mxu0
    %v2709 = vadd.f32 0.0, %v2708
    %v2710 = vpop.f32.mrf.mxu0
    %2711 = vdwg.mxu0
    %v2712 = vadd.f32 %v2540, %v2638
    %v2713 = vadd.f32 %v2541, %v2640
    %v2714 = vadd.f32 %v2542, %v2709
    %s2715 = scalar_lea.vmem %s3, 48
    %v2716 = vld [vmem:[%s2715] sm:$0xff]
    %2717 = vrot.lane.b32.xlu0 %v1702, 92
    %v2718 = vpop.permute.xlu0 %2717
    %2719 = vrot.lane.b32.xlu0 %v1703, 92
    %v2720 = vpop.permute.xlu0 %2719
    %2721 = vrot.lane.b32.xlu0 %v1704, 92
    %v2722 = vpop.permute.xlu0 %2721
    %2723 = vrot.lane.b32.xlu0 %v1705, 92
    %v2724 = vpop.permute.xlu0 %2723
    %2725 = vrot.lane.b32.xlu0 %v1706, 92
    %v2726 = vpop.permute.xlu0 %2725
    %2727 = vrot.lane.b32.xlu0 %v1707, 92
    %v2728 = vpop.permute.xlu0 %2727
    %v2729 = vsel %vm761, %v2718, %v2720
    %v2730 = vsel %vm761, %v2720, %v2722
    %v2731 = vsel %vm761, %v2724, %v2726
    %v2732 = vsel %vm761, %v2726, %v2728
    %v2740 = vsel %vm1740, %v2716, 0
    %2742 = vmatprep.subr.mxu0 0.0
    %2743 = vmatpush1.msra.mxu0 0.0
    %2744 = vmatprep.subr.mxu0 0.0
    %2745 = vmatpush1.msra.mxu0 0.0
    %2746 = vmatprep.subr.mxu0 0.0
    %2747 = vmatpush1.msra.mxu0 0.0
    %2748 = vmatprep.subr.mxu0 0.0
    %2749 = vmatpush1.msra.mxu0 0.0
    %2750 = vmatprep.subr.mxu0 0.0
    %2751 = vmatpush1.msra.mxu0 0.0
    %2752 = vmatprep.subr.mxu0 0.0
    %2753 = vmatpush1.msra.mxu0 0.0
    %2754 = vmatprep.subr.mxu0 0.0
    %2755 = vmatpush1.msra.mxu0 0.0
    %2756 = vmatprep.subr.mxu0 0.0
    %2757 = vmatpush1.msra.mxu0 0.0
    %2758 = vmatprep.subr.mxu0 0.0
    %2759 = vmatpush1.msra.mxu0 0.0
    %2760 = vmatprep.subr.mxu0 0.0
    %2761 = vmatpush1.msra.mxu0 0.0
    %2762 = vmatprep.subr.mxu0 0.0
    %2763 = vmatpush1.msra.mxu0 0.0
    %2764 = vmatprep.subr.mxu0 0.0
    %2765 = vmatpush1.msra.mxu0 0.0
    %2766 = vmatprep.subr.mxu0 0.0
    %2767 = vmatpush1.msra.mxu0 0.0
    %2768 = vmatprep.subr.mxu0 0.0
    %2769 = vmatpush1.msra.mxu0 0.0
    %2770 = vmatprep.subr.mxu0 %v2732
    %2771 = vmatpush1.msra.mxu0 %v2731
    %2772 = vmatprep.subr.mxu0 %v2730
    %2773 = vmatpush1.msra.mxu0 %v2729
    %2774 = vmatprep.subr.mxu0 0.0
    %2775 = vmatpush2.msra.mxu0 0.0
    %2776 = vmatprep.subr.mxu0 0.0
    %2777 = vmatpush2.msra.mxu0 0.0
    %2778 = vmatprep.subr.mxu0 0.0
    %2779 = vmatpush2.msra.mxu0 0.0
    %2780 = vmatprep.subr.mxu0 0.0
    %2781 = vmatpush2.msra.mxu0 0.0
    %2782 = vmatprep.subr.mxu0 0.0
    %2783 = vmatpush2.msra.mxu0 0.0
    %2784 = vmatprep.subr.mxu0 0.0
    %2785 = vmatpush2.msra.mxu0 0.0
    %2786 = vmatprep.subr.mxu0 0.0
    %2787 = vmatpush2.msra.mxu0 0.0
    %2788 = vmatprep.subr.mxu0 0.0
    %2789 = vmatpush2.msra.mxu0 0.0
    %2790 = vmatprep.subr.mxu0 0.0
    %2791 = vmatpush2.msra.mxu0 0.0
    %2792 = vmatprep.subr.mxu0 0.0
    %2793 = vmatpush2.msra.mxu0 0.0
    %2794 = vmatprep.subr.mxu0 0.0
    %2795 = vmatpush2.msra.mxu0 0.0
    %2796 = vmatprep.subr.mxu0 0.0
    %2797 = vmatpush2.msra.mxu0 0.0
    %2798 = vmatprep.subr.mxu0 0.0
    %2799 = vmatpush2.msra.mxu0 0.0
    %2800 = vmatprep.subr.mxu0 0.0
    %2801 = vmatpush2.msra.mxu0 0.0
    %2802 = vmatprep.subr.mxu0 0.0
    %2803 = vmatpush2.msra.mxu0 0.0
    %2804 = vmatprep.subr.mxu0 0.0
    %2805 = vmatpush2.msra.mxu0 0.0
    %2806 = vmatprep.mubr.f32.mxu0 0.0
    %2807 = vmatmul.mubr.f32.gmra.mxu0 %v2740
    %v2808 = vpop.f32.mrf.mxu0
    %v2809 = vadd.f32 0.0, %v2808
    %v2810 = vpop.f32.mrf.mxu0
    %v2811 = vadd.f32 0.0, %v2810
    %2812 = vdwg.mxu0
    %2813 = vmatprep.subr.mxu0 0.0
    %2814 = vmatpush1.msra.mxu0 0.0
    %2815 = vmatprep.subr.mxu0 0.0
    %2816 = vmatpush1.msra.mxu0 0.0
    %2817 = vmatprep.subr.mxu0 0.0
    %2818 = vmatpush1.msra.mxu0 0.0
    %2819 = vmatprep.subr.mxu0 0.0
    %2820 = vmatpush1.msra.mxu0 0.0
    %2821 = vmatprep.subr.mxu0 0.0
    %2822 = vmatpush1.msra.mxu0 0.0
    %2823 = vmatprep.subr.mxu0 0.0
    %2824 = vmatpush1.msra.mxu0 0.0
    %2825 = vmatprep.subr.mxu0 0.0
    %2826 = vmatpush1.msra.mxu0 0.0
    %2827 = vmatprep.subr.mxu0 0.0
    %2828 = vmatpush1.msra.mxu0 0.0
    %2829 = vmatprep.subr.mxu0 0.0
    %2830 = vmatpush1.msra.mxu0 0.0
    %2831 = vmatprep.subr.mxu0 0.0
    %2832 = vmatpush1.msra.mxu0 0.0
    %2833 = vmatprep.subr.mxu0 0.0
    %2834 = vmatpush1.msra.mxu0 0.0
    %2835 = vmatprep.subr.mxu0 0.0
    %2836 = vmatpush1.msra.mxu0 0.0
    %2837 = vmatprep.subr.mxu0 0.0
    %2838 = vmatpush1.msra.mxu0 0.0
    %2839 = vmatprep.subr.mxu0 0.0
    %2840 = vmatpush1.msra.mxu0 0.0
    %2841 = vmatprep.subr.mxu0 0.0
    %2842 = vmatpush1.msra.mxu0 %v2728
    %2843 = vmatprep.subr.mxu0 0.0
    %2844 = vmatpush1.msra.mxu0 %v2722
    %2845 = vmatprep.subr.mxu0 0.0
    %2846 = vmatpush2.msra.mxu0 0.0
    %2847 = vmatprep.subr.mxu0 0.0
    %2848 = vmatpush2.msra.mxu0 0.0
    %2849 = vmatprep.subr.mxu0 0.0
    %2850 = vmatpush2.msra.mxu0 0.0
    %2851 = vmatprep.subr.mxu0 0.0
    %2852 = vmatpush2.msra.mxu0 0.0
    %2853 = vmatprep.subr.mxu0 0.0
    %2854 = vmatpush2.msra.mxu0 0.0
    %2855 = vmatprep.subr.mxu0 0.0
    %2856 = vmatpush2.msra.mxu0 0.0
    %2857 = vmatprep.subr.mxu0 0.0
    %2858 = vmatpush2.msra.mxu0 0.0
    %2859 = vmatprep.subr.mxu0 0.0
    %2860 = vmatpush2.msra.mxu0 0.0
    %2861 = vmatprep.subr.mxu0 0.0
    %2862 = vmatpush2.msra.mxu0 0.0
    %2863 = vmatprep.subr.mxu0 0.0
    %2864 = vmatpush2.msra.mxu0 0.0
    %2865 = vmatprep.subr.mxu0 0.0
    %2866 = vmatpush2.msra.mxu0 0.0
    %2867 = vmatprep.subr.mxu0 0.0
    %2868 = vmatpush2.msra.mxu0 0.0
    %2869 = vmatprep.subr.mxu0 0.0
    %2870 = vmatpush2.msra.mxu0 0.0
    %2871 = vmatprep.subr.mxu0 0.0
    %2872 = vmatpush2.msra.mxu0 0.0
    %2873 = vmatprep.subr.mxu0 0.0
    %2874 = vmatpush2.msra.mxu0 0.0
    %2875 = vmatprep.subr.mxu0 0.0
    %2876 = vmatpush2.msra.mxu0 0.0
    %2877 = vmatprep.mubr.f32.mxu0 0.0
    %2878 = vmatmul.mubr.f32.gmra.mxu0 %v2740
    %v2879 = vpop.f32.mrf.mxu0
    %v2880 = vadd.f32 0.0, %v2879
    %v2881 = vpop.f32.mrf.mxu0
    %2882 = vdwg.mxu0
    %v2883 = vadd.f32 %v2712, %v2809
    %v2884 = vadd.f32 %v2713, %v2811
    %v2885 = vadd.f32 %v2714, %v2880
    %s2886 = scalar_lea.vmem %s3, 56
    %v2887 = vld [vmem:[%s2886] sm:$0xff]
    %2888 = vrot.lane.b32.xlu0 %v1702, 91
    %v2889 = vpop.permute.xlu0 %2888
    %2890 = vrot.lane.b32.xlu0 %v1703, 91
    %v2891 = vpop.permute.xlu0 %2890
    %2892 = vrot.lane.b32.xlu0 %v1704, 91
    %v2893 = vpop.permute.xlu0 %2892
    %2894 = vrot.lane.b32.xlu0 %v1705, 91
    %v2895 = vpop.permute.xlu0 %2894
    %2896 = vrot.lane.b32.xlu0 %v1706, 91
    %v2897 = vpop.permute.xlu0 %2896
    %2898 = vrot.lane.b32.xlu0 %v1707, 91
    %v2899 = vpop.permute.xlu0 %2898
    %v2900 = vsel %vm940, %v2889, %v2891
    %v2901 = vsel %vm940, %v2891, %v2893
    %v2902 = vsel %vm940, %v2895, %v2897
    %v2903 = vsel %vm940, %v2897, %v2899
    %v2911 = vsel %vm1740, %v2887, 0
    %2913 = vmatprep.subr.mxu0 0.0
    %2914 = vmatpush1.msra.mxu0 0.0
    %2915 = vmatprep.subr.mxu0 0.0
    %2916 = vmatpush1.msra.mxu0 0.0
    %2917 = vmatprep.subr.mxu0 0.0
    %2918 = vmatpush1.msra.mxu0 0.0
    %2919 = vmatprep.subr.mxu0 0.0
    %2920 = vmatpush1.msra.mxu0 0.0
    %2921 = vmatprep.subr.mxu0 0.0
    %2922 = vmatpush1.msra.mxu0 0.0
    %2923 = vmatprep.subr.mxu0 0.0
    %2924 = vmatpush1.msra.mxu0 0.0
    %2925 = vmatprep.subr.mxu0 0.0
    %2926 = vmatpush1.msra.mxu0 0.0
    %2927 = vmatprep.subr.mxu0 0.0
    %2928 = vmatpush1.msra.mxu0 0.0
    %2929 = vmatprep.subr.mxu0 0.0
    %2930 = vmatpush1.msra.mxu0 0.0
    %2931 = vmatprep.subr.mxu0 0.0
    %2932 = vmatpush1.msra.mxu0 0.0
    %2933 = vmatprep.subr.mxu0 0.0
    %2934 = vmatpush1.msra.mxu0 0.0
    %2935 = vmatprep.subr.mxu0 0.0
    %2936 = vmatpush1.msra.mxu0 0.0
    %2937 = vmatprep.subr.mxu0 0.0
    %2938 = vmatpush1.msra.mxu0 0.0
    %2939 = vmatprep.subr.mxu0 0.0
    %2940 = vmatpush1.msra.mxu0 0.0
    %2941 = vmatprep.subr.mxu0 %v2903
    %2942 = vmatpush1.msra.mxu0 %v2902
    %2943 = vmatprep.subr.mxu0 %v2901
    %2944 = vmatpush1.msra.mxu0 %v2900
    %2945 = vmatprep.subr.mxu0 0.0
    %2946 = vmatpush2.msra.mxu0 0.0
    %2947 = vmatprep.subr.mxu0 0.0
    %2948 = vmatpush2.msra.mxu0 0.0
    %2949 = vmatprep.subr.mxu0 0.0
    %2950 = vmatpush2.msra.mxu0 0.0
    %2951 = vmatprep.subr.mxu0 0.0
    %2952 = vmatpush2.msra.mxu0 0.0
    %2953 = vmatprep.subr.mxu0 0.0
    %2954 = vmatpush2.msra.mxu0 0.0
    %2955 = vmatprep.subr.mxu0 0.0
    %2956 = vmatpush2.msra.mxu0 0.0
    %2957 = vmatprep.subr.mxu0 0.0
    %2958 = vmatpush2.msra.mxu0 0.0
    %2959 = vmatprep.subr.mxu0 0.0
    %2960 = vmatpush2.msra.mxu0 0.0
    %2961 = vmatprep.subr.mxu0 0.0
    %2962 = vmatpush2.msra.mxu0 0.0
    %2963 = vmatprep.subr.mxu0 0.0
    %2964 = vmatpush2.msra.mxu0 0.0
    %2965 = vmatprep.subr.mxu0 0.0
    %2966 = vmatpush2.msra.mxu0 0.0
    %2967 = vmatprep.subr.mxu0 0.0
    %2968 = vmatpush2.msra.mxu0 0.0
    %2969 = vmatprep.subr.mxu0 0.0
    %2970 = vmatpush2.msra.mxu0 0.0
    %2971 = vmatprep.subr.mxu0 0.0
    %2972 = vmatpush2.msra.mxu0 0.0
    %2973 = vmatprep.subr.mxu0 0.0
    %2974 = vmatpush2.msra.mxu0 0.0
    %2975 = vmatprep.subr.mxu0 0.0
    %2976 = vmatpush2.msra.mxu0 0.0
    %2977 = vmatprep.mubr.f32.mxu0 0.0
    %2978 = vmatmul.mubr.f32.gmra.mxu0 %v2911
    %v2979 = vpop.f32.mrf.mxu0
    %v2980 = vadd.f32 0.0, %v2979
    %v2981 = vpop.f32.mrf.mxu0
    %v2982 = vadd.f32 0.0, %v2981
    %2983 = vdwg.mxu0
    %2984 = vmatprep.subr.mxu0 0.0
    %2985 = vmatpush1.msra.mxu0 0.0
    %2986 = vmatprep.subr.mxu0 0.0
    %2987 = vmatpush1.msra.mxu0 0.0
    %2988 = vmatprep.subr.mxu0 0.0
    %2989 = vmatpush1.msra.mxu0 0.0
    %2990 = vmatprep.subr.mxu0 0.0
    %2991 = vmatpush1.msra.mxu0 0.0
    %2992 = vmatprep.subr.mxu0 0.0
    %2993 = vmatpush1.msra.mxu0 0.0
    %2994 = vmatprep.subr.mxu0 0.0
    %2995 = vmatpush1.msra.mxu0 0.0
    %2996 = vmatprep.subr.mxu0 0.0
    %2997 = vmatpush1.msra.mxu0 0.0
    %2998 = vmatprep.subr.mxu0 0.0
    %2999 = vmatpush1.msra.mxu0 0.0
    %3000 = vmatprep.subr.mxu0 0.0
    %3001 = vmatpush1.msra.mxu0 0.0
    %3002 = vmatprep.subr.mxu0 0.0
    %3003 = vmatpush1.msra.mxu0 0.0
    %3004 = vmatprep.subr.mxu0 0.0
    %3005 = vmatpush1.msra.mxu0 0.0
    %3006 = vmatprep.subr.mxu0 0.0
    %3007 = vmatpush1.msra.mxu0 0.0
    %3008 = vmatprep.subr.mxu0 0.0
    %3009 = vmatpush1.msra.mxu0 0.0
    %3010 = vmatprep.subr.mxu0 0.0
    %3011 = vmatpush1.msra.mxu0 0.0
    %3012 = vmatprep.subr.mxu0 0.0
    %3013 = vmatpush1.msra.mxu0 %v2899
    %3014 = vmatprep.subr.mxu0 0.0
    %3015 = vmatpush1.msra.mxu0 %v2893
    %3016 = vmatprep.subr.mxu0 0.0
    %3017 = vmatpush2.msra.mxu0 0.0
    %3018 = vmatprep.subr.mxu0 0.0
    %3019 = vmatpush2.msra.mxu0 0.0
    %3020 = vmatprep.subr.mxu0 0.0
    %3021 = vmatpush2.msra.mxu0 0.0
    %3022 = vmatprep.subr.mxu0 0.0
    %3023 = vmatpush2.msra.mxu0 0.0
    %3024 = vmatprep.subr.mxu0 0.0
    %3025 = vmatpush2.msra.mxu0 0.0
    %3026 = vmatprep.subr.mxu0 0.0
    %3027 = vmatpush2.msra.mxu0 0.0
    %3028 = vmatprep.subr.mxu0 0.0
    %3029 = vmatpush2.msra.mxu0 0.0
    %3030 = vmatprep.subr.mxu0 0.0
    %3031 = vmatpush2.msra.mxu0 0.0
    %3032 = vmatprep.subr.mxu0 0.0
    %3033 = vmatpush2.msra.mxu0 0.0
    %3034 = vmatprep.subr.mxu0 0.0
    %3035 = vmatpush2.msra.mxu0 0.0
    %3036 = vmatprep.subr.mxu0 0.0
    %3037 = vmatpush2.msra.mxu0 0.0
    %3038 = vmatprep.subr.mxu0 0.0
    %3039 = vmatpush2.msra.mxu0 0.0
    %3040 = vmatprep.subr.mxu0 0.0
    %3041 = vmatpush2.msra.mxu0 0.0
    %3042 = vmatprep.subr.mxu0 0.0
    %3043 = vmatpush2.msra.mxu0 0.0
    %3044 = vmatprep.subr.mxu0 0.0
    %3045 = vmatpush2.msra.mxu0 0.0
    %3046 = vmatprep.subr.mxu0 0.0
    %3047 = vmatpush2.msra.mxu0 0.0
    %3048 = vmatprep.mubr.f32.mxu0 0.0
    %3049 = vmatmul.mubr.f32.gmra.mxu0 %v2911
    %v3050 = vpop.f32.mrf.mxu0
    %v3051 = vadd.f32 0.0, %v3050
    %v3052 = vpop.f32.mrf.mxu0
    %3053 = vdwg.mxu0
    %v3054 = vadd.f32 %v2883, %v2980
    %v3055 = vadd.f32 %v2884, %v2982
    %v3056 = vadd.f32 %v2885, %v3051
    %s3057 = scalar_lea.vmem %s3, 64
    %v3058 = vld [vmem:[%s3057] sm:$0xff]
    %3059 = vrot.lane.b32.xlu0 %v1702, 90
    %v3060 = vpop.permute.xlu0 %3059
    %3061 = vrot.lane.b32.xlu0 %v1703, 90
    %v3062 = vpop.permute.xlu0 %3061
    %3063 = vrot.lane.b32.xlu0 %v1704, 90
    %v3064 = vpop.permute.xlu0 %3063
    %3065 = vrot.lane.b32.xlu0 %v1705, 90
    %v3066 = vpop.permute.xlu0 %3065
    %3067 = vrot.lane.b32.xlu0 %v1706, 90
    %v3068 = vpop.permute.xlu0 %3067
    %3069 = vrot.lane.b32.xlu0 %v1707, 90
    %v3070 = vpop.permute.xlu0 %3069
    %vm3071 = vcmask 736256
    %v3072 = vsel %vm3071, %v3060, %v3062
    %v3073 = vsel %vm3071, %v3062, %v3064
    %v3074 = vsel %vm3071, %v3066, %v3068
    %v3075 = vsel %vm3071, %v3068, %v3070
    %v3083 = vsel %vm1740, %v3058, 0
    %3085 = vmatprep.subr.mxu0 0.0
    %3086 = vmatpush1.msra.mxu0 0.0
    %3087 = vmatprep.subr.mxu0 0.0
    %3088 = vmatpush1.msra.mxu0 0.0
    %3089 = vmatprep.subr.mxu0 0.0
    %3090 = vmatpush1.msra.mxu0 0.0
    %3091 = vmatprep.subr.mxu0 0.0
    %3092 = vmatpush1.msra.mxu0 0.0
    %3093 = vmatprep.subr.mxu0 0.0
    %3094 = vmatpush1.msra.mxu0 0.0
    %3095 = vmatprep.subr.mxu0 0.0
    %3096 = vmatpush1.msra.mxu0 0.0
    %3097 = vmatprep.subr.mxu0 0.0
    %3098 = vmatpush1.msra.mxu0 0.0
    %3099 = vmatprep.subr.mxu0 0.0
    %3100 = vmatpush1.msra.mxu0 0.0
    %3101 = vmatprep.subr.mxu0 0.0
    %3102 = vmatpush1.msra.mxu0 0.0
    %3103 = vmatprep.subr.mxu0 0.0
    %3104 = vmatpush1.msra.mxu0 0.0
    %3105 = vmatprep.subr.mxu0 0.0
    %3106 = vmatpush1.msra.mxu0 0.0
    %3107 = vmatprep.subr.mxu0 0.0
    %3108 = vmatpush1.msra.mxu0 0.0
    %3109 = vmatprep.subr.mxu0 0.0
    %3110 = vmatpush1.msra.mxu0 0.0
    %3111 = vmatprep.subr.mxu0 0.0
    %3112 = vmatpush1.msra.mxu0 0.0
    %3113 = vmatprep.subr.mxu0 %v3075
    %3114 = vmatpush1.msra.mxu0 %v3074
    %3115 = vmatprep.subr.mxu0 %v3073
    %3116 = vmatpush1.msra.mxu0 %v3072
    %3117 = vmatprep.subr.mxu0 0.0
    %3118 = vmatpush2.msra.mxu0 0.0
    %3119 = vmatprep.subr.mxu0 0.0
    %3120 = vmatpush2.msra.mxu0 0.0
    %3121 = vmatprep.subr.mxu0 0.0
    %3122 = vmatpush2.msra.mxu0 0.0
    %3123 = vmatprep.subr.mxu0 0.0
    %3124 = vmatpush2.msra.mxu0 0.0
    %3125 = vmatprep.subr.mxu0 0.0
    %3126 = vmatpush2.msra.mxu0 0.0
    %3127 = vmatprep.subr.mxu0 0.0
    %3128 = vmatpush2.msra.mxu0 0.0
    %3129 = vmatprep.subr.mxu0 0.0
    %3130 = vmatpush2.msra.mxu0 0.0
    %3131 = vmatprep.subr.mxu0 0.0
    %3132 = vmatpush2.msra.mxu0 0.0
    %3133 = vmatprep.subr.mxu0 0.0
    %3134 = vmatpush2.msra.mxu0 0.0
    %3135 = vmatprep.subr.mxu0 0.0
    %3136 = vmatpush2.msra.mxu0 0.0
    %3137 = vmatprep.subr.mxu0 0.0
    %3138 = vmatpush2.msra.mxu0 0.0
    %3139 = vmatprep.subr.mxu0 0.0
    %3140 = vmatpush2.msra.mxu0 0.0
    %3141 = vmatprep.subr.mxu0 0.0
    %3142 = vmatpush2.msra.mxu0 0.0
    %3143 = vmatprep.subr.mxu0 0.0
    %3144 = vmatpush2.msra.mxu0 0.0
    %3145 = vmatprep.subr.mxu0 0.0
    %3146 = vmatpush2.msra.mxu0 0.0
    %3147 = vmatprep.subr.mxu0 0.0
    %3148 = vmatpush2.msra.mxu0 0.0
    %3149 = vmatprep.mubr.f32.mxu0 0.0
    %3150 = vmatmul.mubr.f32.gmra.mxu0 %v3083
    %v3151 = vpop.f32.mrf.mxu0
    %v3152 = vadd.f32 0.0, %v3151
    %v3153 = vpop.f32.mrf.mxu0
    %v3154 = vadd.f32 0.0, %v3153
    %3155 = vdwg.mxu0
    %3156 = vmatprep.subr.mxu0 0.0
    %3157 = vmatpush1.msra.mxu0 0.0
    %3158 = vmatprep.subr.mxu0 0.0
    %3159 = vmatpush1.msra.mxu0 0.0
    %3160 = vmatprep.subr.mxu0 0.0
    %3161 = vmatpush1.msra.mxu0 0.0
    %3162 = vmatprep.subr.mxu0 0.0
    %3163 = vmatpush1.msra.mxu0 0.0
    %3164 = vmatprep.subr.mxu0 0.0
    %3165 = vmatpush1.msra.mxu0 0.0
    %3166 = vmatprep.subr.mxu0 0.0
    %3167 = vmatpush1.msra.mxu0 0.0
    %3168 = vmatprep.subr.mxu0 0.0
    %3169 = vmatpush1.msra.mxu0 0.0
    %3170 = vmatprep.subr.mxu0 0.0
    %3171 = vmatpush1.msra.mxu0 0.0
    %3172 = vmatprep.subr.mxu0 0.0
    %3173 = vmatpush1.msra.mxu0 0.0
    %3174 = vmatprep.subr.mxu0 0.0
    %3175 = vmatpush1.msra.mxu0 0.0
    %3176 = vmatprep.subr.mxu0 0.0
    %3177 = vmatpush1.msra.mxu0 0.0
    %3178 = vmatprep.subr.mxu0 0.0
    %3179 = vmatpush1.msra.mxu0 0.0
    %3180 = vmatprep.subr.mxu0 0.0
    %3181 = vmatpush1.msra.mxu0 0.0
    %3182 = vmatprep.subr.mxu0 0.0
    %3183 = vmatpush1.msra.mxu0 0.0
    %3184 = vmatprep.subr.mxu0 0.0
    %3185 = vmatpush1.msra.mxu0 %v3070
    %3186 = vmatprep.subr.mxu0 0.0
    %3187 = vmatpush1.msra.mxu0 %v3064
    %3188 = vmatprep.subr.mxu0 0.0
    %3189 = vmatpush2.msra.mxu0 0.0
    %3190 = vmatprep.subr.mxu0 0.0
    %3191 = vmatpush2.msra.mxu0 0.0
    %3192 = vmatprep.subr.mxu0 0.0
    %3193 = vmatpush2.msra.mxu0 0.0
    %3194 = vmatprep.subr.mxu0 0.0
    %3195 = vmatpush2.msra.mxu0 0.0
    %3196 = vmatprep.subr.mxu0 0.0
    %3197 = vmatpush2.msra.mxu0 0.0
    %3198 = vmatprep.subr.mxu0 0.0
    %3199 = vmatpush2.msra.mxu0 0.0
    %3200 = vmatprep.subr.mxu0 0.0
    %3201 = vmatpush2.msra.mxu0 0.0
    %3202 = vmatprep.subr.mxu0 0.0
    %3203 = vmatpush2.msra.mxu0 0.0
    %3204 = vmatprep.subr.mxu0 0.0
    %3205 = vmatpush2.msra.mxu0 0.0
    %3206 = vmatprep.subr.mxu0 0.0
    %3207 = vmatpush2.msra.mxu0 0.0
    %3208 = vmatprep.subr.mxu0 0.0
    %3209 = vmatpush2.msra.mxu0 0.0
    %3210 = vmatprep.subr.mxu0 0.0
    %3211 = vmatpush2.msra.mxu0 0.0
    %3212 = vmatprep.subr.mxu0 0.0
    %3213 = vmatpush2.msra.mxu0 0.0
    %3214 = vmatprep.subr.mxu0 0.0
    %3215 = vmatpush2.msra.mxu0 0.0
    %3216 = vmatprep.subr.mxu0 0.0
    %3217 = vmatpush2.msra.mxu0 0.0
    %3218 = vmatprep.subr.mxu0 0.0
    %3219 = vmatpush2.msra.mxu0 0.0
    %3220 = vmatprep.mubr.f32.mxu0 0.0
    %3221 = vmatmul.mubr.f32.gmra.mxu0 %v3083
    %v3222 = vpop.f32.mrf.mxu0
    %v3223 = vadd.f32 0.0, %v3222
    %v3224 = vpop.f32.mrf.mxu0
    %3225 = vdwg.mxu0
    %v3226 = vadd.f32 %v3054, %v3152
    %v3227 = vadd.f32 %v3055, %v3154
    %v3228 = vadd.f32 %v3056, %v3223
    %v3229 = vld [vmem:[%s4] sm:$0xff]
    %3231 = vset.pattern.permute.xlu0 0
    %3232 = vperm.xlu0 %3231, %v3229
    %v3233 = vpop.permute.xlu0 %3232
    %v3235 = vadd.f32 %v3226, %v3233
    %v3236 = vadd.f32 %v3227, %v3233
    %v3237 = vadd.f32 %v3228, %v3233
    %v3238 = vstv %s44
    %v3239 = vmul.f32 %v3235, %v3238
    %v3240 = vmul.f32 %v3236, %v3238
    %v3241 = vmul.f32 %v3237, %v3238
    %3242 = vst [vmem:[%s7] sm:$0xff] %v3239
    %3243 = vst [vmem:[%s7 + $0x8] sm:$0xff] %v3240
    %vm3244 = vcmask 261120
    %3245 = vst.msk [vmem:[%s7 + $0x10] sm:$0xff] %vm3244, %v3241
    // Predicated region
    $region34: #{_forward.1} parent=1 // pred_check
      _
    $region35: #{_forward.1} parent=1 // pred_check_branch
      %3247 = sbr.rel (0) target = $region37
    $region36: #{_forward.1} parent=1 // pred_region
      _
    $region37: #{_forward.1} parent=1 // pred_fallthru
      _
    // Predicated region
    $region38: #{_forward.1} parent=1 // pred_check
      _
    $region39: #{_forward.1} parent=1 // pred_check_branch
      %3249 = sbr.rel (0) target = $region41
    $region40: #{_forward.1} parent=1 // pred_region
      _
    $region41: #{_forward.1} parent=1 // pred_fallthru
      _
    %3250 = vsyncpa [#allocation3], 1

</llo_original>
